<compile_context>
chip_gen: v7x
topology: tpu7x:2x2x1
jax: 0.10.0
libtpu: 0.0.40
codegen_flags: <defaults>
</compile_context>

<pallas_src>
import numpy as np
import jax
import jax.numpy as jnp
from jax.experimental import pallas as pl
from jax.experimental.pallas import tpu as pltpu

# Static geometry implied by the module (fc1 = Linear(36 * F, C) => 32x32 input).
K1, S1 = 10, 2
K2, S2 = 7, 1
H_IN = W_IN = 32
C_IN = 3
H1 = (H_IN - K1) // S1 + 1      # 12
H2 = (H1 - K2) // S2 + 1        # 6   -> 6*6 = 36 spatial positions
IN_DIM = H_IN * W_IN * C_IN     # 3072
LANE = 128


def cnn_kernel(x_ref, w1_ref, b1_ref, w2_ref, b2_ref, wfc_ref, bfc_ref, out_ref):
    # conv1 as ONE dense unrolled GEMM: (TB, 3072) @ (3072, 576), f32 accumulate.
    h1 = jnp.dot(x_ref[...], w1_ref[...], preferred_element_type=jnp.float32)
    h1 = jnp.maximum(h1 + b1_ref[...], 0.0)                      # (TB, 576) NHWC flat

    # conv2 as ONE dense unrolled GEMM: (TB, 576) @ (576, 144).
    h2 = jnp.dot(h1.astype(w2_ref.dtype), w2_ref[...],
                 preferred_element_type=jnp.float32)
    h2 = jnp.maximum(h2 + b2_ref[...], 0.0)                      # (TB, 144) NHWC flat

    # fc + log_softmax over a lane-dense (padded to 128) class axis.
    # Padded biases are -1e30 so exp(pad - m) == 0: real logits are unaffected.
    logits = jnp.dot(h2.astype(wfc_ref.dtype), wfc_ref[...],
                     preferred_element_type=jnp.float32) + bfc_ref[...]
    m = jnp.max(logits, axis=-1, keepdims=True)
    lse = m + jnp.log(jnp.sum(jnp.exp(logits - m), axis=-1, keepdims=True))
    out_ref[...] = logits - lse


def _unroll_conv_weights(w, h_in, w_in, stride, h_out, w_out):
    """PyTorch conv weight (F, C, K, K) -> dense (h_in*w_in*C, h_out*w_out*F)
    matrix mapping an NHWC-flattened input to an NHWC-flattened output."""
    f_out, c_in, k, _ = w.shape
    oh, ow, kh, kw, c, f = np.meshgrid(
        np.arange(h_out), np.arange(w_out), np.arange(k), np.arange(k),
        np.arange(c_in), np.arange(f_out), indexing="ij")
    ih = oh * stride + kh
    iw = ow * stride + kw
    in_idx = ((ih * w_in + iw) * c_in + c).ravel()
    out_idx = ((oh * w_out + ow) * f_out + f).ravel()
    vals = w[f.ravel(), c.ravel(), kh.ravel(), kw.ravel()]
    w_u = jnp.zeros((h_in * w_in * c_in, h_out * w_out * f_out), jnp.float32)
    return w_u.at[in_idx, out_idx].set(vals)


def simple_cnn_2layers(x_nchw, w1, b1, w2, b2, wfc, bfc, *,
                       batch_tile=128, compute_dtype=jnp.float32):
    """Forward pass matching the PyTorch module.  Params in PyTorch layouts:
       w1: (F, 3, 10, 10)  b1: (F,)   w2: (F, F, 7, 7)  b2: (F,)
       wfc: (num_classes, 36*F)       bfc: (num_classes,)
       compute_dtype=jnp.bfloat16 enables bf16 MXU operands (f32 accumulation,
       f32 bias/ReLU/softmax) for v6e/v7x; default f32 keeps exact parity."""
    B = x_nchw.shape[0]
    F1 = w1.shape[0]
    num_classes = wfc.shape[0]
    nc_pad = ((num_classes + LANE - 1) // LANE) * LANE            # lane-dense classes
    N1 = H1 * H1 * F1                                             # 576 (F1=4)
    N2 = H2 * H2 * F1                                             # 144

    itemsize = jnp.dtype(compute_dtype).itemsize
    sub = 8 * (4 // itemsize)                 # sublane pack: 8 (f32) / 16 (bf16)
    TB = max(sub, (int(batch_tile) // sub) * sub)
    Bm = int(pl.cdiv(B, sub)) * sub
    if Bm >= 2 * sub:                         # keep >=2 grid steps (v7x: both TCs busy)
        TB = min(TB, max(sub, (Bm // 2 // sub) * sub))
    TB = min(TB, Bm)
    Bp = int(pl.cdiv(B, TB)) * TB

    # ---- wrapper-side prep (plain JAX): flatten NHWC + unroll conv weights ----
    x_flat = jnp.transpose(x_nchw, (0, 2, 3, 1)).reshape(B, IN_DIM).astype(compute_dtype)
    if Bp != B:
        x_flat = jnp.pad(x_flat, ((0, Bp - B), (0, 0)))           # padded rows discarded

    w1_u = _unroll_conv_weights(w1, H_IN, W_IN, S1, H1, H1).astype(compute_dtype)   # (3072, 576)
    w2_u = _unroll_conv_weights(w2, H1, H1, S2, H2, H2).astype(compute_dtype)       # (576, 144)
    b1_u = jnp.tile(b1.astype(jnp.float32), H1 * H1).reshape(1, N1)
    b2_u = jnp.tile(b2.astype(jnp.float32), H2 * H2).reshape(1, N2)

    # Permute fc columns from PyTorch's (C, H, W) flatten to the kernel's (H, W, C),
    # then zero-pad the class axis to a lane-dense multiple of 128.
    wfc_k = jnp.transpose(wfc.reshape(num_classes, F1, H2, H2),
                          (2, 3, 1, 0)).reshape(N2, num_classes)
    wfc_pad = jnp.zeros((N2, nc_pad), jnp.float32
                        ).at[:, :num_classes].set(wfc_k).astype(compute_dtype)
    bfc_pad = jnp.full((1, nc_pad), -1e30, jnp.float32
                       ).at[0, :num_classes].set(bfc.astype(jnp.float32))

    const = lambda i: (0, 0)                  # weights/biases: VMEM-resident across steps

    cost = pl.CostEstimate(
        flops=2 * Bp * (IN_DIM * N1 + N1 * N2 + N2 * nc_pad),
        transcendentals=Bp * (nc_pad + 1),
        bytes_accessed=(Bp * IN_DIM + IN_DIM * N1 + N1 * N2 + N2 * nc_pad) * itemsize
                       + (N1 + N2 + nc_pad) * 4 + Bp * nc_pad * 4)

    out = pl.pallas_call(
        cnn_kernel,
        out_shape=jax.ShapeDtypeStruct((Bp, nc_pad), jnp.float32),
        grid_spec=pltpu.PrefetchScalarGridSpec(
            num_scalar_prefetch=0,
            grid=(Bp // TB,),
            in_specs=[
                pl.BlockSpec((TB, IN_DIM), lambda i: (i, 0)),     # raw flattened input tile
                pl.BlockSpec((IN_DIM, N1), const),                # W1 unrolled
                pl.BlockSpec((1, N1), const),                     # b1 unrolled
                pl.BlockSpec((N1, N2), const),                    # W2 unrolled
                pl.BlockSpec((1, N2), const),                     # b2 unrolled
                pl.BlockSpec((N2, nc_pad), const),                # fc weights (lane-padded)
                pl.BlockSpec((1, nc_pad), const),                 # fc bias (pad = -1e30)
            ],
            out_specs=pl.BlockSpec((TB, nc_pad), lambda i: (i, 0)),
        ),
        compiler_params=pltpu.CompilerParams(
            dimension_semantics=("parallel",),        # v7x: shard batch over 2 TCs
            # ~7 MiB W1 (x2 buffers) + TB*12 KiB input tile (x2) + small tensors:
            # fits f32 @ TB<=256 on v5e/v6e/v7x (v7x physical VMEM = 64 MiB).
            vmem_limit_bytes=40 * 1024 * 1024,
        ),
        cost_estimate=cost,
    )(x_flat, w1_u, b1_u, w2_u, b2_u, wfc_pad, bfc_pad)

    return out[:B, :num_classes]


def _reference(x_nchw, w1, b1, w2, b2, wfc, bfc):
    dn = ('NCHW', 'OIHW', 'NCHW')
    y = jax.lax.conv_general_dilated(x_nchw, w1, (S1, S1), 'VALID', dimension_numbers=dn)
    y = jnp.maximum(y + b1[None, :, None, None], 0.0)
    y = jax.lax.conv_general_dilated(y, w2, (S2, S2), 'VALID', dimension_numbers=dn)
    y = jnp.maximum(y + b2[None, :, None, None], 0.0)
    y = y.reshape(y.shape[0], -1)                                 # (C, H, W) flatten
    logits = y @ wfc.T + bfc
    return jax.nn.log_softmax(logits, axis=1)


if __name__ == "__main__":
    num_filters, num_classes, batch = 4, 10, 2

    key = jax.random.PRNGKey(0)
    kx, k1, k2, k3, k4, k5, k6 = jax.random.split(key, 7)
    x = jax.random.normal(kx, (batch, C_IN, H_IN, W_IN), jnp.float32)
    w1 = 0.1 * jax.random.normal(k1, (num_filters, C_IN, K1, K1), jnp.float32)
    b1 = 0.1 * jax.random.normal(k2, (num_filters,), jnp.float32)
    w2 = 0.1 * jax.random.normal(k3, (num_filters, num_filters, K2, K2), jnp.float32)
    b2 = 0.1 * jax.random.normal(k4, (num_filters,), jnp.float32)
    wfc = 0.1 * jax.random.normal(k5, (num_classes, H2 * H2 * num_filters), jnp.float32)
    bfc = 0.1 * jax.random.normal(k6, (num_classes,), jnp.float32)

    # Default f32 path: exact parity with the f32 reference.
    out = jax.block_until_ready(simple_cnn_2layers(x, w1, b1, w2, b2, wfc, bfc))
    ref = _reference(x, w1, b1, w2, b2, wfc, bfc)
    np.testing.assert_allclose(np.asarray(out), np.asarray(ref), rtol=1e-4, atol=1e-5)

    # bf16 MXU-operand path (v6e/v7x perf mode): smoke-check it runs and is finite.
    out_bf16 = jax.block_until_ready(
        simple_cnn_2layers(x, w1, b1, w2, b2, wfc, bfc, compute_dtype=jnp.bfloat16))
    assert out_bf16.shape == (batch, num_classes)
    assert np.all(np.isfinite(np.asarray(out_bf16)))

    print("KERNEL_OK")
</pallas_src>

<mosaic_0001>
module attributes {stable_mosaic.version = 11 : i64} {
  func.func @cnn_kernel(%arg0: i32, %arg1: memref<8x3072xf32, #tpu.memory_space<vmem>>, %arg2: memref<3072x576xf32, #tpu.memory_space<vmem>>, %arg3: memref<1x576xf32, #tpu.memory_space<vmem>>, %arg4: memref<576x144xf32, #tpu.memory_space<vmem>>, %arg5: memref<1x144xf32, #tpu.memory_space<vmem>>, %arg6: memref<144x128xf32, #tpu.memory_space<vmem>>, %arg7: memref<1x128xf32, #tpu.memory_space<vmem>>, %arg8: memref<8x128xf32, #tpu.memory_space<vmem>>) attributes {dimension_semantics = [#tpu.dimension_semantics<parallel>], iteration_bounds = array<i64: 1>, scalar_prefetch = 0 : i64, scratch_operands = 0 : i64, tpu.core_type = #tpu.core_type<tc>, window_params = [{transform_indices = @transform_0, window_bounds = array<i64: 8, 3072>}, {pipeline_mode = #tpu.pipeline_mode<synchronous>, transform_indices = @transform_1, window_bounds = array<i64: 3072, 576>}, {pipeline_mode = #tpu.pipeline_mode<synchronous>, transform_indices = @transform_2, window_bounds = array<i64: 1, 576>}, {pipeline_mode = #tpu.pipeline_mode<synchronous>, transform_indices = @transform_3, window_bounds = array<i64: 576, 144>}, {pipeline_mode = #tpu.pipeline_mode<synchronous>, transform_indices = @transform_4, window_bounds = array<i64: 1, 144>}, {pipeline_mode = #tpu.pipeline_mode<synchronous>, transform_indices = @transform_5, window_bounds = array<i64: 144, 128>}, {pipeline_mode = #tpu.pipeline_mode<synchronous>, transform_indices = @transform_6, window_bounds = array<i64: 1, 128>}, {transform_indices = @transform_7, window_bounds = array<i64: 8, 128>}]} {
    %c0 = arith.constant 0 : index
    %c0_0 = arith.constant 0 : index
    %0 = vector.load %arg1[%c0, %c0_0] : memref<8x3072xf32, #tpu.memory_space<vmem>>, vector<8x3072xf32>
    %c0_1 = arith.constant 0 : index
    %c0_2 = arith.constant 0 : index
    %1 = vector.load %arg2[%c0_1, %c0_2] : memref<3072x576xf32, #tpu.memory_space<vmem>>, vector<3072x576xf32>
    %cst = arith.constant dense<0.000000e+00> : vector<8x576xf32>
    %2 = tpu.matmul %0, %1, %cst {dimension_numbers = #tpu.dot_dimension_numbers<[1], [0], [0], [1], [0, 0, 1, 1], [], []>} : vector<8x3072xf32>, vector<3072x576xf32>, vector<8x576xf32> -> vector<8x576xf32>
    %c0_3 = arith.constant 0 : index
    %c0_4 = arith.constant 0 : index
    %3 = vector.load %arg3[%c0_3, %c0_4] : memref<1x576xf32, #tpu.memory_space<vmem>>, vector<1x576xf32>
    %4 = vector.broadcast %3 : vector<1x576xf32> to vector<8x576xf32>
    %5 = arith.addf %2, %4 : vector<8x576xf32>
    %cst_5 = arith.constant 0.000000e+00 : f32
    %6 = vector.broadcast %cst_5 : f32 to vector<8x576xf32>
    %7 = arith.maximumf %5, %6 : vector<8x576xf32>
    %c0_6 = arith.constant 0 : index
    %c0_7 = arith.constant 0 : index
    %8 = vector.load %arg4[%c0_6, %c0_7] : memref<576x144xf32, #tpu.memory_space<vmem>>, vector<576x144xf32>
    %cst_8 = arith.constant dense<0.000000e+00> : vector<8x144xf32>
    %9 = tpu.matmul %7, %8, %cst_8 {dimension_numbers = #tpu.dot_dimension_numbers<[1], [0], [0], [1], [0, 0, 1, 1], [], []>} : vector<8x576xf32>, vector<576x144xf32>, vector<8x144xf32> -> vector<8x144xf32>
    %c0_9 = arith.constant 0 : index
    %c0_10 = arith.constant 0 : index
    %10 = vector.load %arg5[%c0_9, %c0_10] : memref<1x144xf32, #tpu.memory_space<vmem>>, vector<1x144xf32>
    %11 = vector.broadcast %10 : vector<1x144xf32> to vector<8x144xf32>
    %12 = arith.addf %9, %11 : vector<8x144xf32>
    %cst_11 = arith.constant 0.000000e+00 : f32
    %13 = vector.broadcast %cst_11 : f32 to vector<8x144xf32>
    %14 = arith.maximumf %12, %13 : vector<8x144xf32>
    %c0_12 = arith.constant 0 : index
    %c0_13 = arith.constant 0 : index
    %15 = vector.load %arg6[%c0_12, %c0_13] : memref<144x128xf32, #tpu.memory_space<vmem>>, vector<144x128xf32>
    %cst_14 = arith.constant dense<0.000000e+00> : vector<8x128xf32>
    %16 = tpu.matmul %14, %15, %cst_14 {dimension_numbers = #tpu.dot_dimension_numbers<[1], [0], [0], [1], [0, 0, 1, 1], [], []>} : vector<8x144xf32>, vector<144x128xf32>, vector<8x128xf32> -> vector<8x128xf32>
    %c0_15 = arith.constant 0 : index
    %c0_16 = arith.constant 0 : index
    %17 = vector.load %arg7[%c0_15, %c0_16] : memref<1x128xf32, #tpu.memory_space<vmem>>, vector<1x128xf32>
    %18 = vector.broadcast %17 : vector<1x128xf32> to vector<8x128xf32>
    %19 = arith.addf %16, %18 : vector<8x128xf32>
    %cst_17 = arith.constant dense<0xFF800000> : vector<8xf32>
    %20 = vector.multi_reduction <maximumf>, %19, %cst_17 [1] : vector<8x128xf32> to vector<8xf32>
    %21 = vector.shape_cast %20 : vector<8xf32> to vector<8x1xf32>
    %22 = vector.broadcast %21 : vector<8x1xf32> to vector<8x128xf32>
    %23 = arith.subf %19, %22 : vector<8x128xf32>
    %24 = math.exp %23 : vector<8x128xf32>
    %cst_18 = arith.constant dense<0.000000e+00> : vector<8xf32>
    %25 = vector.multi_reduction <add>, %24, %cst_18 [1] : vector<8x128xf32> to vector<8xf32>
    %26 = vector.shape_cast %25 : vector<8xf32> to vector<8x1xf32>
    %27 = math.log %26 : vector<8x1xf32>
    %28 = arith.addf %21, %27 : vector<8x1xf32>
    %29 = vector.broadcast %28 : vector<8x1xf32> to vector<8x128xf32>
    %30 = arith.subf %19, %29 : vector<8x128xf32>
    %c0_19 = arith.constant 0 : index
    %c0_20 = arith.constant 0 : index
    %31 = vector.load %arg8[%c0_19, %c0_20] : memref<8x128xf32, #tpu.memory_space<vmem>>, vector<8x128xf32>
    tpu.vector_store %arg8[%c0_19, %c0_20], %30 {strides = array<i32>} : memref<8x128xf32, #tpu.memory_space<vmem>>, vector<8x128xf32>,
    return
  }
  func.func @transform_0(%arg0: i32) -> (i32, i32) {
    %c0_i32 = arith.constant 0 : i32
    %c0_i32_0 = arith.constant 0 : i32
    return %arg0, %c0_i32 : i32, i32
  }
  func.func @transform_1(%arg0: i32) -> (i32, i32) {
    %c0_i32 = arith.constant 0 : i32
    %c0_i32_0 = arith.constant 0 : i32
    %c0_i32_1 = arith.constant 0 : i32
    return %c0_i32, %c0_i32_0 : i32, i32
  }
  func.func @transform_2(%arg0: i32) -> (i32, i32) {
    %c0_i32 = arith.constant 0 : i32
    %c0_i32_0 = arith.constant 0 : i32
    %c0_i32_1 = arith.constant 0 : i32
    return %c0_i32, %c0_i32_0 : i32, i32
  }
  func.func @transform_3(%arg0: i32) -> (i32, i32) {
    %c0_i32 = arith.constant 0 : i32
    %c0_i32_0 = arith.constant 0 : i32
    %c0_i32_1 = arith.constant 0 : i32
    return %c0_i32, %c0_i32_0 : i32, i32
  }
  func.func @transform_4(%arg0: i32) -> (i32, i32) {
    %c0_i32 = arith.constant 0 : i32
    %c0_i32_0 = arith.constant 0 : i32
    %c0_i32_1 = arith.constant 0 : i32
    return %c0_i32, %c0_i32_0 : i32, i32
  }
  func.func @transform_5(%arg0: i32) -> (i32, i32) {
    %c0_i32 = arith.constant 0 : i32
    %c0_i32_0 = arith.constant 0 : i32
    %c0_i32_1 = arith.constant 0 : i32
    return %c0_i32, %c0_i32_0 : i32, i32
  }
  func.func @transform_6(%arg0: i32) -> (i32, i32) {
    %c0_i32 = arith.constant 0 : i32
    %c0_i32_0 = arith.constant 0 : i32
    %c0_i32_1 = arith.constant 0 : i32
    return %c0_i32, %c0_i32_0 : i32, i32
  }
  func.func @transform_7(%arg0: i32) -> (i32, i32) {
    %c0_i32 = arith.constant 0 : i32
    %c0_i32_0 = arith.constant 0 : i32
    return %arg0, %c0_i32 : i32, i32
  }
}

</mosaic_0001>

<llo_original>
// kernel: tpu_custom_call.1
$region0: #{tpu_custom_call.1}
  #allocation0 [shape = 'u32[]', space=smem, size = 0x4, offset = 0x4, fixed_abs, tag = 'smem constant byte address 0x4 - core index']
  #allocation1 [shape = 'u32[144,128]{1,0:T(1,128)}', space=vmem, size = 0x12000, scoped, tag = 'internal scratch']
  %s0 = inlined_call_operand.vmem [shape: f32[8,3072], index: 0, kind: input, shape index: {}]
  %s1 = inlined_call_operand.vmem [shape: f32[3072,576], index: 1, kind: input, shape index: {}]
  %s2 = inlined_call_operand.vmem [shape: f32[1,576], index: 2, kind: input, shape index: {}]
  %s3 = inlined_call_operand.vmem [shape: f32[576,144], index: 3, kind: input, shape index: {}]
  %s4 = inlined_call_operand.vmem [shape: f32[1,144], index: 4, kind: input, shape index: {}]
  %s5 = inlined_call_operand.vmem [shape: f32[144,128], index: 5, kind: input, shape index: {}]
  %s6 = inlined_call_operand.vmem [shape: f32[1,128], index: 6, kind: input, shape index: {}]
  %s7 = inlined_call_operand.hbm [shape: f32[8,128], index: 7, kind: output, shape index: {}]
  %s8 = sld [smem:[#allocation0]]
  $region38: #{tpu_custom_call.1} parent=0
    _
  %s10 = ssub.s32 1, %s8
  %s11 = scalar_select 0, %s10, %s8
  $region1: #{tpu_custom_call.1} parent=0
    #allocation2 [shape = 'u8[4096]{0}', space=vmem, size = 0x1000, scoped, tag = 'output window, operand 0, single buffered']
    #allocation3 [shape = 's32[1]{0}', space=sflag, size = 0x4, scoped, tag = 'scoped memory for tpu_custom_call.1']
    %12 = vsyncpa [#allocation3], 0
    // Predicated region
    $region2: #{tpu_custom_call.1} parent=1 // pred_check
      _
    $region3: #{tpu_custom_call.1} parent=1 // pred_check_branch
      %14 = sbr.rel (0) target = $region5
    $region4: #{tpu_custom_call.1} parent=1 // pred_region
      _
    $region5: #{tpu_custom_call.1} parent=1 // pred_fallthru
      _
    // Predicated region
    $region6: #{tpu_custom_call.1} parent=1 // pred_check
      _
    $region7: #{tpu_custom_call.1} parent=1 // pred_check_branch
      %16 = sbr.rel (0) target = $region9
    $region8: #{tpu_custom_call.1} parent=1 // pred_region
      _
    $region9: #{tpu_custom_call.1} parent=1 // pred_fallthru
      _
    // Predicated region
    $region10: #{tpu_custom_call.1} parent=1 // pred_check
      _
    $region11: #{tpu_custom_call.1} parent=1 // pred_check_branch
      %18 = sbr.rel (0) target = $region13
    $region12: #{tpu_custom_call.1} parent=1 // pred_region
      _
    $region13: #{tpu_custom_call.1} parent=1 // pred_fallthru
      _
    // Predicated region
    $region14: #{tpu_custom_call.1} parent=1 // pred_check
      _
    $region15: #{tpu_custom_call.1} parent=1 // pred_check_branch
      %20 = sbr.rel (0) target = $region17
    $region16: #{tpu_custom_call.1} parent=1 // pred_region
      _
    $region17: #{tpu_custom_call.1} parent=1 // pred_fallthru
      _
    // Predicated region
    $region18: #{tpu_custom_call.1} parent=1 // pred_check
      _
    $region19: #{tpu_custom_call.1} parent=1 // pred_check_branch
      %22 = sbr.rel (0) target = $region21
    $region20: #{tpu_custom_call.1} parent=1 // pred_region
      _
    $region21: #{tpu_custom_call.1} parent=1 // pred_fallthru
      _
    // Predicated region
    $region22: #{tpu_custom_call.1} parent=1 // pred_check
      _
    $region23: #{tpu_custom_call.1} parent=1 // pred_check_branch
      %24 = sbr.rel (0) target = $region25
    $region24: #{tpu_custom_call.1} parent=1 // pred_region
      _
    $region25: #{tpu_custom_call.1} parent=1 // pred_fallthru
      _
    // Predicated region
    $region26: #{tpu_custom_call.1} parent=1 // pred_check
      _
    $region27: #{tpu_custom_call.1} parent=1 // pred_check_branch
      %26 = sbr.rel (0) target = $region29
    $region28: #{tpu_custom_call.1} parent=1 // pred_region
      _
    $region29: #{tpu_custom_call.1} parent=1 // pred_fallthru
      _
    %v27 = vld [vmem:[%s0] sm:$0xff]
    %v28 = vld [vmem:[%s0 + $0x8] sm:$0xff]
    %v29 = vld [vmem:[%s0 + $0x10] sm:$0xff]
    %v30 = vld [vmem:[%s0 + $0x18] sm:$0xff]
    %v31 = vld [vmem:[%s0 + $0x20] sm:$0xff]
    %v32 = vld [vmem:[%s0 + $0x28] sm:$0xff]
    %v33 = vld [vmem:[%s0 + $0x30] sm:$0xff]
    %v34 = vld [vmem:[%s0 + $0x38] sm:$0xff]
    %v35 = vld [vmem:[%s0 + $0x40] sm:$0xff]
    %v36 = vld [vmem:[%s0 + $0x48] sm:$0xff]
    %v37 = vld [vmem:[%s0 + $0x50] sm:$0xff]
    %v38 = vld [vmem:[%s0 + $0x58] sm:$0xff]
    %v39 = vld [vmem:[%s0 + $0x60] sm:$0xff]
    %v40 = vld [vmem:[%s0 + $0x68] sm:$0xff]
    %v41 = vld [vmem:[%s0 + $0x70] sm:$0xff]
    %v42 = vld [vmem:[%s0 + $0x78] sm:$0xff]
    %v43 = vld [vmem:[%s0 + $0x80] sm:$0xff]
    %v44 = vld [vmem:[%s0 + $0x88] sm:$0xff]
    %v45 = vld [vmem:[%s0 + $0x90] sm:$0xff]
    %v46 = vld [vmem:[%s0 + $0x98] sm:$0xff]
    %v47 = vld [vmem:[%s0 + $0xa0] sm:$0xff]
    %v48 = vld [vmem:[%s0 + $0xa8] sm:$0xff]
    %v49 = vld [vmem:[%s0 + $0xb0] sm:$0xff]
    %v50 = vld [vmem:[%s0 + $0xb8] sm:$0xff]
    %v51 = vld [vmem:[%s1] sm:$0xff]
    %v52 = vld [vmem:[%s1 + $0x8] sm:$0xff]
    %v53 = vld [vmem:[%s1 + $0x10] sm:$0xff]
    %v54 = vld [vmem:[%s1 + $0x18] sm:$0xff]
    %v55 = vld [vmem:[%s1 + $0x20] sm:$0xff]
    %v56 = vld [vmem:[%s1 + $0x28] sm:$0xff]
    %v57 = vld [vmem:[%s1 + $0x30] sm:$0xff]
    %v58 = vld [vmem:[%s1 + $0x38] sm:$0xff]
    %v59 = vld [vmem:[%s1 + $0x40] sm:$0xff]
    %v60 = vld [vmem:[%s1 + $0x48] sm:$0xff]
    %v61 = vld [vmem:[%s1 + $0x50] sm:$0xff]
    %v62 = vld [vmem:[%s1 + $0x58] sm:$0xff]
    %v63 = vld [vmem:[%s1 + $0x60] sm:$0xff]
    %v64 = vld [vmem:[%s1 + $0x68] sm:$0xff]
    %v65 = vld [vmem:[%s1 + $0x70] sm:$0xff]
    %v66 = vld [vmem:[%s1 + $0x78] sm:$0xff]
    %v67 = vld [vmem:[%s1 + $0x80] sm:$0xff]
    %v68 = vld [vmem:[%s1 + $0x88] sm:$0xff]
    %v69 = vld [vmem:[%s1 + $0x90] sm:$0xff]
    %v70 = vld [vmem:[%s1 + $0x98] sm:$0xff]
    %v71 = vld [vmem:[%s1 + $0xa0] sm:$0xff]
    %v72 = vld [vmem:[%s1 + $0xa8] sm:$0xff]
    %v73 = vld [vmem:[%s1 + $0xb0] sm:$0xff]
    %v74 = vld [vmem:[%s1 + $0xb8] sm:$0xff]
    %v75 = vld [vmem:[%s1 + $0xc0] sm:$0xff]
    %v76 = vld [vmem:[%s1 + $0xc8] sm:$0xff]
    %v77 = vld [vmem:[%s1 + $0xd0] sm:$0xff]
    %v78 = vld [vmem:[%s1 + $0xd8] sm:$0xff]
    %v79 = vld [vmem:[%s1 + $0xe0] sm:$0xff]
    %v80 = vld [vmem:[%s1 + $0xe8] sm:$0xff]
    %v81 = vld [vmem:[%s1 + $0xf0] sm:$0xff]
    %v82 = vld [vmem:[%s1 + $0xf8] sm:$0xff]
    %v83 = vld [vmem:[%s1 + $0x100] sm:$0xff]
    %v84 = vld [vmem:[%s1 + $0x108] sm:$0xff]
    %v85 = vld [vmem:[%s1 + $0x110] sm:$0xff]
    %v86 = vld [vmem:[%s1 + $0x118] sm:$0xff]
    %v87 = vld [vmem:[%s1 + $0x120] sm:$0xff]
    %v88 = vld [vmem:[%s1 + $0x128] sm:$0xff]
    %v89 = vld [vmem:[%s1 + $0x130] sm:$0xff]
    %v90 = vld [vmem:[%s1 + $0x138] sm:$0xff]
    %v91 = vld [vmem:[%s1 + $0x140] sm:$0xff]
    %v92 = vld [vmem:[%s1 + $0x148] sm:$0xff]
    %v93 = vld [vmem:[%s1 + $0x150] sm:$0xff]
    %v94 = vld [vmem:[%s1 + $0x158] sm:$0xff]
    %v95 = vld [vmem:[%s1 + $0x160] sm:$0xff]
    %v96 = vld [vmem:[%s1 + $0x168] sm:$0xff]
    %v97 = vld [vmem:[%s1 + $0x170] sm:$0xff]
    %v98 = vld [vmem:[%s1 + $0x178] sm:$0xff]
    %v99 = vld [vmem:[%s1 + $0x180] sm:$0xff]
    %v100 = vld [vmem:[%s1 + $0x188] sm:$0xff]
    %v101 = vld [vmem:[%s1 + $0x190] sm:$0xff]
    %v102 = vld [vmem:[%s1 + $0x198] sm:$0xff]
    %v103 = vld [vmem:[%s1 + $0x1a0] sm:$0xff]
    %v104 = vld [vmem:[%s1 + $0x1a8] sm:$0xff]
    %v105 = vld [vmem:[%s1 + $0x1b0] sm:$0xff]
    %v106 = vld [vmem:[%s1 + $0x1b8] sm:$0xff]
    %v107 = vld [vmem:[%s1 + $0x1c0] sm:$0xff]
    %v108 = vld [vmem:[%s1 + $0x1c8] sm:$0xff]
    %v109 = vld [vmem:[%s1 + $0x1d0] sm:$0xff]
    %v110 = vld [vmem:[%s1 + $0x1d8] sm:$0xff]
    %v111 = vld [vmem:[%s1 + $0x1e0] sm:$0xff]
    %v112 = vld [vmem:[%s1 + $0x1e8] sm:$0xff]
    %v113 = vld [vmem:[%s1 + $0x1f0] sm:$0xff]
    %v114 = vld [vmem:[%s1 + $0x1f8] sm:$0xff]
    %v115 = vld [vmem:[%s1 + $0x200] sm:$0xff]
    %v116 = vld [vmem:[%s1 + $0x208] sm:$0xff]
    %v117 = vld [vmem:[%s1 + $0x210] sm:$0xff]
    %v118 = vld [vmem:[%s1 + $0x218] sm:$0xff]
    %v119 = vld [vmem:[%s1 + $0x220] sm:$0xff]
    %v120 = vld [vmem:[%s1 + $0x228] sm:$0xff]
    %v121 = vld [vmem:[%s1 + $0x230] sm:$0xff]
    %v122 = vld [vmem:[%s1 + $0x238] sm:$0xff]
    %v123 = vld [vmem:[%s1 + $0x240] sm:$0xff]
    %v124 = vld [vmem:[%s1 + $0x248] sm:$0xff]
    %v125 = vld [vmem:[%s1 + $0x250] sm:$0xff]
    %v126 = vld [vmem:[%s1 + $0x258] sm:$0xff]
    %v127 = vld [vmem:[%s1 + $0x260] sm:$0xff]
    %v128 = vld [vmem:[%s1 + $0x268] sm:$0xff]
    %v129 = vld [vmem:[%s1 + $0x270] sm:$0xff]
    %v130 = vld [vmem:[%s1 + $0x278] sm:$0xff]
    %v131 = vld [vmem:[%s1 + $0x280] sm:$0xff]
    %v132 = vld [vmem:[%s1 + $0x288] sm:$0xff]
    %v133 = vld [vmem:[%s1 + $0x290] sm:$0xff]
    %v134 = vld [vmem:[%s1 + $0x298] sm:$0xff]
    %v135 = vld [vmem:[%s1 + $0x2a0] sm:$0xff]
    %v136 = vld [vmem:[%s1 + $0x2a8] sm:$0xff]
    %v137 = vld [vmem:[%s1 + $0x2b0] sm:$0xff]
    %v138 = vld [vmem:[%s1 + $0x2b8] sm:$0xff]
    %v139 = vld [vmem:[%s1 + $0x2c0] sm:$0xff]
    %v140 = vld [vmem:[%s1 + $0x2c8] sm:$0xff]
    %v141 = vld [vmem:[%s1 + $0x2d0] sm:$0xff]
    %v142 = vld [vmem:[%s1 + $0x2d8] sm:$0xff]
    %v143 = vld [vmem:[%s1 + $0x2e0] sm:$0xff]
    %v144 = vld [vmem:[%s1 + $0x2e8] sm:$0xff]
    %v145 = vld [vmem:[%s1 + $0x2f0] sm:$0xff]
    %v146 = vld [vmem:[%s1 + $0x2f8] sm:$0xff]
    %v147 = vld [vmem:[%s1 + $0x300] sm:$0xff]
    %v148 = vld [vmem:[%s1 + $0x308] sm:$0xff]
    %v149 = vld [vmem:[%s1 + $0x310] sm:$0xff]
    %v150 = vld [vmem:[%s1 + $0x318] sm:$0xff]
    %v151 = vld [vmem:[%s1 + $0x320] sm:$0xff]
    %v152 = vld [vmem:[%s1 + $0x328] sm:$0xff]
    %v153 = vld [vmem:[%s1 + $0x330] sm:$0xff]
    %v154 = vld [vmem:[%s1 + $0x338] sm:$0xff]
    %v155 = vld [vmem:[%s1 + $0x340] sm:$0xff]
    %v156 = vld [vmem:[%s1 + $0x348] sm:$0xff]
    %v157 = vld [vmem:[%s1 + $0x350] sm:$0xff]
    %v158 = vld [vmem:[%s1 + $0x358] sm:$0xff]
    %v159 = vld [vmem:[%s1 + $0x360] sm:$0xff]
    %v160 = vld [vmem:[%s1 + $0x368] sm:$0xff]
    %v161 = vld [vmem:[%s1 + $0x370] sm:$0xff]
    %v162 = vld [vmem:[%s1 + $0x378] sm:$0xff]
    %v163 = vld [vmem:[%s1 + $0x380] sm:$0xff]
    %v164 = vld [vmem:[%s1 + $0x388] sm:$0xff]
    %v165 = vld [vmem:[%s1 + $0x390] sm:$0xff]
    %v166 = vld [vmem:[%s1 + $0x398] sm:$0xff]
    %v167 = vld [vmem:[%s1 + $0x3a0] sm:$0xff]
    %v168 = vld [vmem:[%s1 + $0x3a8] sm:$0xff]
    %v169 = vld [vmem:[%s1 + $0x3b0] sm:$0xff]
    %v170 = vld [vmem:[%s1 + $0x3b8] sm:$0xff]
    %v171 = vld [vmem:[%s1 + $0x3c0] sm:$0xff]
    %v172 = vld [vmem:[%s1 + $0x3c8] sm:$0xff]
    %v173 = vld [vmem:[%s1 + $0x3d0] sm:$0xff]
    %v174 = vld [vmem:[%s1 + $0x3d8] sm:$0xff]
    %v175 = vld [vmem:[%s1 + $0x3e0] sm:$0xff]
    %v176 = vld [vmem:[%s1 + $0x3e8] sm:$0xff]
    %v177 = vld [vmem:[%s1 + $0x3f0] sm:$0xff]
    %v178 = vld [vmem:[%s1 + $0x3f8] sm:$0xff]
    %v179 = vld [vmem:[%s1 + $0x400] sm:$0xff]
    %v180 = vld [vmem:[%s1 + $0x408] sm:$0xff]
    %v181 = vld [vmem:[%s1 + $0x410] sm:$0xff]
    %v182 = vld [vmem:[%s1 + $0x418] sm:$0xff]
    %v183 = vld [vmem:[%s1 + $0x420] sm:$0xff]
    %v184 = vld [vmem:[%s1 + $0x428] sm:$0xff]
    %v185 = vld [vmem:[%s1 + $0x430] sm:$0xff]
    %v186 = vld [vmem:[%s1 + $0x438] sm:$0xff]
    %v187 = vld [vmem:[%s1 + $0x440] sm:$0xff]
    %v188 = vld [vmem:[%s1 + $0x448] sm:$0xff]
    %v189 = vld [vmem:[%s1 + $0x450] sm:$0xff]
    %v190 = vld [vmem:[%s1 + $0x458] sm:$0xff]
    %v191 = vld [vmem:[%s1 + $0x460] sm:$0xff]
    %v192 = vld [vmem:[%s1 + $0x468] sm:$0xff]
    %v193 = vld [vmem:[%s1 + $0x470] sm:$0xff]
    %v194 = vld [vmem:[%s1 + $0x478] sm:$0xff]
    %v195 = vld [vmem:[%s1 + $0x480] sm:$0xff]
    %v196 = vld [vmem:[%s1 + $0x488] sm:$0xff]
    %v197 = vld [vmem:[%s1 + $0x490] sm:$0xff]
    %v198 = vld [vmem:[%s1 + $0x498] sm:$0xff]
    %v199 = vld [vmem:[%s1 + $0x4a0] sm:$0xff]
    %v200 = vld [vmem:[%s1 + $0x4a8] sm:$0xff]
    %v201 = vld [vmem:[%s1 + $0x4b0] sm:$0xff]
    %v202 = vld [vmem:[%s1 + $0x4b8] sm:$0xff]
    %v203 = vld [vmem:[%s1 + $0x4c0] sm:$0xff]
    %v204 = vld [vmem:[%s1 + $0x4c8] sm:$0xff]
    %v205 = vld [vmem:[%s1 + $0x4d0] sm:$0xff]
    %v206 = vld [vmem:[%s1 + $0x4d8] sm:$0xff]
    %v207 = vld [vmem:[%s1 + $0x4e0] sm:$0xff]
    %v208 = vld [vmem:[%s1 + $0x4e8] sm:$0xff]
    %v209 = vld [vmem:[%s1 + $0x4f0] sm:$0xff]
    %v210 = vld [vmem:[%s1 + $0x4f8] sm:$0xff]
    %v211 = vld [vmem:[%s1 + $0x500] sm:$0xff]
    %v212 = vld [vmem:[%s1 + $0x508] sm:$0xff]
    %v213 = vld [vmem:[%s1 + $0x510] sm:$0xff]
    %v214 = vld [vmem:[%s1 + $0x518] sm:$0xff]
    %v215 = vld [vmem:[%s1 + $0x520] sm:$0xff]
    %v216 = vld [vmem:[%s1 + $0x528] sm:$0xff]
    %v217 = vld [vmem:[%s1 + $0x530] sm:$0xff]
    %v218 = vld [vmem:[%s1 + $0x538] sm:$0xff]
    %v219 = vld [vmem:[%s1 + $0x540] sm:$0xff]
    %v220 = vld [vmem:[%s1 + $0x548] sm:$0xff]
    %v221 = vld [vmem:[%s1 + $0x550] sm:$0xff]
    %v222 = vld [vmem:[%s1 + $0x558] sm:$0xff]
    %v223 = vld [vmem:[%s1 + $0x560] sm:$0xff]
    %v224 = vld [vmem:[%s1 + $0x568] sm:$0xff]
    %v225 = vld [vmem:[%s1 + $0x570] sm:$0xff]
    %v226 = vld [vmem:[%s1 + $0x578] sm:$0xff]
    %v227 = vld [vmem:[%s1 + $0x580] sm:$0xff]
    %v228 = vld [vmem:[%s1 + $0x588] sm:$0xff]
    %v229 = vld [vmem:[%s1 + $0x590] sm:$0xff]
    %v230 = vld [vmem:[%s1 + $0x598] sm:$0xff]
    %v231 = vld [vmem:[%s1 + $0x5a0] sm:$0xff]
    %v232 = vld [vmem:[%s1 + $0x5a8] sm:$0xff]
    %v233 = vld [vmem:[%s1 + $0x5b0] sm:$0xff]
    %v234 = vld [vmem:[%s1 + $0x5b8] sm:$0xff]
    %v235 = vld [vmem:[%s1 + $0x5c0] sm:$0xff]
    %v236 = vld [vmem:[%s1 + $0x5c8] sm:$0xff]
    %v237 = vld [vmem:[%s1 + $0x5d0] sm:$0xff]
    %v238 = vld [vmem:[%s1 + $0x5d8] sm:$0xff]
    %v239 = vld [vmem:[%s1 + $0x5e0] sm:$0xff]
    %v240 = vld [vmem:[%s1 + $0x5e8] sm:$0xff]
    %v241 = vld [vmem:[%s1 + $0x5f0] sm:$0xff]
    %v242 = vld [vmem:[%s1 + $0x5f8] sm:$0xff]
    %v243 = vld [vmem:[%s1 + $0x600] sm:$0xff]
    %v244 = vld [vmem:[%s1 + $0x608] sm:$0xff]
    %v245 = vld [vmem:[%s1 + $0x610] sm:$0xff]
    %v246 = vld [vmem:[%s1 + $0x618] sm:$0xff]
    %v247 = vld [vmem:[%s1 + $0x620] sm:$0xff]
    %v248 = vld [vmem:[%s1 + $0x628] sm:$0xff]
    %v249 = vld [vmem:[%s1 + $0x630] sm:$0xff]
    %v250 = vld [vmem:[%s1 + $0x638] sm:$0xff]
    %v251 = vld [vmem:[%s1 + $0x640] sm:$0xff]
    %v252 = vld [vmem:[%s1 + $0x648] sm:$0xff]
    %v253 = vld [vmem:[%s1 + $0x650] sm:$0xff]
    %v254 = vld [vmem:[%s1 + $0x658] sm:$0xff]
    %v255 = vld [vmem:[%s1 + $0x660] sm:$0xff]
    %v256 = vld [vmem:[%s1 + $0x668] sm:$0xff]
    %v257 = vld [vmem:[%s1 + $0x670] sm:$0xff]
    %v258 = vld [vmem:[%s1 + $0x678] sm:$0xff]
    %v259 = vld [vmem:[%s1 + $0x680] sm:$0xff]
    %v260 = vld [vmem:[%s1 + $0x688] sm:$0xff]
    %v261 = vld [vmem:[%s1 + $0x690] sm:$0xff]
    %v262 = vld [vmem:[%s1 + $0x698] sm:$0xff]
    %v263 = vld [vmem:[%s1 + $0x6a0] sm:$0xff]
    %v264 = vld [vmem:[%s1 + $0x6a8] sm:$0xff]
    %v265 = vld [vmem:[%s1 + $0x6b0] sm:$0xff]
    %v266 = vld [vmem:[%s1 + $0x6b8] sm:$0xff]
    %v267 = vld [vmem:[%s1 + $0x6c0] sm:$0xff]
    %v268 = vld [vmem:[%s1 + $0x6c8] sm:$0xff]
    %v269 = vld [vmem:[%s1 + $0x6d0] sm:$0xff]
    %v270 = vld [vmem:[%s1 + $0x6d8] sm:$0xff]
    %v271 = vld [vmem:[%s1 + $0x6e0] sm:$0xff]
    %v272 = vld [vmem:[%s1 + $0x6e8] sm:$0xff]
    %v273 = vld [vmem:[%s1 + $0x6f0] sm:$0xff]
    %v274 = vld [vmem:[%s1 + $0x6f8] sm:$0xff]
    %v275 = vld [vmem:[%s1 + $0x700] sm:$0xff]
    %v276 = vld [vmem:[%s1 + $0x708] sm:$0xff]
    %v277 = vld [vmem:[%s1 + $0x710] sm:$0xff]
    %v278 = vld [vmem:[%s1 + $0x718] sm:$0xff]
    %v279 = vld [vmem:[%s1 + $0x720] sm:$0xff]
    %v280 = vld [vmem:[%s1 + $0x728] sm:$0xff]
    %v281 = vld [vmem:[%s1 + $0x730] sm:$0xff]
    %v282 = vld [vmem:[%s1 + $0x738] sm:$0xff]
    %v283 = vld [vmem:[%s1 + $0x740] sm:$0xff]
    %v284 = vld [vmem:[%s1 + $0x748] sm:$0xff]
    %v285 = vld [vmem:[%s1 + $0x750] sm:$0xff]
    %v286 = vld [vmem:[%s1 + $0x758] sm:$0xff]
    %v287 = vld [vmem:[%s1 + $0x760] sm:$0xff]
    %v288 = vld [vmem:[%s1 + $0x768] sm:$0xff]
    %v289 = vld [vmem:[%s1 + $0x770] sm:$0xff]
    %v290 = vld [vmem:[%s1 + $0x778] sm:$0xff]
    %v291 = vld [vmem:[%s1 + $0x780] sm:$0xff]
    %v292 = vld [vmem:[%s1 + $0x788] sm:$0xff]
    %v293 = vld [vmem:[%s1 + $0x790] sm:$0xff]
    %v294 = vld [vmem:[%s1 + $0x798] sm:$0xff]
    %v295 = vld [vmem:[%s1 + $0x7a0] sm:$0xff]
    %v296 = vld [vmem:[%s1 + $0x7a8] sm:$0xff]
    %v297 = vld [vmem:[%s1 + $0x7b0] sm:$0xff]
    %v298 = vld [vmem:[%s1 + $0x7b8] sm:$0xff]
    %v299 = vld [vmem:[%s1 + $0x7c0] sm:$0xff]
    %v300 = vld [vmem:[%s1 + $0x7c8] sm:$0xff]
    %v301 = vld [vmem:[%s1 + $0x7d0] sm:$0xff]
    %v302 = vld [vmem:[%s1 + $0x7d8] sm:$0xff]
    %v303 = vld [vmem:[%s1 + $0x7e0] sm:$0xff]
    %v304 = vld [vmem:[%s1 + $0x7e8] sm:$0xff]
    %v305 = vld [vmem:[%s1 + $0x7f0] sm:$0xff]
    %v306 = vld [vmem:[%s1 + $0x7f8] sm:$0xff]
    %v307 = vld [vmem:[%s1 + $0x800] sm:$0xff]
    %v308 = vld [vmem:[%s1 + $0x808] sm:$0xff]
    %v309 = vld [vmem:[%s1 + $0x810] sm:$0xff]
    %v310 = vld [vmem:[%s1 + $0x818] sm:$0xff]
    %v311 = vld [vmem:[%s1 + $0x820] sm:$0xff]
    %v312 = vld [vmem:[%s1 + $0x828] sm:$0xff]
    %v313 = vld [vmem:[%s1 + $0x830] sm:$0xff]
    %v314 = vld [vmem:[%s1 + $0x838] sm:$0xff]
    %v315 = vld [vmem:[%s1 + $0x840] sm:$0xff]
    %v316 = vld [vmem:[%s1 + $0x848] sm:$0xff]
    %v317 = vld [vmem:[%s1 + $0x850] sm:$0xff]
    %v318 = vld [vmem:[%s1 + $0x858] sm:$0xff]
    %v319 = vld [vmem:[%s1 + $0x860] sm:$0xff]
    %v320 = vld [vmem:[%s1 + $0x868] sm:$0xff]
    %v321 = vld [vmem:[%s1 + $0x870] sm:$0xff]
    %v322 = vld [vmem:[%s1 + $0x878] sm:$0xff]
    %v323 = vld [vmem:[%s1 + $0x880] sm:$0xff]
    %v324 = vld [vmem:[%s1 + $0x888] sm:$0xff]
    %v325 = vld [vmem:[%s1 + $0x890] sm:$0xff]
    %v326 = vld [vmem:[%s1 + $0x898] sm:$0xff]
    %v327 = vld [vmem:[%s1 + $0x8a0] sm:$0xff]
    %v328 = vld [vmem:[%s1 + $0x8a8] sm:$0xff]
    %v329 = vld [vmem:[%s1 + $0x8b0] sm:$0xff]
    %v330 = vld [vmem:[%s1 + $0x8b8] sm:$0xff]
    %v331 = vld [vmem:[%s1 + $0x8c0] sm:$0xff]
    %v332 = vld [vmem:[%s1 + $0x8c8] sm:$0xff]
    %v333 = vld [vmem:[%s1 + $0x8d0] sm:$0xff]
    %v334 = vld [vmem:[%s1 + $0x8d8] sm:$0xff]
    %v335 = vld [vmem:[%s1 + $0x8e0] sm:$0xff]
    %v336 = vld [vmem:[%s1 + $0x8e8] sm:$0xff]
    %v337 = vld [vmem:[%s1 + $0x8f0] sm:$0xff]
    %v338 = vld [vmem:[%s1 + $0x8f8] sm:$0xff]
    %v339 = vld [vmem:[%s1 + $0x900] sm:$0xff]
    %v340 = vld [vmem:[%s1 + $0x908] sm:$0xff]
    %v341 = vld [vmem:[%s1 + $0x910] sm:$0xff]
    %v342 = vld [vmem:[%s1 + $0x918] sm:$0xff]
    %v343 = vld [vmem:[%s1 + $0x920] sm:$0xff]
    %v344 = vld [vmem:[%s1 + $0x928] sm:$0xff]
    %v345 = vld [vmem:[%s1 + $0x930] sm:$0xff]
    %v346 = vld [vmem:[%s1 + $0x938] sm:$0xff]
    %v347 = vld [vmem:[%s1 + $0x940] sm:$0xff]
    %v348 = vld [vmem:[%s1 + $0x948] sm:$0xff]
    %v349 = vld [vmem:[%s1 + $0x950] sm:$0xff]
    %v350 = vld [vmem:[%s1 + $0x958] sm:$0xff]
    %v351 = vld [vmem:[%s1 + $0x960] sm:$0xff]
    %v352 = vld [vmem:[%s1 + $0x968] sm:$0xff]
    %v353 = vld [vmem:[%s1 + $0x970] sm:$0xff]
    %v354 = vld [vmem:[%s1 + $0x978] sm:$0xff]
    %v355 = vld [vmem:[%s1 + $0x980] sm:$0xff]
    %v356 = vld [vmem:[%s1 + $0x988] sm:$0xff]
    %v357 = vld [vmem:[%s1 + $0x990] sm:$0xff]
    %v358 = vld [vmem:[%s1 + $0x998] sm:$0xff]
    %v359 = vld [vmem:[%s1 + $0x9a0] sm:$0xff]
    %v360 = vld [vmem:[%s1 + $0x9a8] sm:$0xff]
    %v361 = vld [vmem:[%s1 + $0x9b0] sm:$0xff]
    %v362 = vld [vmem:[%s1 + $0x9b8] sm:$0xff]
    %v363 = vld [vmem:[%s1 + $0x9c0] sm:$0xff]
    %v364 = vld [vmem:[%s1 + $0x9c8] sm:$0xff]
    %v365 = vld [vmem:[%s1 + $0x9d0] sm:$0xff]
    %v366 = vld [vmem:[%s1 + $0x9d8] sm:$0xff]
    %v367 = vld [vmem:[%s1 + $0x9e0] sm:$0xff]
    %v368 = vld [vmem:[%s1 + $0x9e8] sm:$0xff]
    %v369 = vld [vmem:[%s1 + $0x9f0] sm:$0xff]
    %v370 = vld [vmem:[%s1 + $0x9f8] sm:$0xff]
    %v371 = vld [vmem:[%s1 + $0xa00] sm:$0xff]
    %v372 = vld [vmem:[%s1 + $0xa08] sm:$0xff]
    %v373 = vld [vmem:[%s1 + $0xa10] sm:$0xff]
    %v374 = vld [vmem:[%s1 + $0xa18] sm:$0xff]
    %v375 = vld [vmem:[%s1 + $0xa20] sm:$0xff]
    %v376 = vld [vmem:[%s1 + $0xa28] sm:$0xff]
    %v377 = vld [vmem:[%s1 + $0xa30] sm:$0xff]
    %v378 = vld [vmem:[%s1 + $0xa38] sm:$0xff]
    %v379 = vld [vmem:[%s1 + $0xa40] sm:$0xff]
    %v380 = vld [vmem:[%s1 + $0xa48] sm:$0xff]
    %v381 = vld [vmem:[%s1 + $0xa50] sm:$0xff]
    %v382 = vld [vmem:[%s1 + $0xa58] sm:$0xff]
    %v383 = vld [vmem:[%s1 + $0xa60] sm:$0xff]
    %v384 = vld [vmem:[%s1 + $0xa68] sm:$0xff]
    %v385 = vld [vmem:[%s1 + $0xa70] sm:$0xff]
    %v386 = vld [vmem:[%s1 + $0xa78] sm:$0xff]
    %v387 = vld [vmem:[%s1 + $0xa80] sm:$0xff]
    %v388 = vld [vmem:[%s1 + $0xa88] sm:$0xff]
    %v389 = vld [vmem:[%s1 + $0xa90] sm:$0xff]
    %v390 = vld [vmem:[%s1 + $0xa98] sm:$0xff]
    %v391 = vld [vmem:[%s1 + $0xaa0] sm:$0xff]
    %v392 = vld [vmem:[%s1 + $0xaa8] sm:$0xff]
    %v393 = vld [vmem:[%s1 + $0xab0] sm:$0xff]
    %v394 = vld [vmem:[%s1 + $0xab8] sm:$0xff]
    %v395 = vld [vmem:[%s1 + $0xac0] sm:$0xff]
    %v396 = vld [vmem:[%s1 + $0xac8] sm:$0xff]
    %v397 = vld [vmem:[%s1 + $0xad0] sm:$0xff]
    %v398 = vld [vmem:[%s1 + $0xad8] sm:$0xff]
    %v399 = vld [vmem:[%s1 + $0xae0] sm:$0xff]
    %v400 = vld [vmem:[%s1 + $0xae8] sm:$0xff]
    %v401 = vld [vmem:[%s1 + $0xaf0] sm:$0xff]
    %v402 = vld [vmem:[%s1 + $0xaf8] sm:$0xff]
    %v403 = vld [vmem:[%s1 + $0xb00] sm:$0xff]
    %v404 = vld [vmem:[%s1 + $0xb08] sm:$0xff]
    %v405 = vld [vmem:[%s1 + $0xb10] sm:$0xff]
    %v406 = vld [vmem:[%s1 + $0xb18] sm:$0xff]
    %v407 = vld [vmem:[%s1 + $0xb20] sm:$0xff]
    %v408 = vld [vmem:[%s1 + $0xb28] sm:$0xff]
    %v409 = vld [vmem:[%s1 + $0xb30] sm:$0xff]
    %v410 = vld [vmem:[%s1 + $0xb38] sm:$0xff]
    %v411 = vld [vmem:[%s1 + $0xb40] sm:$0xff]
    %v412 = vld [vmem:[%s1 + $0xb48] sm:$0xff]
    %v413 = vld [vmem:[%s1 + $0xb50] sm:$0xff]
    %v414 = vld [vmem:[%s1 + $0xb58] sm:$0xff]
    %v415 = vld [vmem:[%s1 + $0xb60] sm:$0xff]
    %v416 = vld [vmem:[%s1 + $0xb68] sm:$0xff]
    %v417 = vld [vmem:[%s1 + $0xb70] sm:$0xff]
    %v418 = vld [vmem:[%s1 + $0xb78] sm:$0xff]
    %v419 = vld [vmem:[%s1 + $0xb80] sm:$0xff]
    %v420 = vld [vmem:[%s1 + $0xb88] sm:$0xff]
    %v421 = vld [vmem:[%s1 + $0xb90] sm:$0xff]
    %v422 = vld [vmem:[%s1 + $0xb98] sm:$0xff]
    %v423 = vld [vmem:[%s1 + $0xba0] sm:$0xff]
    %v424 = vld [vmem:[%s1 + $0xba8] sm:$0xff]
    %v425 = vld [vmem:[%s1 + $0xbb0] sm:$0xff]
    %v426 = vld [vmem:[%s1 + $0xbb8] sm:$0xff]
    %v427 = vld [vmem:[%s1 + $0xbc0] sm:$0xff]
    %v428 = vld [vmem:[%s1 + $0xbc8] sm:$0xff]
    %v429 = vld [vmem:[%s1 + $0xbd0] sm:$0xff]
    %v430 = vld [vmem:[%s1 + $0xbd8] sm:$0xff]
    %v431 = vld [vmem:[%s1 + $0xbe0] sm:$0xff]
    %v432 = vld [vmem:[%s1 + $0xbe8] sm:$0xff]
    %v433 = vld [vmem:[%s1 + $0xbf0] sm:$0xff]
    %v434 = vld [vmem:[%s1 + $0xbf8] sm:$0xff]
    %v435 = vld [vmem:[%s1 + $0xc00] sm:$0xff]
    %v436 = vld [vmem:[%s1 + $0xc08] sm:$0xff]
    %v437 = vld [vmem:[%s1 + $0xc10] sm:$0xff]
    %v438 = vld [vmem:[%s1 + $0xc18] sm:$0xff]
    %v439 = vld [vmem:[%s1 + $0xc20] sm:$0xff]
    %v440 = vld [vmem:[%s1 + $0xc28] sm:$0xff]
    %v441 = vld [vmem:[%s1 + $0xc30] sm:$0xff]
    %v442 = vld [vmem:[%s1 + $0xc38] sm:$0xff]
    %v443 = vld [vmem:[%s1 + $0xc40] sm:$0xff]
    %v444 = vld [vmem:[%s1 + $0xc48] sm:$0xff]
    %v445 = vld [vmem:[%s1 + $0xc50] sm:$0xff]
    %v446 = vld [vmem:[%s1 + $0xc58] sm:$0xff]
    %v447 = vld [vmem:[%s1 + $0xc60] sm:$0xff]
    %v448 = vld [vmem:[%s1 + $0xc68] sm:$0xff]
    %v449 = vld [vmem:[%s1 + $0xc70] sm:$0xff]
    %v450 = vld [vmem:[%s1 + $0xc78] sm:$0xff]
    %v451 = vld [vmem:[%s1 + $0xc80] sm:$0xff]
    %v452 = vld [vmem:[%s1 + $0xc88] sm:$0xff]
    %v453 = vld [vmem:[%s1 + $0xc90] sm:$0xff]
    %v454 = vld [vmem:[%s1 + $0xc98] sm:$0xff]
    %v455 = vld [vmem:[%s1 + $0xca0] sm:$0xff]
    %v456 = vld [vmem:[%s1 + $0xca8] sm:$0xff]
    %v457 = vld [vmem:[%s1 + $0xcb0] sm:$0xff]
    %v458 = vld [vmem:[%s1 + $0xcb8] sm:$0xff]
    %v459 = vld [vmem:[%s1 + $0xcc0] sm:$0xff]
    %v460 = vld [vmem:[%s1 + $0xcc8] sm:$0xff]
    %v461 = vld [vmem:[%s1 + $0xcd0] sm:$0xff]
    %v462 = vld [vmem:[%s1 + $0xcd8] sm:$0xff]
    %v463 = vld [vmem:[%s1 + $0xce0] sm:$0xff]
    %v464 = vld [vmem:[%s1 + $0xce8] sm:$0xff]
    %v465 = vld [vmem:[%s1 + $0xcf0] sm:$0xff]
    %v466 = vld [vmem:[%s1 + $0xcf8] sm:$0xff]
    %v467 = vld [vmem:[%s1 + $0xd00] sm:$0xff]
    %v468 = vld [vmem:[%s1 + $0xd08] sm:$0xff]
    %v469 = vld [vmem:[%s1 + $0xd10] sm:$0xff]
    %v470 = vld [vmem:[%s1 + $0xd18] sm:$0xff]
    %v471 = vld [vmem:[%s1 + $0xd20] sm:$0xff]
    %v472 = vld [vmem:[%s1 + $0xd28] sm:$0xff]
    %v473 = vld [vmem:[%s1 + $0xd30] sm:$0xff]
    %v474 = vld [vmem:[%s1 + $0xd38] sm:$0xff]
    %v475 = vld [vmem:[%s1 + $0xd40] sm:$0xff]
    %v476 = vld [vmem:[%s1 + $0xd48] sm:$0xff]
    %v477 = vld [vmem:[%s1 + $0xd50] sm:$0xff]
    %v478 = vld [vmem:[%s1 + $0xd58] sm:$0xff]
    %v479 = vld [vmem:[%s1 + $0xd60] sm:$0xff]
    %v480 = vld [vmem:[%s1 + $0xd68] sm:$0xff]
    %v481 = vld [vmem:[%s1 + $0xd70] sm:$0xff]
    %v482 = vld [vmem:[%s1 + $0xd78] sm:$0xff]
    %v483 = vld [vmem:[%s1 + $0xd80] sm:$0xff]
    %v484 = vld [vmem:[%s1 + $0xd88] sm:$0xff]
    %v485 = vld [vmem:[%s1 + $0xd90] sm:$0xff]
    %v486 = vld [vmem:[%s1 + $0xd98] sm:$0xff]
    %v487 = vld [vmem:[%s1 + $0xda0] sm:$0xff]
    %v488 = vld [vmem:[%s1 + $0xda8] sm:$0xff]
    %v489 = vld [vmem:[%s1 + $0xdb0] sm:$0xff]
    %v490 = vld [vmem:[%s1 + $0xdb8] sm:$0xff]
    %v491 = vld [vmem:[%s1 + $0xdc0] sm:$0xff]
    %v492 = vld [vmem:[%s1 + $0xdc8] sm:$0xff]
    %v493 = vld [vmem:[%s1 + $0xdd0] sm:$0xff]
    %v494 = vld [vmem:[%s1 + $0xdd8] sm:$0xff]
    %v495 = vld [vmem:[%s1 + $0xde0] sm:$0xff]
    %v496 = vld [vmem:[%s1 + $0xde8] sm:$0xff]
    %v497 = vld [vmem:[%s1 + $0xdf0] sm:$0xff]
    %v498 = vld [vmem:[%s1 + $0xdf8] sm:$0xff]
    %v499 = vld [vmem:[%s1 + $0xe00] sm:$0xff]
    %v500 = vld [vmem:[%s1 + $0xe08] sm:$0xff]
    %v501 = vld [vmem:[%s1 + $0xe10] sm:$0xff]
    %v502 = vld [vmem:[%s1 + $0xe18] sm:$0xff]
    %v503 = vld [vmem:[%s1 + $0xe20] sm:$0xff]
    %v504 = vld [vmem:[%s1 + $0xe28] sm:$0xff]
    %v505 = vld [vmem:[%s1 + $0xe30] sm:$0xff]
    %v506 = vld [vmem:[%s1 + $0xe38] sm:$0xff]
    %v507 = vld [vmem:[%s1 + $0xe40] sm:$0xff]
    %v508 = vld [vmem:[%s1 + $0xe48] sm:$0xff]
    %v509 = vld [vmem:[%s1 + $0xe50] sm:$0xff]
    %v510 = vld [vmem:[%s1 + $0xe58] sm:$0xff]
    %v511 = vld [vmem:[%s1 + $0xe60] sm:$0xff]
    %v512 = vld [vmem:[%s1 + $0xe68] sm:$0xff]
    %v513 = vld [vmem:[%s1 + $0xe70] sm:$0xff]
    %v514 = vld [vmem:[%s1 + $0xe78] sm:$0xff]
    %v515 = vld [vmem:[%s1 + $0xe80] sm:$0xff]
    %v516 = vld [vmem:[%s1 + $0xe88] sm:$0xff]
    %v517 = vld [vmem:[%s1 + $0xe90] sm:$0xff]
    %v518 = vld [vmem:[%s1 + $0xe98] sm:$0xff]
    %v519 = vld [vmem:[%s1 + $0xea0] sm:$0xff]
    %v520 = vld [vmem:[%s1 + $0xea8] sm:$0xff]
    %v521 = vld [vmem:[%s1 + $0xeb0] sm:$0xff]
    %v522 = vld [vmem:[%s1 + $0xeb8] sm:$0xff]
    %v523 = vld [vmem:[%s1 + $0xec0] sm:$0xff]
    %v524 = vld [vmem:[%s1 + $0xec8] sm:$0xff]
    %v525 = vld [vmem:[%s1 + $0xed0] sm:$0xff]
    %v526 = vld [vmem:[%s1 + $0xed8] sm:$0xff]
    %v527 = vld [vmem:[%s1 + $0xee0] sm:$0xff]
    %v528 = vld [vmem:[%s1 + $0xee8] sm:$0xff]
    %v529 = vld [vmem:[%s1 + $0xef0] sm:$0xff]
    %v530 = vld [vmem:[%s1 + $0xef8] sm:$0xff]
    %v531 = vld [vmem:[%s1 + $0xf00] sm:$0xff]
    %v532 = vld [vmem:[%s1 + $0xf08] sm:$0xff]
    %v533 = vld [vmem:[%s1 + $0xf10] sm:$0xff]
    %v534 = vld [vmem:[%s1 + $0xf18] sm:$0xff]
    %v535 = vld [vmem:[%s1 + $0xf20] sm:$0xff]
    %v536 = vld [vmem:[%s1 + $0xf28] sm:$0xff]
    %v537 = vld [vmem:[%s1 + $0xf30] sm:$0xff]
    %v538 = vld [vmem:[%s1 + $0xf38] sm:$0xff]
    %v539 = vld [vmem:[%s1 + $0xf40] sm:$0xff]
    %v540 = vld [vmem:[%s1 + $0xf48] sm:$0xff]
    %v541 = vld [vmem:[%s1 + $0xf50] sm:$0xff]
    %v542 = vld [vmem:[%s1 + $0xf58] sm:$0xff]
    %v543 = vld [vmem:[%s1 + $0xf60] sm:$0xff]
    %v544 = vld [vmem:[%s1 + $0xf68] sm:$0xff]
    %v545 = vld [vmem:[%s1 + $0xf70] sm:$0xff]
    %v546 = vld [vmem:[%s1 + $0xf78] sm:$0xff]
    %v547 = vld [vmem:[%s1 + $0xf80] sm:$0xff]
    %v548 = vld [vmem:[%s1 + $0xf88] sm:$0xff]
    %v549 = vld [vmem:[%s1 + $0xf90] sm:$0xff]
    %v550 = vld [vmem:[%s1 + $0xf98] sm:$0xff]
    %v551 = vld [vmem:[%s1 + $0xfa0] sm:$0xff]
    %v552 = vld [vmem:[%s1 + $0xfa8] sm:$0xff]
    %v553 = vld [vmem:[%s1 + $0xfb0] sm:$0xff]
    %v554 = vld [vmem:[%s1 + $0xfb8] sm:$0xff]
    %v555 = vld [vmem:[%s1 + $0xfc0] sm:$0xff]
    %v556 = vld [vmem:[%s1 + $0xfc8] sm:$0xff]
    %v557 = vld [vmem:[%s1 + $0xfd0] sm:$0xff]
    %v558 = vld [vmem:[%s1 + $0xfd8] sm:$0xff]
    %v559 = vld [vmem:[%s1 + $0xfe0] sm:$0xff]
    %v560 = vld [vmem:[%s1 + $0xfe8] sm:$0xff]
    %v561 = vld [vmem:[%s1 + $0xff0] sm:$0xff]
    %v562 = vld [vmem:[%s1 + $0xff8] sm:$0xff]
    %v563 = vld [vmem:[%s1 + $0x1000] sm:$0xff]
    %v564 = vld [vmem:[%s1 + $0x1008] sm:$0xff]
    %v565 = vld [vmem:[%s1 + $0x1010] sm:$0xff]
    %v566 = vld [vmem:[%s1 + $0x1018] sm:$0xff]
    %v567 = vld [vmem:[%s1 + $0x1020] sm:$0xff]
    %v568 = vld [vmem:[%s1 + $0x1028] sm:$0xff]
    %v569 = vld [vmem:[%s1 + $0x1030] sm:$0xff]
    %v570 = vld [vmem:[%s1 + $0x1038] sm:$0xff]
    %v571 = vld [vmem:[%s1 + $0x1040] sm:$0xff]
    %v572 = vld [vmem:[%s1 + $0x1048] sm:$0xff]
    %v573 = vld [vmem:[%s1 + $0x1050] sm:$0xff]
    %v574 = vld [vmem:[%s1 + $0x1058] sm:$0xff]
    %v575 = vld [vmem:[%s1 + $0x1060] sm:$0xff]
    %v576 = vld [vmem:[%s1 + $0x1068] sm:$0xff]
    %v577 = vld [vmem:[%s1 + $0x1070] sm:$0xff]
    %v578 = vld [vmem:[%s1 + $0x1078] sm:$0xff]
    %v579 = vld [vmem:[%s1 + $0x1080] sm:$0xff]
    %v580 = vld [vmem:[%s1 + $0x1088] sm:$0xff]
    %v581 = vld [vmem:[%s1 + $0x1090] sm:$0xff]
    %v582 = vld [vmem:[%s1 + $0x1098] sm:$0xff]
    %v583 = vld [vmem:[%s1 + $0x10a0] sm:$0xff]
    %v584 = vld [vmem:[%s1 + $0x10a8] sm:$0xff]
    %v585 = vld [vmem:[%s1 + $0x10b0] sm:$0xff]
    %v586 = vld [vmem:[%s1 + $0x10b8] sm:$0xff]
    %v587 = vld [vmem:[%s1 + $0x10c0] sm:$0xff]
    %v588 = vld [vmem:[%s1 + $0x10c8] sm:$0xff]
    %v589 = vld [vmem:[%s1 + $0x10d0] sm:$0xff]
    %v590 = vld [vmem:[%s1 + $0x10d8] sm:$0xff]
    %v591 = vld [vmem:[%s1 + $0x10e0] sm:$0xff]
    %v592 = vld [vmem:[%s1 + $0x10e8] sm:$0xff]
    %v593 = vld [vmem:[%s1 + $0x10f0] sm:$0xff]
    %v594 = vld [vmem:[%s1 + $0x10f8] sm:$0xff]
    %v595 = vld [vmem:[%s1 + $0x1100] sm:$0xff]
    %v596 = vld [vmem:[%s1 + $0x1108] sm:$0xff]
    %v597 = vld [vmem:[%s1 + $0x1110] sm:$0xff]
    %v598 = vld [vmem:[%s1 + $0x1118] sm:$0xff]
    %v599 = vld [vmem:[%s1 + $0x1120] sm:$0xff]
    %v600 = vld [vmem:[%s1 + $0x1128] sm:$0xff]
    %v601 = vld [vmem:[%s1 + $0x1130] sm:$0xff]
    %v602 = vld [vmem:[%s1 + $0x1138] sm:$0xff]
    %v603 = vld [vmem:[%s1 + $0x1140] sm:$0xff]
    %v604 = vld [vmem:[%s1 + $0x1148] sm:$0xff]
    %v605 = vld [vmem:[%s1 + $0x1150] sm:$0xff]
    %v606 = vld [vmem:[%s1 + $0x1158] sm:$0xff]
    %v607 = vld [vmem:[%s1 + $0x1160] sm:$0xff]
    %v608 = vld [vmem:[%s1 + $0x1168] sm:$0xff]
    %v609 = vld [vmem:[%s1 + $0x1170] sm:$0xff]
    %v610 = vld [vmem:[%s1 + $0x1178] sm:$0xff]
    %v611 = vld [vmem:[%s1 + $0x1180] sm:$0xff]
    %v612 = vld [vmem:[%s1 + $0x1188] sm:$0xff]
    %v613 = vld [vmem:[%s1 + $0x1190] sm:$0xff]
    %v614 = vld [vmem:[%s1 + $0x1198] sm:$0xff]
    %v615 = vld [vmem:[%s1 + $0x11a0] sm:$0xff]
    %v616 = vld [vmem:[%s1 + $0x11a8] sm:$0xff]
    %v617 = vld [vmem:[%s1 + $0x11b0] sm:$0xff]
    %v618 = vld [vmem:[%s1 + $0x11b8] sm:$0xff]
    %v619 = vld [vmem:[%s1 + $0x11c0] sm:$0xff]
    %v620 = vld [vmem:[%s1 + $0x11c8] sm:$0xff]
    %v621 = vld [vmem:[%s1 + $0x11d0] sm:$0xff]
    %v622 = vld [vmem:[%s1 + $0x11d8] sm:$0xff]
    %v623 = vld [vmem:[%s1 + $0x11e0] sm:$0xff]
    %v624 = vld [vmem:[%s1 + $0x11e8] sm:$0xff]
    %v625 = vld [vmem:[%s1 + $0x11f0] sm:$0xff]
    %v626 = vld [vmem:[%s1 + $0x11f8] sm:$0xff]
    %v627 = vld [vmem:[%s1 + $0x1200] sm:$0xff]
    %v628 = vld [vmem:[%s1 + $0x1208] sm:$0xff]
    %v629 = vld [vmem:[%s1 + $0x1210] sm:$0xff]
    %v630 = vld [vmem:[%s1 + $0x1218] sm:$0xff]
    %v631 = vld [vmem:[%s1 + $0x1220] sm:$0xff]
    %v632 = vld [vmem:[%s1 + $0x1228] sm:$0xff]
    %v633 = vld [vmem:[%s1 + $0x1230] sm:$0xff]
    %v634 = vld [vmem:[%s1 + $0x1238] sm:$0xff]
    %v635 = vld [vmem:[%s1 + $0x1240] sm:$0xff]
    %v636 = vld [vmem:[%s1 + $0x1248] sm:$0xff]
    %v637 = vld [vmem:[%s1 + $0x1250] sm:$0xff]
    %v638 = vld [vmem:[%s1 + $0x1258] sm:$0xff]
    %v639 = vld [vmem:[%s1 + $0x1260] sm:$0xff]
    %v640 = vld [vmem:[%s1 + $0x1268] sm:$0xff]
    %v641 = vld [vmem:[%s1 + $0x1270] sm:$0xff]
    %v642 = vld [vmem:[%s1 + $0x1278] sm:$0xff]
    %v643 = vld [vmem:[%s1 + $0x1280] sm:$0xff]
    %v644 = vld [vmem:[%s1 + $0x1288] sm:$0xff]
    %v645 = vld [vmem:[%s1 + $0x1290] sm:$0xff]
    %v646 = vld [vmem:[%s1 + $0x1298] sm:$0xff]
    %v647 = vld [vmem:[%s1 + $0x12a0] sm:$0xff]
    %v648 = vld [vmem:[%s1 + $0x12a8] sm:$0xff]
    %v649 = vld [vmem:[%s1 + $0x12b0] sm:$0xff]
    %v650 = vld [vmem:[%s1 + $0x12b8] sm:$0xff]
    %v651 = vld [vmem:[%s1 + $0x12c0] sm:$0xff]
    %v652 = vld [vmem:[%s1 + $0x12c8] sm:$0xff]
    %v653 = vld [vmem:[%s1 + $0x12d0] sm:$0xff]
    %v654 = vld [vmem:[%s1 + $0x12d8] sm:$0xff]
    %v655 = vld [vmem:[%s1 + $0x12e0] sm:$0xff]
    %v656 = vld [vmem:[%s1 + $0x12e8] sm:$0xff]
    %v657 = vld [vmem:[%s1 + $0x12f0] sm:$0xff]
    %v658 = vld [vmem:[%s1 + $0x12f8] sm:$0xff]
    %v659 = vld [vmem:[%s1 + $0x1300] sm:$0xff]
    %v660 = vld [vmem:[%s1 + $0x1308] sm:$0xff]
    %v661 = vld [vmem:[%s1 + $0x1310] sm:$0xff]
    %v662 = vld [vmem:[%s1 + $0x1318] sm:$0xff]
    %v663 = vld [vmem:[%s1 + $0x1320] sm:$0xff]
    %v664 = vld [vmem:[%s1 + $0x1328] sm:$0xff]
    %v665 = vld [vmem:[%s1 + $0x1330] sm:$0xff]
    %v666 = vld [vmem:[%s1 + $0x1338] sm:$0xff]
    %v667 = vld [vmem:[%s1 + $0x1340] sm:$0xff]
    %v668 = vld [vmem:[%s1 + $0x1348] sm:$0xff]
    %v669 = vld [vmem:[%s1 + $0x1350] sm:$0xff]
    %v670 = vld [vmem:[%s1 + $0x1358] sm:$0xff]
    %v671 = vld [vmem:[%s1 + $0x1360] sm:$0xff]
    %v672 = vld [vmem:[%s1 + $0x1368] sm:$0xff]
    %v673 = vld [vmem:[%s1 + $0x1370] sm:$0xff]
    %v674 = vld [vmem:[%s1 + $0x1378] sm:$0xff]
    %v675 = vld [vmem:[%s1 + $0x1380] sm:$0xff]
    %v676 = vld [vmem:[%s1 + $0x1388] sm:$0xff]
    %v677 = vld [vmem:[%s1 + $0x1390] sm:$0xff]
    %v678 = vld [vmem:[%s1 + $0x1398] sm:$0xff]
    %v679 = vld [vmem:[%s1 + $0x13a0] sm:$0xff]
    %v680 = vld [vmem:[%s1 + $0x13a8] sm:$0xff]
    %v681 = vld [vmem:[%s1 + $0x13b0] sm:$0xff]
    %v682 = vld [vmem:[%s1 + $0x13b8] sm:$0xff]
    %v683 = vld [vmem:[%s1 + $0x13c0] sm:$0xff]
    %v684 = vld [vmem:[%s1 + $0x13c8] sm:$0xff]
    %v685 = vld [vmem:[%s1 + $0x13d0] sm:$0xff]
    %v686 = vld [vmem:[%s1 + $0x13d8] sm:$0xff]
    %v687 = vld [vmem:[%s1 + $0x13e0] sm:$0xff]
    %v688 = vld [vmem:[%s1 + $0x13e8] sm:$0xff]
    %v689 = vld [vmem:[%s1 + $0x13f0] sm:$0xff]
    %v690 = vld [vmem:[%s1 + $0x13f8] sm:$0xff]
    %v691 = vld [vmem:[%s1 + $0x1400] sm:$0xff]
    %v692 = vld [vmem:[%s1 + $0x1408] sm:$0xff]
    %v693 = vld [vmem:[%s1 + $0x1410] sm:$0xff]
    %v694 = vld [vmem:[%s1 + $0x1418] sm:$0xff]
    %v695 = vld [vmem:[%s1 + $0x1420] sm:$0xff]
    %v696 = vld [vmem:[%s1 + $0x1428] sm:$0xff]
    %v697 = vld [vmem:[%s1 + $0x1430] sm:$0xff]
    %v698 = vld [vmem:[%s1 + $0x1438] sm:$0xff]
    %v699 = vld [vmem:[%s1 + $0x1440] sm:$0xff]
    %v700 = vld [vmem:[%s1 + $0x1448] sm:$0xff]
    %v701 = vld [vmem:[%s1 + $0x1450] sm:$0xff]
    %v702 = vld [vmem:[%s1 + $0x1458] sm:$0xff]
    %v703 = vld [vmem:[%s1 + $0x1460] sm:$0xff]
    %v704 = vld [vmem:[%s1 + $0x1468] sm:$0xff]
    %v705 = vld [vmem:[%s1 + $0x1470] sm:$0xff]
    %v706 = vld [vmem:[%s1 + $0x1478] sm:$0xff]
    %v707 = vld [vmem:[%s1 + $0x1480] sm:$0xff]
    %v708 = vld [vmem:[%s1 + $0x1488] sm:$0xff]
    %v709 = vld [vmem:[%s1 + $0x1490] sm:$0xff]
    %v710 = vld [vmem:[%s1 + $0x1498] sm:$0xff]
    %v711 = vld [vmem:[%s1 + $0x14a0] sm:$0xff]
    %v712 = vld [vmem:[%s1 + $0x14a8] sm:$0xff]
    %v713 = vld [vmem:[%s1 + $0x14b0] sm:$0xff]
    %v714 = vld [vmem:[%s1 + $0x14b8] sm:$0xff]
    %v715 = vld [vmem:[%s1 + $0x14c0] sm:$0xff]
    %v716 = vld [vmem:[%s1 + $0x14c8] sm:$0xff]
    %v717 = vld [vmem:[%s1 + $0x14d0] sm:$0xff]
    %v718 = vld [vmem:[%s1 + $0x14d8] sm:$0xff]
    %v719 = vld [vmem:[%s1 + $0x14e0] sm:$0xff]
    %v720 = vld [vmem:[%s1 + $0x14e8] sm:$0xff]
    %v721 = vld [vmem:[%s1 + $0x14f0] sm:$0xff]
    %v722 = vld [vmem:[%s1 + $0x14f8] sm:$0xff]
    %v723 = vld [vmem:[%s1 + $0x1500] sm:$0xff]
    %v724 = vld [vmem:[%s1 + $0x1508] sm:$0xff]
    %v725 = vld [vmem:[%s1 + $0x1510] sm:$0xff]
    %v726 = vld [vmem:[%s1 + $0x1518] sm:$0xff]
    %v727 = vld [vmem:[%s1 + $0x1520] sm:$0xff]
    %v728 = vld [vmem:[%s1 + $0x1528] sm:$0xff]
    %v729 = vld [vmem:[%s1 + $0x1530] sm:$0xff]
    %v730 = vld [vmem:[%s1 + $0x1538] sm:$0xff]
    %v731 = vld [vmem:[%s1 + $0x1540] sm:$0xff]
    %v732 = vld [vmem:[%s1 + $0x1548] sm:$0xff]
    %v733 = vld [vmem:[%s1 + $0x1550] sm:$0xff]
    %v734 = vld [vmem:[%s1 + $0x1558] sm:$0xff]
    %v735 = vld [vmem:[%s1 + $0x1560] sm:$0xff]
    %v736 = vld [vmem:[%s1 + $0x1568] sm:$0xff]
    %v737 = vld [vmem:[%s1 + $0x1570] sm:$0xff]
    %v738 = vld [vmem:[%s1 + $0x1578] sm:$0xff]
    %v739 = vld [vmem:[%s1 + $0x1580] sm:$0xff]
    %v740 = vld [vmem:[%s1 + $0x1588] sm:$0xff]
    %v741 = vld [vmem:[%s1 + $0x1590] sm:$0xff]
    %v742 = vld [vmem:[%s1 + $0x1598] sm:$0xff]
    %v743 = vld [vmem:[%s1 + $0x15a0] sm:$0xff]
    %v744 = vld [vmem:[%s1 + $0x15a8] sm:$0xff]
    %v745 = vld [vmem:[%s1 + $0x15b0] sm:$0xff]
    %v746 = vld [vmem:[%s1 + $0x15b8] sm:$0xff]
    %v747 = vld [vmem:[%s1 + $0x15c0] sm:$0xff]
    %v748 = vld [vmem:[%s1 + $0x15c8] sm:$0xff]
    %v749 = vld [vmem:[%s1 + $0x15d0] sm:$0xff]
    %v750 = vld [vmem:[%s1 + $0x15d8] sm:$0xff]
    %v751 = vld [vmem:[%s1 + $0x15e0] sm:$0xff]
    %v752 = vld [vmem:[%s1 + $0x15e8] sm:$0xff]
    %v753 = vld [vmem:[%s1 + $0x15f0] sm:$0xff]
    %v754 = vld [vmem:[%s1 + $0x15f8] sm:$0xff]
    %v755 = vld [vmem:[%s1 + $0x1600] sm:$0xff]
    %v756 = vld [vmem:[%s1 + $0x1608] sm:$0xff]
    %v757 = vld [vmem:[%s1 + $0x1610] sm:$0xff]
    %v758 = vld [vmem:[%s1 + $0x1618] sm:$0xff]
    %v759 = vld [vmem:[%s1 + $0x1620] sm:$0xff]
    %v760 = vld [vmem:[%s1 + $0x1628] sm:$0xff]
    %v761 = vld [vmem:[%s1 + $0x1630] sm:$0xff]
    %v762 = vld [vmem:[%s1 + $0x1638] sm:$0xff]
    %v763 = vld [vmem:[%s1 + $0x1640] sm:$0xff]
    %v764 = vld [vmem:[%s1 + $0x1648] sm:$0xff]
    %v765 = vld [vmem:[%s1 + $0x1650] sm:$0xff]
    %v766 = vld [vmem:[%s1 + $0x1658] sm:$0xff]
    %v767 = vld [vmem:[%s1 + $0x1660] sm:$0xff]
    %v768 = vld [vmem:[%s1 + $0x1668] sm:$0xff]
    %v769 = vld [vmem:[%s1 + $0x1670] sm:$0xff]
    %v770 = vld [vmem:[%s1 + $0x1678] sm:$0xff]
    %v771 = vld [vmem:[%s1 + $0x1680] sm:$0xff]
    %v772 = vld [vmem:[%s1 + $0x1688] sm:$0xff]
    %v773 = vld [vmem:[%s1 + $0x1690] sm:$0xff]
    %v774 = vld [vmem:[%s1 + $0x1698] sm:$0xff]
    %v775 = vld [vmem:[%s1 + $0x16a0] sm:$0xff]
    %v776 = vld [vmem:[%s1 + $0x16a8] sm:$0xff]
    %v777 = vld [vmem:[%s1 + $0x16b0] sm:$0xff]
    %v778 = vld [vmem:[%s1 + $0x16b8] sm:$0xff]
    %v779 = vld [vmem:[%s1 + $0x16c0] sm:$0xff]
    %v780 = vld [vmem:[%s1 + $0x16c8] sm:$0xff]
    %v781 = vld [vmem:[%s1 + $0x16d0] sm:$0xff]
    %v782 = vld [vmem:[%s1 + $0x16d8] sm:$0xff]
    %v783 = vld [vmem:[%s1 + $0x16e0] sm:$0xff]
    %v784 = vld [vmem:[%s1 + $0x16e8] sm:$0xff]
    %v785 = vld [vmem:[%s1 + $0x16f0] sm:$0xff]
    %v786 = vld [vmem:[%s1 + $0x16f8] sm:$0xff]
    %v787 = vld [vmem:[%s1 + $0x1700] sm:$0xff]
    %v788 = vld [vmem:[%s1 + $0x1708] sm:$0xff]
    %v789 = vld [vmem:[%s1 + $0x1710] sm:$0xff]
    %v790 = vld [vmem:[%s1 + $0x1718] sm:$0xff]
    %v791 = vld [vmem:[%s1 + $0x1720] sm:$0xff]
    %v792 = vld [vmem:[%s1 + $0x1728] sm:$0xff]
    %v793 = vld [vmem:[%s1 + $0x1730] sm:$0xff]
    %v794 = vld [vmem:[%s1 + $0x1738] sm:$0xff]
    %v795 = vld [vmem:[%s1 + $0x1740] sm:$0xff]
    %v796 = vld [vmem:[%s1 + $0x1748] sm:$0xff]
    %v797 = vld [vmem:[%s1 + $0x1750] sm:$0xff]
    %v798 = vld [vmem:[%s1 + $0x1758] sm:$0xff]
    %v799 = vld [vmem:[%s1 + $0x1760] sm:$0xff]
    %v800 = vld [vmem:[%s1 + $0x1768] sm:$0xff]
    %v801 = vld [vmem:[%s1 + $0x1770] sm:$0xff]
    %v802 = vld [vmem:[%s1 + $0x1778] sm:$0xff]
    %v803 = vld [vmem:[%s1 + $0x1780] sm:$0xff]
    %v804 = vld [vmem:[%s1 + $0x1788] sm:$0xff]
    %v805 = vld [vmem:[%s1 + $0x1790] sm:$0xff]
    %v806 = vld [vmem:[%s1 + $0x1798] sm:$0xff]
    %v807 = vld [vmem:[%s1 + $0x17a0] sm:$0xff]
    %v808 = vld [vmem:[%s1 + $0x17a8] sm:$0xff]
    %v809 = vld [vmem:[%s1 + $0x17b0] sm:$0xff]
    %v810 = vld [vmem:[%s1 + $0x17b8] sm:$0xff]
    %v811 = vld [vmem:[%s1 + $0x17c0] sm:$0xff]
    %v812 = vld [vmem:[%s1 + $0x17c8] sm:$0xff]
    %v813 = vld [vmem:[%s1 + $0x17d0] sm:$0xff]
    %v814 = vld [vmem:[%s1 + $0x17d8] sm:$0xff]
    %v815 = vld [vmem:[%s1 + $0x17e0] sm:$0xff]
    %v816 = vld [vmem:[%s1 + $0x17e8] sm:$0xff]
    %v817 = vld [vmem:[%s1 + $0x17f0] sm:$0xff]
    %v818 = vld [vmem:[%s1 + $0x17f8] sm:$0xff]
    %v819 = vld [vmem:[%s1 + $0x1800] sm:$0xff]
    %v820 = vld [vmem:[%s1 + $0x1808] sm:$0xff]
    %v821 = vld [vmem:[%s1 + $0x1810] sm:$0xff]
    %v822 = vld [vmem:[%s1 + $0x1818] sm:$0xff]
    %v823 = vld [vmem:[%s1 + $0x1820] sm:$0xff]
    %v824 = vld [vmem:[%s1 + $0x1828] sm:$0xff]
    %v825 = vld [vmem:[%s1 + $0x1830] sm:$0xff]
    %v826 = vld [vmem:[%s1 + $0x1838] sm:$0xff]
    %v827 = vld [vmem:[%s1 + $0x1840] sm:$0xff]
    %v828 = vld [vmem:[%s1 + $0x1848] sm:$0xff]
    %v829 = vld [vmem:[%s1 + $0x1850] sm:$0xff]
    %v830 = vld [vmem:[%s1 + $0x1858] sm:$0xff]
    %v831 = vld [vmem:[%s1 + $0x1860] sm:$0xff]
    %v832 = vld [vmem:[%s1 + $0x1868] sm:$0xff]
    %v833 = vld [vmem:[%s1 + $0x1870] sm:$0xff]
    %v834 = vld [vmem:[%s1 + $0x1878] sm:$0xff]
    %v835 = vld [vmem:[%s1 + $0x1880] sm:$0xff]
    %v836 = vld [vmem:[%s1 + $0x1888] sm:$0xff]
    %v837 = vld [vmem:[%s1 + $0x1890] sm:$0xff]
    %v838 = vld [vmem:[%s1 + $0x1898] sm:$0xff]
    %v839 = vld [vmem:[%s1 + $0x18a0] sm:$0xff]
    %v840 = vld [vmem:[%s1 + $0x18a8] sm:$0xff]
    %v841 = vld [vmem:[%s1 + $0x18b0] sm:$0xff]
    %v842 = vld [vmem:[%s1 + $0x18b8] sm:$0xff]
    %v843 = vld [vmem:[%s1 + $0x18c0] sm:$0xff]
    %v844 = vld [vmem:[%s1 + $0x18c8] sm:$0xff]
    %v845 = vld [vmem:[%s1 + $0x18d0] sm:$0xff]
    %v846 = vld [vmem:[%s1 + $0x18d8] sm:$0xff]
    %v847 = vld [vmem:[%s1 + $0x18e0] sm:$0xff]
    %v848 = vld [vmem:[%s1 + $0x18e8] sm:$0xff]
    %v849 = vld [vmem:[%s1 + $0x18f0] sm:$0xff]
    %v850 = vld [vmem:[%s1 + $0x18f8] sm:$0xff]
    %v851 = vld [vmem:[%s1 + $0x1900] sm:$0xff]
    %v852 = vld [vmem:[%s1 + $0x1908] sm:$0xff]
    %v853 = vld [vmem:[%s1 + $0x1910] sm:$0xff]
    %v854 = vld [vmem:[%s1 + $0x1918] sm:$0xff]
    %v855 = vld [vmem:[%s1 + $0x1920] sm:$0xff]
    %v856 = vld [vmem:[%s1 + $0x1928] sm:$0xff]
    %v857 = vld [vmem:[%s1 + $0x1930] sm:$0xff]
    %v858 = vld [vmem:[%s1 + $0x1938] sm:$0xff]
    %v859 = vld [vmem:[%s1 + $0x1940] sm:$0xff]
    %v860 = vld [vmem:[%s1 + $0x1948] sm:$0xff]
    %v861 = vld [vmem:[%s1 + $0x1950] sm:$0xff]
    %v862 = vld [vmem:[%s1 + $0x1958] sm:$0xff]
    %v863 = vld [vmem:[%s1 + $0x1960] sm:$0xff]
    %v864 = vld [vmem:[%s1 + $0x1968] sm:$0xff]
    %v865 = vld [vmem:[%s1 + $0x1970] sm:$0xff]
    %v866 = vld [vmem:[%s1 + $0x1978] sm:$0xff]
    %v867 = vld [vmem:[%s1 + $0x1980] sm:$0xff]
    %v868 = vld [vmem:[%s1 + $0x1988] sm:$0xff]
    %v869 = vld [vmem:[%s1 + $0x1990] sm:$0xff]
    %v870 = vld [vmem:[%s1 + $0x1998] sm:$0xff]
    %v871 = vld [vmem:[%s1 + $0x19a0] sm:$0xff]
    %v872 = vld [vmem:[%s1 + $0x19a8] sm:$0xff]
    %v873 = vld [vmem:[%s1 + $0x19b0] sm:$0xff]
    %v874 = vld [vmem:[%s1 + $0x19b8] sm:$0xff]
    %v875 = vld [vmem:[%s1 + $0x19c0] sm:$0xff]
    %v876 = vld [vmem:[%s1 + $0x19c8] sm:$0xff]
    %v877 = vld [vmem:[%s1 + $0x19d0] sm:$0xff]
    %v878 = vld [vmem:[%s1 + $0x19d8] sm:$0xff]
    %v879 = vld [vmem:[%s1 + $0x19e0] sm:$0xff]
    %v880 = vld [vmem:[%s1 + $0x19e8] sm:$0xff]
    %v881 = vld [vmem:[%s1 + $0x19f0] sm:$0xff]
    %v882 = vld [vmem:[%s1 + $0x19f8] sm:$0xff]
    %v883 = vld [vmem:[%s1 + $0x1a00] sm:$0xff]
    %v884 = vld [vmem:[%s1 + $0x1a08] sm:$0xff]
    %v885 = vld [vmem:[%s1 + $0x1a10] sm:$0xff]
    %v886 = vld [vmem:[%s1 + $0x1a18] sm:$0xff]
    %v887 = vld [vmem:[%s1 + $0x1a20] sm:$0xff]
    %v888 = vld [vmem:[%s1 + $0x1a28] sm:$0xff]
    %v889 = vld [vmem:[%s1 + $0x1a30] sm:$0xff]
    %v890 = vld [vmem:[%s1 + $0x1a38] sm:$0xff]
    %v891 = vld [vmem:[%s1 + $0x1a40] sm:$0xff]
    %v892 = vld [vmem:[%s1 + $0x1a48] sm:$0xff]
    %v893 = vld [vmem:[%s1 + $0x1a50] sm:$0xff]
    %v894 = vld [vmem:[%s1 + $0x1a58] sm:$0xff]
    %v895 = vld [vmem:[%s1 + $0x1a60] sm:$0xff]
    %v896 = vld [vmem:[%s1 + $0x1a68] sm:$0xff]
    %v897 = vld [vmem:[%s1 + $0x1a70] sm:$0xff]
    %v898 = vld [vmem:[%s1 + $0x1a78] sm:$0xff]
    %v899 = vld [vmem:[%s1 + $0x1a80] sm:$0xff]
    %v900 = vld [vmem:[%s1 + $0x1a88] sm:$0xff]
    %v901 = vld [vmem:[%s1 + $0x1a90] sm:$0xff]
    %v902 = vld [vmem:[%s1 + $0x1a98] sm:$0xff]
    %v903 = vld [vmem:[%s1 + $0x1aa0] sm:$0xff]
    %v904 = vld [vmem:[%s1 + $0x1aa8] sm:$0xff]
    %v905 = vld [vmem:[%s1 + $0x1ab0] sm:$0xff]
    %v906 = vld [vmem:[%s1 + $0x1ab8] sm:$0xff]
    %v907 = vld [vmem:[%s1 + $0x1ac0] sm:$0xff]
    %v908 = vld [vmem:[%s1 + $0x1ac8] sm:$0xff]
    %v909 = vld [vmem:[%s1 + $0x1ad0] sm:$0xff]
    %v910 = vld [vmem:[%s1 + $0x1ad8] sm:$0xff]
    %v911 = vld [vmem:[%s1 + $0x1ae0] sm:$0xff]
    %v912 = vld [vmem:[%s1 + $0x1ae8] sm:$0xff]
    %v913 = vld [vmem:[%s1 + $0x1af0] sm:$0xff]
    %v914 = vld [vmem:[%s1 + $0x1af8] sm:$0xff]
    %v915 = vld [vmem:[%s1 + $0x1b00] sm:$0xff]
    %v916 = vld [vmem:[%s1 + $0x1b08] sm:$0xff]
    %v917 = vld [vmem:[%s1 + $0x1b10] sm:$0xff]
    %v918 = vld [vmem:[%s1 + $0x1b18] sm:$0xff]
    %v919 = vld [vmem:[%s1 + $0x1b20] sm:$0xff]
    %v920 = vld [vmem:[%s1 + $0x1b28] sm:$0xff]
    %v921 = vld [vmem:[%s1 + $0x1b30] sm:$0xff]
    %v922 = vld [vmem:[%s1 + $0x1b38] sm:$0xff]
    %v923 = vld [vmem:[%s1 + $0x1b40] sm:$0xff]
    %v924 = vld [vmem:[%s1 + $0x1b48] sm:$0xff]
    %v925 = vld [vmem:[%s1 + $0x1b50] sm:$0xff]
    %v926 = vld [vmem:[%s1 + $0x1b58] sm:$0xff]
    %v927 = vld [vmem:[%s1 + $0x1b60] sm:$0xff]
    %v928 = vld [vmem:[%s1 + $0x1b68] sm:$0xff]
    %v929 = vld [vmem:[%s1 + $0x1b70] sm:$0xff]
    %v930 = vld [vmem:[%s1 + $0x1b78] sm:$0xff]
    %v931 = vld [vmem:[%s1 + $0x1b80] sm:$0xff]
    %v932 = vld [vmem:[%s1 + $0x1b88] sm:$0xff]
    %v933 = vld [vmem:[%s1 + $0x1b90] sm:$0xff]
    %v934 = vld [vmem:[%s1 + $0x1b98] sm:$0xff]
    %v935 = vld [vmem:[%s1 + $0x1ba0] sm:$0xff]
    %v936 = vld [vmem:[%s1 + $0x1ba8] sm:$0xff]
    %v937 = vld [vmem:[%s1 + $0x1bb0] sm:$0xff]
    %v938 = vld [vmem:[%s1 + $0x1bb8] sm:$0xff]
    %v939 = vld [vmem:[%s1 + $0x1bc0] sm:$0xff]
    %v940 = vld [vmem:[%s1 + $0x1bc8] sm:$0xff]
    %v941 = vld [vmem:[%s1 + $0x1bd0] sm:$0xff]
    %v942 = vld [vmem:[%s1 + $0x1bd8] sm:$0xff]
    %v943 = vld [vmem:[%s1 + $0x1be0] sm:$0xff]
    %v944 = vld [vmem:[%s1 + $0x1be8] sm:$0xff]
    %v945 = vld [vmem:[%s1 + $0x1bf0] sm:$0xff]
    %v946 = vld [vmem:[%s1 + $0x1bf8] sm:$0xff]
    %v947 = vld [vmem:[%s1 + $0x1c00] sm:$0xff]
    %v948 = vld [vmem:[%s1 + $0x1c08] sm:$0xff]
    %v949 = vld [vmem:[%s1 + $0x1c10] sm:$0xff]
    %v950 = vld [vmem:[%s1 + $0x1c18] sm:$0xff]
    %v951 = vld [vmem:[%s1 + $0x1c20] sm:$0xff]
    %v952 = vld [vmem:[%s1 + $0x1c28] sm:$0xff]
    %v953 = vld [vmem:[%s1 + $0x1c30] sm:$0xff]
    %v954 = vld [vmem:[%s1 + $0x1c38] sm:$0xff]
    %v955 = vld [vmem:[%s1 + $0x1c40] sm:$0xff]
    %v956 = vld [vmem:[%s1 + $0x1c48] sm:$0xff]
    %v957 = vld [vmem:[%s1 + $0x1c50] sm:$0xff]
    %v958 = vld [vmem:[%s1 + $0x1c58] sm:$0xff]
    %v959 = vld [vmem:[%s1 + $0x1c60] sm:$0xff]
    %v960 = vld [vmem:[%s1 + $0x1c68] sm:$0xff]
    %v961 = vld [vmem:[%s1 + $0x1c70] sm:$0xff]
    %v962 = vld [vmem:[%s1 + $0x1c78] sm:$0xff]
    %v963 = vld [vmem:[%s1 + $0x1c80] sm:$0xff]
    %v964 = vld [vmem:[%s1 + $0x1c88] sm:$0xff]
    %v965 = vld [vmem:[%s1 + $0x1c90] sm:$0xff]
    %v966 = vld [vmem:[%s1 + $0x1c98] sm:$0xff]
    %v967 = vld [vmem:[%s1 + $0x1ca0] sm:$0xff]
    %v968 = vld [vmem:[%s1 + $0x1ca8] sm:$0xff]
    %v969 = vld [vmem:[%s1 + $0x1cb0] sm:$0xff]
    %v970 = vld [vmem:[%s1 + $0x1cb8] sm:$0xff]
    %v971 = vld [vmem:[%s1 + $0x1cc0] sm:$0xff]
    %v972 = vld [vmem:[%s1 + $0x1cc8] sm:$0xff]
    %v973 = vld [vmem:[%s1 + $0x1cd0] sm:$0xff]
    %v974 = vld [vmem:[%s1 + $0x1cd8] sm:$0xff]
    %v975 = vld [vmem:[%s1 + $0x1ce0] sm:$0xff]
    %v976 = vld [vmem:[%s1 + $0x1ce8] sm:$0xff]
    %v977 = vld [vmem:[%s1 + $0x1cf0] sm:$0xff]
    %v978 = vld [vmem:[%s1 + $0x1cf8] sm:$0xff]
    %v979 = vld [vmem:[%s1 + $0x1d00] sm:$0xff]
    %v980 = vld [vmem:[%s1 + $0x1d08] sm:$0xff]
    %v981 = vld [vmem:[%s1 + $0x1d10] sm:$0xff]
    %v982 = vld [vmem:[%s1 + $0x1d18] sm:$0xff]
    %v983 = vld [vmem:[%s1 + $0x1d20] sm:$0xff]
    %v984 = vld [vmem:[%s1 + $0x1d28] sm:$0xff]
    %v985 = vld [vmem:[%s1 + $0x1d30] sm:$0xff]
    %v986 = vld [vmem:[%s1 + $0x1d38] sm:$0xff]
    %v987 = vld [vmem:[%s1 + $0x1d40] sm:$0xff]
    %v988 = vld [vmem:[%s1 + $0x1d48] sm:$0xff]
    %v989 = vld [vmem:[%s1 + $0x1d50] sm:$0xff]
    %v990 = vld [vmem:[%s1 + $0x1d58] sm:$0xff]
    %v991 = vld [vmem:[%s1 + $0x1d60] sm:$0xff]
    %v992 = vld [vmem:[%s1 + $0x1d68] sm:$0xff]
    %v993 = vld [vmem:[%s1 + $0x1d70] sm:$0xff]
    %v994 = vld [vmem:[%s1 + $0x1d78] sm:$0xff]
    %v995 = vld [vmem:[%s1 + $0x1d80] sm:$0xff]
    %v996 = vld [vmem:[%s1 + $0x1d88] sm:$0xff]
    %v997 = vld [vmem:[%s1 + $0x1d90] sm:$0xff]
    %v998 = vld [vmem:[%s1 + $0x1d98] sm:$0xff]
    %v999 = vld [vmem:[%s1 + $0x1da0] sm:$0xff]
    %v1000 = vld [vmem:[%s1 + $0x1da8] sm:$0xff]
    %v1001 = vld [vmem:[%s1 + $0x1db0] sm:$0xff]
    %v1002 = vld [vmem:[%s1 + $0x1db8] sm:$0xff]
    %v1003 = vld [vmem:[%s1 + $0x1dc0] sm:$0xff]
    %v1004 = vld [vmem:[%s1 + $0x1dc8] sm:$0xff]
    %v1005 = vld [vmem:[%s1 + $0x1dd0] sm:$0xff]
    %v1006 = vld [vmem:[%s1 + $0x1dd8] sm:$0xff]
    %v1007 = vld [vmem:[%s1 + $0x1de0] sm:$0xff]
    %v1008 = vld [vmem:[%s1 + $0x1de8] sm:$0xff]
    %v1009 = vld [vmem:[%s1 + $0x1df0] sm:$0xff]
    %v1010 = vld [vmem:[%s1 + $0x1df8] sm:$0xff]
    %v1011 = vld [vmem:[%s1 + $0x1e00] sm:$0xff]
    %v1012 = vld [vmem:[%s1 + $0x1e08] sm:$0xff]
    %v1013 = vld [vmem:[%s1 + $0x1e10] sm:$0xff]
    %v1014 = vld [vmem:[%s1 + $0x1e18] sm:$0xff]
    %v1015 = vld [vmem:[%s1 + $0x1e20] sm:$0xff]
    %v1016 = vld [vmem:[%s1 + $0x1e28] sm:$0xff]
    %v1017 = vld [vmem:[%s1 + $0x1e30] sm:$0xff]
    %v1018 = vld [vmem:[%s1 + $0x1e38] sm:$0xff]
    %v1019 = vld [vmem:[%s1 + $0x1e40] sm:$0xff]
    %v1020 = vld [vmem:[%s1 + $0x1e48] sm:$0xff]
    %v1021 = vld [vmem:[%s1 + $0x1e50] sm:$0xff]
    %v1022 = vld [vmem:[%s1 + $0x1e58] sm:$0xff]
    %v1023 = vld [vmem:[%s1 + $0x1e60] sm:$0xff]
    %v1024 = vld [vmem:[%s1 + $0x1e68] sm:$0xff]
    %v1025 = vld [vmem:[%s1 + $0x1e70] sm:$0xff]
    %v1026 = vld [vmem:[%s1 + $0x1e78] sm:$0xff]
    %v1027 = vld [vmem:[%s1 + $0x1e80] sm:$0xff]
    %v1028 = vld [vmem:[%s1 + $0x1e88] sm:$0xff]
    %v1029 = vld [vmem:[%s1 + $0x1e90] sm:$0xff]
    %v1030 = vld [vmem:[%s1 + $0x1e98] sm:$0xff]
    %v1031 = vld [vmem:[%s1 + $0x1ea0] sm:$0xff]
    %v1032 = vld [vmem:[%s1 + $0x1ea8] sm:$0xff]
    %v1033 = vld [vmem:[%s1 + $0x1eb0] sm:$0xff]
    %v1034 = vld [vmem:[%s1 + $0x1eb8] sm:$0xff]
    %v1035 = vld [vmem:[%s1 + $0x1ec0] sm:$0xff]
    %v1036 = vld [vmem:[%s1 + $0x1ec8] sm:$0xff]
    %v1037 = vld [vmem:[%s1 + $0x1ed0] sm:$0xff]
    %v1038 = vld [vmem:[%s1 + $0x1ed8] sm:$0xff]
    %v1039 = vld [vmem:[%s1 + $0x1ee0] sm:$0xff]
    %v1040 = vld [vmem:[%s1 + $0x1ee8] sm:$0xff]
    %v1041 = vld [vmem:[%s1 + $0x1ef0] sm:$0xff]
    %v1042 = vld [vmem:[%s1 + $0x1ef8] sm:$0xff]
    %v1043 = vld [vmem:[%s1 + $0x1f00] sm:$0xff]
    %v1044 = vld [vmem:[%s1 + $0x1f08] sm:$0xff]
    %v1045 = vld [vmem:[%s1 + $0x1f10] sm:$0xff]
    %v1046 = vld [vmem:[%s1 + $0x1f18] sm:$0xff]
    %v1047 = vld [vmem:[%s1 + $0x1f20] sm:$0xff]
    %v1048 = vld [vmem:[%s1 + $0x1f28] sm:$0xff]
    %v1049 = vld [vmem:[%s1 + $0x1f30] sm:$0xff]
    %v1050 = vld [vmem:[%s1 + $0x1f38] sm:$0xff]
    %v1051 = vld [vmem:[%s1 + $0x1f40] sm:$0xff]
    %v1052 = vld [vmem:[%s1 + $0x1f48] sm:$0xff]
    %v1053 = vld [vmem:[%s1 + $0x1f50] sm:$0xff]
    %v1054 = vld [vmem:[%s1 + $0x1f58] sm:$0xff]
    %v1055 = vld [vmem:[%s1 + $0x1f60] sm:$0xff]
    %v1056 = vld [vmem:[%s1 + $0x1f68] sm:$0xff]
    %v1057 = vld [vmem:[%s1 + $0x1f70] sm:$0xff]
    %v1058 = vld [vmem:[%s1 + $0x1f78] sm:$0xff]
    %v1059 = vld [vmem:[%s1 + $0x1f80] sm:$0xff]
    %v1060 = vld [vmem:[%s1 + $0x1f88] sm:$0xff]
    %v1061 = vld [vmem:[%s1 + $0x1f90] sm:$0xff]
    %v1062 = vld [vmem:[%s1 + $0x1f98] sm:$0xff]
    %v1063 = vld [vmem:[%s1 + $0x1fa0] sm:$0xff]
    %v1064 = vld [vmem:[%s1 + $0x1fa8] sm:$0xff]
    %v1065 = vld [vmem:[%s1 + $0x1fb0] sm:$0xff]
    %v1066 = vld [vmem:[%s1 + $0x1fb8] sm:$0xff]
    %v1067 = vld [vmem:[%s1 + $0x1fc0] sm:$0xff]
    %v1068 = vld [vmem:[%s1 + $0x1fc8] sm:$0xff]
    %v1069 = vld [vmem:[%s1 + $0x1fd0] sm:$0xff]
    %v1070 = vld [vmem:[%s1 + $0x1fd8] sm:$0xff]
    %v1071 = vld [vmem:[%s1 + $0x1fe0] sm:$0xff]
    %v1072 = vld [vmem:[%s1 + $0x1fe8] sm:$0xff]
    %v1073 = vld [vmem:[%s1 + $0x1ff0] sm:$0xff]
    %v1074 = vld [vmem:[%s1 + $0x1ff8] sm:$0xff]
    %v1075 = vld [vmem:[%s1 + $0x2000] sm:$0xff]
    %v1076 = vld [vmem:[%s1 + $0x2008] sm:$0xff]
    %v1077 = vld [vmem:[%s1 + $0x2010] sm:$0xff]
    %v1078 = vld [vmem:[%s1 + $0x2018] sm:$0xff]
    %v1079 = vld [vmem:[%s1 + $0x2020] sm:$0xff]
    %v1080 = vld [vmem:[%s1 + $0x2028] sm:$0xff]
    %v1081 = vld [vmem:[%s1 + $0x2030] sm:$0xff]
    %v1082 = vld [vmem:[%s1 + $0x2038] sm:$0xff]
    %v1083 = vld [vmem:[%s1 + $0x2040] sm:$0xff]
    %v1084 = vld [vmem:[%s1 + $0x2048] sm:$0xff]
    %v1085 = vld [vmem:[%s1 + $0x2050] sm:$0xff]
    %v1086 = vld [vmem:[%s1 + $0x2058] sm:$0xff]
    %v1087 = vld [vmem:[%s1 + $0x2060] sm:$0xff]
    %v1088 = vld [vmem:[%s1 + $0x2068] sm:$0xff]
    %v1089 = vld [vmem:[%s1 + $0x2070] sm:$0xff]
    %v1090 = vld [vmem:[%s1 + $0x2078] sm:$0xff]
    %v1091 = vld [vmem:[%s1 + $0x2080] sm:$0xff]
    %v1092 = vld [vmem:[%s1 + $0x2088] sm:$0xff]
    %v1093 = vld [vmem:[%s1 + $0x2090] sm:$0xff]
    %v1094 = vld [vmem:[%s1 + $0x2098] sm:$0xff]
    %v1095 = vld [vmem:[%s1 + $0x20a0] sm:$0xff]
    %v1096 = vld [vmem:[%s1 + $0x20a8] sm:$0xff]
    %v1097 = vld [vmem:[%s1 + $0x20b0] sm:$0xff]
    %v1098 = vld [vmem:[%s1 + $0x20b8] sm:$0xff]
    %v1099 = vld [vmem:[%s1 + $0x20c0] sm:$0xff]
    %v1100 = vld [vmem:[%s1 + $0x20c8] sm:$0xff]
    %v1101 = vld [vmem:[%s1 + $0x20d0] sm:$0xff]
    %v1102 = vld [vmem:[%s1 + $0x20d8] sm:$0xff]
    %v1103 = vld [vmem:[%s1 + $0x20e0] sm:$0xff]
    %v1104 = vld [vmem:[%s1 + $0x20e8] sm:$0xff]
    %v1105 = vld [vmem:[%s1 + $0x20f0] sm:$0xff]
    %v1106 = vld [vmem:[%s1 + $0x20f8] sm:$0xff]
    %v1107 = vld [vmem:[%s1 + $0x2100] sm:$0xff]
    %v1108 = vld [vmem:[%s1 + $0x2108] sm:$0xff]
    %v1109 = vld [vmem:[%s1 + $0x2110] sm:$0xff]
    %v1110 = vld [vmem:[%s1 + $0x2118] sm:$0xff]
    %v1111 = vld [vmem:[%s1 + $0x2120] sm:$0xff]
    %v1112 = vld [vmem:[%s1 + $0x2128] sm:$0xff]
    %v1113 = vld [vmem:[%s1 + $0x2130] sm:$0xff]
    %v1114 = vld [vmem:[%s1 + $0x2138] sm:$0xff]
    %v1115 = vld [vmem:[%s1 + $0x2140] sm:$0xff]
    %v1116 = vld [vmem:[%s1 + $0x2148] sm:$0xff]
    %v1117 = vld [vmem:[%s1 + $0x2150] sm:$0xff]
    %v1118 = vld [vmem:[%s1 + $0x2158] sm:$0xff]
    %v1119 = vld [vmem:[%s1 + $0x2160] sm:$0xff]
    %v1120 = vld [vmem:[%s1 + $0x2168] sm:$0xff]
    %v1121 = vld [vmem:[%s1 + $0x2170] sm:$0xff]
    %v1122 = vld [vmem:[%s1 + $0x2178] sm:$0xff]
    %v1123 = vld [vmem:[%s1 + $0x2180] sm:$0xff]
    %v1124 = vld [vmem:[%s1 + $0x2188] sm:$0xff]
    %v1125 = vld [vmem:[%s1 + $0x2190] sm:$0xff]
    %v1126 = vld [vmem:[%s1 + $0x2198] sm:$0xff]
    %v1127 = vld [vmem:[%s1 + $0x21a0] sm:$0xff]
    %v1128 = vld [vmem:[%s1 + $0x21a8] sm:$0xff]
    %v1129 = vld [vmem:[%s1 + $0x21b0] sm:$0xff]
    %v1130 = vld [vmem:[%s1 + $0x21b8] sm:$0xff]
    %v1131 = vld [vmem:[%s1 + $0x21c0] sm:$0xff]
    %v1132 = vld [vmem:[%s1 + $0x21c8] sm:$0xff]
    %v1133 = vld [vmem:[%s1 + $0x21d0] sm:$0xff]
    %v1134 = vld [vmem:[%s1 + $0x21d8] sm:$0xff]
    %v1135 = vld [vmem:[%s1 + $0x21e0] sm:$0xff]
    %v1136 = vld [vmem:[%s1 + $0x21e8] sm:$0xff]
    %v1137 = vld [vmem:[%s1 + $0x21f0] sm:$0xff]
    %v1138 = vld [vmem:[%s1 + $0x21f8] sm:$0xff]
    %v1139 = vld [vmem:[%s1 + $0x2200] sm:$0xff]
    %v1140 = vld [vmem:[%s1 + $0x2208] sm:$0xff]
    %v1141 = vld [vmem:[%s1 + $0x2210] sm:$0xff]
    %v1142 = vld [vmem:[%s1 + $0x2218] sm:$0xff]
    %v1143 = vld [vmem:[%s1 + $0x2220] sm:$0xff]
    %v1144 = vld [vmem:[%s1 + $0x2228] sm:$0xff]
    %v1145 = vld [vmem:[%s1 + $0x2230] sm:$0xff]
    %v1146 = vld [vmem:[%s1 + $0x2238] sm:$0xff]
    %v1147 = vld [vmem:[%s1 + $0x2240] sm:$0xff]
    %v1148 = vld [vmem:[%s1 + $0x2248] sm:$0xff]
    %v1149 = vld [vmem:[%s1 + $0x2250] sm:$0xff]
    %v1150 = vld [vmem:[%s1 + $0x2258] sm:$0xff]
    %v1151 = vld [vmem:[%s1 + $0x2260] sm:$0xff]
    %v1152 = vld [vmem:[%s1 + $0x2268] sm:$0xff]
    %v1153 = vld [vmem:[%s1 + $0x2270] sm:$0xff]
    %v1154 = vld [vmem:[%s1 + $0x2278] sm:$0xff]
    %v1155 = vld [vmem:[%s1 + $0x2280] sm:$0xff]
    %v1156 = vld [vmem:[%s1 + $0x2288] sm:$0xff]
    %v1157 = vld [vmem:[%s1 + $0x2290] sm:$0xff]
    %v1158 = vld [vmem:[%s1 + $0x2298] sm:$0xff]
    %v1159 = vld [vmem:[%s1 + $0x22a0] sm:$0xff]
    %v1160 = vld [vmem:[%s1 + $0x22a8] sm:$0xff]
    %v1161 = vld [vmem:[%s1 + $0x22b0] sm:$0xff]
    %v1162 = vld [vmem:[%s1 + $0x22b8] sm:$0xff]
    %v1163 = vld [vmem:[%s1 + $0x22c0] sm:$0xff]
    %v1164 = vld [vmem:[%s1 + $0x22c8] sm:$0xff]
    %v1165 = vld [vmem:[%s1 + $0x22d0] sm:$0xff]
    %v1166 = vld [vmem:[%s1 + $0x22d8] sm:$0xff]
    %v1167 = vld [vmem:[%s1 + $0x22e0] sm:$0xff]
    %v1168 = vld [vmem:[%s1 + $0x22e8] sm:$0xff]
    %v1169 = vld [vmem:[%s1 + $0x22f0] sm:$0xff]
    %v1170 = vld [vmem:[%s1 + $0x22f8] sm:$0xff]
    %v1171 = vld [vmem:[%s1 + $0x2300] sm:$0xff]
    %v1172 = vld [vmem:[%s1 + $0x2308] sm:$0xff]
    %v1173 = vld [vmem:[%s1 + $0x2310] sm:$0xff]
    %v1174 = vld [vmem:[%s1 + $0x2318] sm:$0xff]
    %v1175 = vld [vmem:[%s1 + $0x2320] sm:$0xff]
    %v1176 = vld [vmem:[%s1 + $0x2328] sm:$0xff]
    %v1177 = vld [vmem:[%s1 + $0x2330] sm:$0xff]
    %v1178 = vld [vmem:[%s1 + $0x2338] sm:$0xff]
    %v1179 = vld [vmem:[%s1 + $0x2340] sm:$0xff]
    %v1180 = vld [vmem:[%s1 + $0x2348] sm:$0xff]
    %v1181 = vld [vmem:[%s1 + $0x2350] sm:$0xff]
    %v1182 = vld [vmem:[%s1 + $0x2358] sm:$0xff]
    %v1183 = vld [vmem:[%s1 + $0x2360] sm:$0xff]
    %v1184 = vld [vmem:[%s1 + $0x2368] sm:$0xff]
    %v1185 = vld [vmem:[%s1 + $0x2370] sm:$0xff]
    %v1186 = vld [vmem:[%s1 + $0x2378] sm:$0xff]
    %v1187 = vld [vmem:[%s1 + $0x2380] sm:$0xff]
    %v1188 = vld [vmem:[%s1 + $0x2388] sm:$0xff]
    %v1189 = vld [vmem:[%s1 + $0x2390] sm:$0xff]
    %v1190 = vld [vmem:[%s1 + $0x2398] sm:$0xff]
    %v1191 = vld [vmem:[%s1 + $0x23a0] sm:$0xff]
    %v1192 = vld [vmem:[%s1 + $0x23a8] sm:$0xff]
    %v1193 = vld [vmem:[%s1 + $0x23b0] sm:$0xff]
    %v1194 = vld [vmem:[%s1 + $0x23b8] sm:$0xff]
    %v1195 = vld [vmem:[%s1 + $0x23c0] sm:$0xff]
    %v1196 = vld [vmem:[%s1 + $0x23c8] sm:$0xff]
    %v1197 = vld [vmem:[%s1 + $0x23d0] sm:$0xff]
    %v1198 = vld [vmem:[%s1 + $0x23d8] sm:$0xff]
    %v1199 = vld [vmem:[%s1 + $0x23e0] sm:$0xff]
    %v1200 = vld [vmem:[%s1 + $0x23e8] sm:$0xff]
    %v1201 = vld [vmem:[%s1 + $0x23f0] sm:$0xff]
    %v1202 = vld [vmem:[%s1 + $0x23f8] sm:$0xff]
    %v1203 = vld [vmem:[%s1 + $0x2400] sm:$0xff]
    %v1204 = vld [vmem:[%s1 + $0x2408] sm:$0xff]
    %v1205 = vld [vmem:[%s1 + $0x2410] sm:$0xff]
    %v1206 = vld [vmem:[%s1 + $0x2418] sm:$0xff]
    %v1207 = vld [vmem:[%s1 + $0x2420] sm:$0xff]
    %v1208 = vld [vmem:[%s1 + $0x2428] sm:$0xff]
    %v1209 = vld [vmem:[%s1 + $0x2430] sm:$0xff]
    %v1210 = vld [vmem:[%s1 + $0x2438] sm:$0xff]
    %v1211 = vld [vmem:[%s1 + $0x2440] sm:$0xff]
    %v1212 = vld [vmem:[%s1 + $0x2448] sm:$0xff]
    %v1213 = vld [vmem:[%s1 + $0x2450] sm:$0xff]
    %v1214 = vld [vmem:[%s1 + $0x2458] sm:$0xff]
    %v1215 = vld [vmem:[%s1 + $0x2460] sm:$0xff]
    %v1216 = vld [vmem:[%s1 + $0x2468] sm:$0xff]
    %v1217 = vld [vmem:[%s1 + $0x2470] sm:$0xff]
    %v1218 = vld [vmem:[%s1 + $0x2478] sm:$0xff]
    %v1219 = vld [vmem:[%s1 + $0x2480] sm:$0xff]
    %v1220 = vld [vmem:[%s1 + $0x2488] sm:$0xff]
    %v1221 = vld [vmem:[%s1 + $0x2490] sm:$0xff]
    %v1222 = vld [vmem:[%s1 + $0x2498] sm:$0xff]
    %v1223 = vld [vmem:[%s1 + $0x24a0] sm:$0xff]
    %v1224 = vld [vmem:[%s1 + $0x24a8] sm:$0xff]
    %v1225 = vld [vmem:[%s1 + $0x24b0] sm:$0xff]
    %v1226 = vld [vmem:[%s1 + $0x24b8] sm:$0xff]
    %v1227 = vld [vmem:[%s1 + $0x24c0] sm:$0xff]
    %v1228 = vld [vmem:[%s1 + $0x24c8] sm:$0xff]
    %v1229 = vld [vmem:[%s1 + $0x24d0] sm:$0xff]
    %v1230 = vld [vmem:[%s1 + $0x24d8] sm:$0xff]
    %v1231 = vld [vmem:[%s1 + $0x24e0] sm:$0xff]
    %v1232 = vld [vmem:[%s1 + $0x24e8] sm:$0xff]
    %v1233 = vld [vmem:[%s1 + $0x24f0] sm:$0xff]
    %v1234 = vld [vmem:[%s1 + $0x24f8] sm:$0xff]
    %v1235 = vld [vmem:[%s1 + $0x2500] sm:$0xff]
    %v1236 = vld [vmem:[%s1 + $0x2508] sm:$0xff]
    %v1237 = vld [vmem:[%s1 + $0x2510] sm:$0xff]
    %v1238 = vld [vmem:[%s1 + $0x2518] sm:$0xff]
    %v1239 = vld [vmem:[%s1 + $0x2520] sm:$0xff]
    %v1240 = vld [vmem:[%s1 + $0x2528] sm:$0xff]
    %v1241 = vld [vmem:[%s1 + $0x2530] sm:$0xff]
    %v1242 = vld [vmem:[%s1 + $0x2538] sm:$0xff]
    %v1243 = vld [vmem:[%s1 + $0x2540] sm:$0xff]
    %v1244 = vld [vmem:[%s1 + $0x2548] sm:$0xff]
    %v1245 = vld [vmem:[%s1 + $0x2550] sm:$0xff]
    %v1246 = vld [vmem:[%s1 + $0x2558] sm:$0xff]
    %v1247 = vld [vmem:[%s1 + $0x2560] sm:$0xff]
    %v1248 = vld [vmem:[%s1 + $0x2568] sm:$0xff]
    %v1249 = vld [vmem:[%s1 + $0x2570] sm:$0xff]
    %v1250 = vld [vmem:[%s1 + $0x2578] sm:$0xff]
    %v1251 = vld [vmem:[%s1 + $0x2580] sm:$0xff]
    %v1252 = vld [vmem:[%s1 + $0x2588] sm:$0xff]
    %v1253 = vld [vmem:[%s1 + $0x2590] sm:$0xff]
    %v1254 = vld [vmem:[%s1 + $0x2598] sm:$0xff]
    %v1255 = vld [vmem:[%s1 + $0x25a0] sm:$0xff]
    %v1256 = vld [vmem:[%s1 + $0x25a8] sm:$0xff]
    %v1257 = vld [vmem:[%s1 + $0x25b0] sm:$0xff]
    %v1258 = vld [vmem:[%s1 + $0x25b8] sm:$0xff]
    %v1259 = vld [vmem:[%s1 + $0x25c0] sm:$0xff]
    %v1260 = vld [vmem:[%s1 + $0x25c8] sm:$0xff]
    %v1261 = vld [vmem:[%s1 + $0x25d0] sm:$0xff]
    %v1262 = vld [vmem:[%s1 + $0x25d8] sm:$0xff]
    %v1263 = vld [vmem:[%s1 + $0x25e0] sm:$0xff]
    %v1264 = vld [vmem:[%s1 + $0x25e8] sm:$0xff]
    %v1265 = vld [vmem:[%s1 + $0x25f0] sm:$0xff]
    %v1266 = vld [vmem:[%s1 + $0x25f8] sm:$0xff]
    %v1267 = vld [vmem:[%s1 + $0x2600] sm:$0xff]
    %v1268 = vld [vmem:[%s1 + $0x2608] sm:$0xff]
    %v1269 = vld [vmem:[%s1 + $0x2610] sm:$0xff]
    %v1270 = vld [vmem:[%s1 + $0x2618] sm:$0xff]
    %v1271 = vld [vmem:[%s1 + $0x2620] sm:$0xff]
    %v1272 = vld [vmem:[%s1 + $0x2628] sm:$0xff]
    %v1273 = vld [vmem:[%s1 + $0x2630] sm:$0xff]
    %v1274 = vld [vmem:[%s1 + $0x2638] sm:$0xff]
    %v1275 = vld [vmem:[%s1 + $0x2640] sm:$0xff]
    %v1276 = vld [vmem:[%s1 + $0x2648] sm:$0xff]
    %v1277 = vld [vmem:[%s1 + $0x2650] sm:$0xff]
    %v1278 = vld [vmem:[%s1 + $0x2658] sm:$0xff]
    %v1279 = vld [vmem:[%s1 + $0x2660] sm:$0xff]
    %v1280 = vld [vmem:[%s1 + $0x2668] sm:$0xff]
    %v1281 = vld [vmem:[%s1 + $0x2670] sm:$0xff]
    %v1282 = vld [vmem:[%s1 + $0x2678] sm:$0xff]
    %v1283 = vld [vmem:[%s1 + $0x2680] sm:$0xff]
    %v1284 = vld [vmem:[%s1 + $0x2688] sm:$0xff]
    %v1285 = vld [vmem:[%s1 + $0x2690] sm:$0xff]
    %v1286 = vld [vmem:[%s1 + $0x2698] sm:$0xff]
    %v1287 = vld [vmem:[%s1 + $0x26a0] sm:$0xff]
    %v1288 = vld [vmem:[%s1 + $0x26a8] sm:$0xff]
    %v1289 = vld [vmem:[%s1 + $0x26b0] sm:$0xff]
    %v1290 = vld [vmem:[%s1 + $0x26b8] sm:$0xff]
    %v1291 = vld [vmem:[%s1 + $0x26c0] sm:$0xff]
    %v1292 = vld [vmem:[%s1 + $0x26c8] sm:$0xff]
    %v1293 = vld [vmem:[%s1 + $0x26d0] sm:$0xff]
    %v1294 = vld [vmem:[%s1 + $0x26d8] sm:$0xff]
    %v1295 = vld [vmem:[%s1 + $0x26e0] sm:$0xff]
    %v1296 = vld [vmem:[%s1 + $0x26e8] sm:$0xff]
    %v1297 = vld [vmem:[%s1 + $0x26f0] sm:$0xff]
    %v1298 = vld [vmem:[%s1 + $0x26f8] sm:$0xff]
    %v1299 = vld [vmem:[%s1 + $0x2700] sm:$0xff]
    %v1300 = vld [vmem:[%s1 + $0x2708] sm:$0xff]
    %v1301 = vld [vmem:[%s1 + $0x2710] sm:$0xff]
    %v1302 = vld [vmem:[%s1 + $0x2718] sm:$0xff]
    %v1303 = vld [vmem:[%s1 + $0x2720] sm:$0xff]
    %v1304 = vld [vmem:[%s1 + $0x2728] sm:$0xff]
    %v1305 = vld [vmem:[%s1 + $0x2730] sm:$0xff]
    %v1306 = vld [vmem:[%s1 + $0x2738] sm:$0xff]
    %v1307 = vld [vmem:[%s1 + $0x2740] sm:$0xff]
    %v1308 = vld [vmem:[%s1 + $0x2748] sm:$0xff]
    %v1309 = vld [vmem:[%s1 + $0x2750] sm:$0xff]
    %v1310 = vld [vmem:[%s1 + $0x2758] sm:$0xff]
    %v1311 = vld [vmem:[%s1 + $0x2760] sm:$0xff]
    %v1312 = vld [vmem:[%s1 + $0x2768] sm:$0xff]
    %v1313 = vld [vmem:[%s1 + $0x2770] sm:$0xff]
    %v1314 = vld [vmem:[%s1 + $0x2778] sm:$0xff]
    %v1315 = vld [vmem:[%s1 + $0x2780] sm:$0xff]
    %v1316 = vld [vmem:[%s1 + $0x2788] sm:$0xff]
    %v1317 = vld [vmem:[%s1 + $0x2790] sm:$0xff]
    %v1318 = vld [vmem:[%s1 + $0x2798] sm:$0xff]
    %v1319 = vld [vmem:[%s1 + $0x27a0] sm:$0xff]
    %v1320 = vld [vmem:[%s1 + $0x27a8] sm:$0xff]
    %v1321 = vld [vmem:[%s1 + $0x27b0] sm:$0xff]
    %v1322 = vld [vmem:[%s1 + $0x27b8] sm:$0xff]
    %v1323 = vld [vmem:[%s1 + $0x27c0] sm:$0xff]
    %v1324 = vld [vmem:[%s1 + $0x27c8] sm:$0xff]
    %v1325 = vld [vmem:[%s1 + $0x27d0] sm:$0xff]
    %v1326 = vld [vmem:[%s1 + $0x27d8] sm:$0xff]
    %v1327 = vld [vmem:[%s1 + $0x27e0] sm:$0xff]
    %v1328 = vld [vmem:[%s1 + $0x27e8] sm:$0xff]
    %v1329 = vld [vmem:[%s1 + $0x27f0] sm:$0xff]
    %v1330 = vld [vmem:[%s1 + $0x27f8] sm:$0xff]
    %v1331 = vld [vmem:[%s1 + $0x2800] sm:$0xff]
    %v1332 = vld [vmem:[%s1 + $0x2808] sm:$0xff]
    %v1333 = vld [vmem:[%s1 + $0x2810] sm:$0xff]
    %v1334 = vld [vmem:[%s1 + $0x2818] sm:$0xff]
    %v1335 = vld [vmem:[%s1 + $0x2820] sm:$0xff]
    %v1336 = vld [vmem:[%s1 + $0x2828] sm:$0xff]
    %v1337 = vld [vmem:[%s1 + $0x2830] sm:$0xff]
    %v1338 = vld [vmem:[%s1 + $0x2838] sm:$0xff]
    %v1339 = vld [vmem:[%s1 + $0x2840] sm:$0xff]
    %v1340 = vld [vmem:[%s1 + $0x2848] sm:$0xff]
    %v1341 = vld [vmem:[%s1 + $0x2850] sm:$0xff]
    %v1342 = vld [vmem:[%s1 + $0x2858] sm:$0xff]
    %v1343 = vld [vmem:[%s1 + $0x2860] sm:$0xff]
    %v1344 = vld [vmem:[%s1 + $0x2868] sm:$0xff]
    %v1345 = vld [vmem:[%s1 + $0x2870] sm:$0xff]
    %v1346 = vld [vmem:[%s1 + $0x2878] sm:$0xff]
    %v1347 = vld [vmem:[%s1 + $0x2880] sm:$0xff]
    %v1348 = vld [vmem:[%s1 + $0x2888] sm:$0xff]
    %v1349 = vld [vmem:[%s1 + $0x2890] sm:$0xff]
    %v1350 = vld [vmem:[%s1 + $0x2898] sm:$0xff]
    %v1351 = vld [vmem:[%s1 + $0x28a0] sm:$0xff]
    %v1352 = vld [vmem:[%s1 + $0x28a8] sm:$0xff]
    %v1353 = vld [vmem:[%s1 + $0x28b0] sm:$0xff]
    %v1354 = vld [vmem:[%s1 + $0x28b8] sm:$0xff]
    %v1355 = vld [vmem:[%s1 + $0x28c0] sm:$0xff]
    %v1356 = vld [vmem:[%s1 + $0x28c8] sm:$0xff]
    %v1357 = vld [vmem:[%s1 + $0x28d0] sm:$0xff]
    %v1358 = vld [vmem:[%s1 + $0x28d8] sm:$0xff]
    %v1359 = vld [vmem:[%s1 + $0x28e0] sm:$0xff]
    %v1360 = vld [vmem:[%s1 + $0x28e8] sm:$0xff]
    %v1361 = vld [vmem:[%s1 + $0x28f0] sm:$0xff]
    %v1362 = vld [vmem:[%s1 + $0x28f8] sm:$0xff]
    %v1363 = vld [vmem:[%s1 + $0x2900] sm:$0xff]
    %v1364 = vld [vmem:[%s1 + $0x2908] sm:$0xff]
    %v1365 = vld [vmem:[%s1 + $0x2910] sm:$0xff]
    %v1366 = vld [vmem:[%s1 + $0x2918] sm:$0xff]
    %v1367 = vld [vmem:[%s1 + $0x2920] sm:$0xff]
    %v1368 = vld [vmem:[%s1 + $0x2928] sm:$0xff]
    %v1369 = vld [vmem:[%s1 + $0x2930] sm:$0xff]
    %v1370 = vld [vmem:[%s1 + $0x2938] sm:$0xff]
    %v1371 = vld [vmem:[%s1 + $0x2940] sm:$0xff]
    %v1372 = vld [vmem:[%s1 + $0x2948] sm:$0xff]
    %v1373 = vld [vmem:[%s1 + $0x2950] sm:$0xff]
    %v1374 = vld [vmem:[%s1 + $0x2958] sm:$0xff]
    %v1375 = vld [vmem:[%s1 + $0x2960] sm:$0xff]
    %v1376 = vld [vmem:[%s1 + $0x2968] sm:$0xff]
    %v1377 = vld [vmem:[%s1 + $0x2970] sm:$0xff]
    %v1378 = vld [vmem:[%s1 + $0x2978] sm:$0xff]
    %v1379 = vld [vmem:[%s1 + $0x2980] sm:$0xff]
    %v1380 = vld [vmem:[%s1 + $0x2988] sm:$0xff]
    %v1381 = vld [vmem:[%s1 + $0x2990] sm:$0xff]
    %v1382 = vld [vmem:[%s1 + $0x2998] sm:$0xff]
    %v1383 = vld [vmem:[%s1 + $0x29a0] sm:$0xff]
    %v1384 = vld [vmem:[%s1 + $0x29a8] sm:$0xff]
    %v1385 = vld [vmem:[%s1 + $0x29b0] sm:$0xff]
    %v1386 = vld [vmem:[%s1 + $0x29b8] sm:$0xff]
    %v1387 = vld [vmem:[%s1 + $0x29c0] sm:$0xff]
    %v1388 = vld [vmem:[%s1 + $0x29c8] sm:$0xff]
    %v1389 = vld [vmem:[%s1 + $0x29d0] sm:$0xff]
    %v1390 = vld [vmem:[%s1 + $0x29d8] sm:$0xff]
    %v1391 = vld [vmem:[%s1 + $0x29e0] sm:$0xff]
    %v1392 = vld [vmem:[%s1 + $0x29e8] sm:$0xff]
    %v1393 = vld [vmem:[%s1 + $0x29f0] sm:$0xff]
    %v1394 = vld [vmem:[%s1 + $0x29f8] sm:$0xff]
    %v1395 = vld [vmem:[%s1 + $0x2a00] sm:$0xff]
    %v1396 = vld [vmem:[%s1 + $0x2a08] sm:$0xff]
    %v1397 = vld [vmem:[%s1 + $0x2a10] sm:$0xff]
    %v1398 = vld [vmem:[%s1 + $0x2a18] sm:$0xff]
    %v1399 = vld [vmem:[%s1 + $0x2a20] sm:$0xff]
    %v1400 = vld [vmem:[%s1 + $0x2a28] sm:$0xff]
    %v1401 = vld [vmem:[%s1 + $0x2a30] sm:$0xff]
    %v1402 = vld [vmem:[%s1 + $0x2a38] sm:$0xff]
    %v1403 = vld [vmem:[%s1 + $0x2a40] sm:$0xff]
    %v1404 = vld [vmem:[%s1 + $0x2a48] sm:$0xff]
    %v1405 = vld [vmem:[%s1 + $0x2a50] sm:$0xff]
    %v1406 = vld [vmem:[%s1 + $0x2a58] sm:$0xff]
    %v1407 = vld [vmem:[%s1 + $0x2a60] sm:$0xff]
    %v1408 = vld [vmem:[%s1 + $0x2a68] sm:$0xff]
    %v1409 = vld [vmem:[%s1 + $0x2a70] sm:$0xff]
    %v1410 = vld [vmem:[%s1 + $0x2a78] sm:$0xff]
    %v1411 = vld [vmem:[%s1 + $0x2a80] sm:$0xff]
    %v1412 = vld [vmem:[%s1 + $0x2a88] sm:$0xff]
    %v1413 = vld [vmem:[%s1 + $0x2a90] sm:$0xff]
    %v1414 = vld [vmem:[%s1 + $0x2a98] sm:$0xff]
    %v1415 = vld [vmem:[%s1 + $0x2aa0] sm:$0xff]
    %v1416 = vld [vmem:[%s1 + $0x2aa8] sm:$0xff]
    %v1417 = vld [vmem:[%s1 + $0x2ab0] sm:$0xff]
    %v1418 = vld [vmem:[%s1 + $0x2ab8] sm:$0xff]
    %v1419 = vld [vmem:[%s1 + $0x2ac0] sm:$0xff]
    %v1420 = vld [vmem:[%s1 + $0x2ac8] sm:$0xff]
    %v1421 = vld [vmem:[%s1 + $0x2ad0] sm:$0xff]
    %v1422 = vld [vmem:[%s1 + $0x2ad8] sm:$0xff]
    %v1423 = vld [vmem:[%s1 + $0x2ae0] sm:$0xff]
    %v1424 = vld [vmem:[%s1 + $0x2ae8] sm:$0xff]
    %v1425 = vld [vmem:[%s1 + $0x2af0] sm:$0xff]
    %v1426 = vld [vmem:[%s1 + $0x2af8] sm:$0xff]
    %v1427 = vld [vmem:[%s1 + $0x2b00] sm:$0xff]
    %v1428 = vld [vmem:[%s1 + $0x2b08] sm:$0xff]
    %v1429 = vld [vmem:[%s1 + $0x2b10] sm:$0xff]
    %v1430 = vld [vmem:[%s1 + $0x2b18] sm:$0xff]
    %v1431 = vld [vmem:[%s1 + $0x2b20] sm:$0xff]
    %v1432 = vld [vmem:[%s1 + $0x2b28] sm:$0xff]
    %v1433 = vld [vmem:[%s1 + $0x2b30] sm:$0xff]
    %v1434 = vld [vmem:[%s1 + $0x2b38] sm:$0xff]
    %v1435 = vld [vmem:[%s1 + $0x2b40] sm:$0xff]
    %v1436 = vld [vmem:[%s1 + $0x2b48] sm:$0xff]
    %v1437 = vld [vmem:[%s1 + $0x2b50] sm:$0xff]
    %v1438 = vld [vmem:[%s1 + $0x2b58] sm:$0xff]
    %v1439 = vld [vmem:[%s1 + $0x2b60] sm:$0xff]
    %v1440 = vld [vmem:[%s1 + $0x2b68] sm:$0xff]
    %v1441 = vld [vmem:[%s1 + $0x2b70] sm:$0xff]
    %v1442 = vld [vmem:[%s1 + $0x2b78] sm:$0xff]
    %v1443 = vld [vmem:[%s1 + $0x2b80] sm:$0xff]
    %v1444 = vld [vmem:[%s1 + $0x2b88] sm:$0xff]
    %v1445 = vld [vmem:[%s1 + $0x2b90] sm:$0xff]
    %v1446 = vld [vmem:[%s1 + $0x2b98] sm:$0xff]
    %v1447 = vld [vmem:[%s1 + $0x2ba0] sm:$0xff]
    %v1448 = vld [vmem:[%s1 + $0x2ba8] sm:$0xff]
    %v1449 = vld [vmem:[%s1 + $0x2bb0] sm:$0xff]
    %v1450 = vld [vmem:[%s1 + $0x2bb8] sm:$0xff]
    %v1451 = vld [vmem:[%s1 + $0x2bc0] sm:$0xff]
    %v1452 = vld [vmem:[%s1 + $0x2bc8] sm:$0xff]
    %v1453 = vld [vmem:[%s1 + $0x2bd0] sm:$0xff]
    %v1454 = vld [vmem:[%s1 + $0x2bd8] sm:$0xff]
    %v1455 = vld [vmem:[%s1 + $0x2be0] sm:$0xff]
    %v1456 = vld [vmem:[%s1 + $0x2be8] sm:$0xff]
    %v1457 = vld [vmem:[%s1 + $0x2bf0] sm:$0xff]
    %v1458 = vld [vmem:[%s1 + $0x2bf8] sm:$0xff]
    %v1459 = vld [vmem:[%s1 + $0x2c00] sm:$0xff]
    %v1460 = vld [vmem:[%s1 + $0x2c08] sm:$0xff]
    %v1461 = vld [vmem:[%s1 + $0x2c10] sm:$0xff]
    %v1462 = vld [vmem:[%s1 + $0x2c18] sm:$0xff]
    %v1463 = vld [vmem:[%s1 + $0x2c20] sm:$0xff]
    %v1464 = vld [vmem:[%s1 + $0x2c28] sm:$0xff]
    %v1465 = vld [vmem:[%s1 + $0x2c30] sm:$0xff]
    %v1466 = vld [vmem:[%s1 + $0x2c38] sm:$0xff]
    %v1467 = vld [vmem:[%s1 + $0x2c40] sm:$0xff]
    %v1468 = vld [vmem:[%s1 + $0x2c48] sm:$0xff]
    %v1469 = vld [vmem:[%s1 + $0x2c50] sm:$0xff]
    %v1470 = vld [vmem:[%s1 + $0x2c58] sm:$0xff]
    %v1471 = vld [vmem:[%s1 + $0x2c60] sm:$0xff]
    %v1472 = vld [vmem:[%s1 + $0x2c68] sm:$0xff]
    %v1473 = vld [vmem:[%s1 + $0x2c70] sm:$0xff]
    %v1474 = vld [vmem:[%s1 + $0x2c78] sm:$0xff]
    %v1475 = vld [vmem:[%s1 + $0x2c80] sm:$0xff]
    %v1476 = vld [vmem:[%s1 + $0x2c88] sm:$0xff]
    %v1477 = vld [vmem:[%s1 + $0x2c90] sm:$0xff]
    %v1478 = vld [vmem:[%s1 + $0x2c98] sm:$0xff]
    %v1479 = vld [vmem:[%s1 + $0x2ca0] sm:$0xff]
    %v1480 = vld [vmem:[%s1 + $0x2ca8] sm:$0xff]
    %v1481 = vld [vmem:[%s1 + $0x2cb0] sm:$0xff]
    %v1482 = vld [vmem:[%s1 + $0x2cb8] sm:$0xff]
    %v1483 = vld [vmem:[%s1 + $0x2cc0] sm:$0xff]
    %v1484 = vld [vmem:[%s1 + $0x2cc8] sm:$0xff]
    %v1485 = vld [vmem:[%s1 + $0x2cd0] sm:$0xff]
    %v1486 = vld [vmem:[%s1 + $0x2cd8] sm:$0xff]
    %v1487 = vld [vmem:[%s1 + $0x2ce0] sm:$0xff]
    %v1488 = vld [vmem:[%s1 + $0x2ce8] sm:$0xff]
    %v1489 = vld [vmem:[%s1 + $0x2cf0] sm:$0xff]
    %v1490 = vld [vmem:[%s1 + $0x2cf8] sm:$0xff]
    %v1491 = vld [vmem:[%s1 + $0x2d00] sm:$0xff]
    %v1492 = vld [vmem:[%s1 + $0x2d08] sm:$0xff]
    %v1493 = vld [vmem:[%s1 + $0x2d10] sm:$0xff]
    %v1494 = vld [vmem:[%s1 + $0x2d18] sm:$0xff]
    %v1495 = vld [vmem:[%s1 + $0x2d20] sm:$0xff]
    %v1496 = vld [vmem:[%s1 + $0x2d28] sm:$0xff]
    %v1497 = vld [vmem:[%s1 + $0x2d30] sm:$0xff]
    %v1498 = vld [vmem:[%s1 + $0x2d38] sm:$0xff]
    %v1499 = vld [vmem:[%s1 + $0x2d40] sm:$0xff]
    %v1500 = vld [vmem:[%s1 + $0x2d48] sm:$0xff]
    %v1501 = vld [vmem:[%s1 + $0x2d50] sm:$0xff]
    %v1502 = vld [vmem:[%s1 + $0x2d58] sm:$0xff]
    %v1503 = vld [vmem:[%s1 + $0x2d60] sm:$0xff]
    %v1504 = vld [vmem:[%s1 + $0x2d68] sm:$0xff]
    %v1505 = vld [vmem:[%s1 + $0x2d70] sm:$0xff]
    %v1506 = vld [vmem:[%s1 + $0x2d78] sm:$0xff]
    %v1507 = vld [vmem:[%s1 + $0x2d80] sm:$0xff]
    %v1508 = vld [vmem:[%s1 + $0x2d88] sm:$0xff]
    %v1509 = vld [vmem:[%s1 + $0x2d90] sm:$0xff]
    %v1510 = vld [vmem:[%s1 + $0x2d98] sm:$0xff]
    %v1511 = vld [vmem:[%s1 + $0x2da0] sm:$0xff]
    %v1512 = vld [vmem:[%s1 + $0x2da8] sm:$0xff]
    %v1513 = vld [vmem:[%s1 + $0x2db0] sm:$0xff]
    %v1514 = vld [vmem:[%s1 + $0x2db8] sm:$0xff]
    %v1515 = vld [vmem:[%s1 + $0x2dc0] sm:$0xff]
    %v1516 = vld [vmem:[%s1 + $0x2dc8] sm:$0xff]
    %v1517 = vld [vmem:[%s1 + $0x2dd0] sm:$0xff]
    %v1518 = vld [vmem:[%s1 + $0x2dd8] sm:$0xff]
    %v1519 = vld [vmem:[%s1 + $0x2de0] sm:$0xff]
    %v1520 = vld [vmem:[%s1 + $0x2de8] sm:$0xff]
    %v1521 = vld [vmem:[%s1 + $0x2df0] sm:$0xff]
    %v1522 = vld [vmem:[%s1 + $0x2df8] sm:$0xff]
    %v1523 = vld [vmem:[%s1 + $0x2e00] sm:$0xff]
    %v1524 = vld [vmem:[%s1 + $0x2e08] sm:$0xff]
    %v1525 = vld [vmem:[%s1 + $0x2e10] sm:$0xff]
    %v1526 = vld [vmem:[%s1 + $0x2e18] sm:$0xff]
    %v1527 = vld [vmem:[%s1 + $0x2e20] sm:$0xff]
    %v1528 = vld [vmem:[%s1 + $0x2e28] sm:$0xff]
    %v1529 = vld [vmem:[%s1 + $0x2e30] sm:$0xff]
    %v1530 = vld [vmem:[%s1 + $0x2e38] sm:$0xff]
    %v1531 = vld [vmem:[%s1 + $0x2e40] sm:$0xff]
    %v1532 = vld [vmem:[%s1 + $0x2e48] sm:$0xff]
    %v1533 = vld [vmem:[%s1 + $0x2e50] sm:$0xff]
    %v1534 = vld [vmem:[%s1 + $0x2e58] sm:$0xff]
    %v1535 = vld [vmem:[%s1 + $0x2e60] sm:$0xff]
    %v1536 = vld [vmem:[%s1 + $0x2e68] sm:$0xff]
    %v1537 = vld [vmem:[%s1 + $0x2e70] sm:$0xff]
    %v1538 = vld [vmem:[%s1 + $0x2e78] sm:$0xff]
    %v1539 = vld [vmem:[%s1 + $0x2e80] sm:$0xff]
    %v1540 = vld [vmem:[%s1 + $0x2e88] sm:$0xff]
    %v1541 = vld [vmem:[%s1 + $0x2e90] sm:$0xff]
    %v1542 = vld [vmem:[%s1 + $0x2e98] sm:$0xff]
    %v1543 = vld [vmem:[%s1 + $0x2ea0] sm:$0xff]
    %v1544 = vld [vmem:[%s1 + $0x2ea8] sm:$0xff]
    %v1545 = vld [vmem:[%s1 + $0x2eb0] sm:$0xff]
    %v1546 = vld [vmem:[%s1 + $0x2eb8] sm:$0xff]
    %v1547 = vld [vmem:[%s1 + $0x2ec0] sm:$0xff]
    %v1548 = vld [vmem:[%s1 + $0x2ec8] sm:$0xff]
    %v1549 = vld [vmem:[%s1 + $0x2ed0] sm:$0xff]
    %v1550 = vld [vmem:[%s1 + $0x2ed8] sm:$0xff]
    %v1551 = vld [vmem:[%s1 + $0x2ee0] sm:$0xff]
    %v1552 = vld [vmem:[%s1 + $0x2ee8] sm:$0xff]
    %v1553 = vld [vmem:[%s1 + $0x2ef0] sm:$0xff]
    %v1554 = vld [vmem:[%s1 + $0x2ef8] sm:$0xff]
    %v1555 = vld [vmem:[%s1 + $0x2f00] sm:$0xff]
    %v1556 = vld [vmem:[%s1 + $0x2f08] sm:$0xff]
    %v1557 = vld [vmem:[%s1 + $0x2f10] sm:$0xff]
    %v1558 = vld [vmem:[%s1 + $0x2f18] sm:$0xff]
    %v1559 = vld [vmem:[%s1 + $0x2f20] sm:$0xff]
    %v1560 = vld [vmem:[%s1 + $0x2f28] sm:$0xff]
    %v1561 = vld [vmem:[%s1 + $0x2f30] sm:$0xff]
    %v1562 = vld [vmem:[%s1 + $0x2f38] sm:$0xff]
    %v1563 = vld [vmem:[%s1 + $0x2f40] sm:$0xff]
    %v1564 = vld [vmem:[%s1 + $0x2f48] sm:$0xff]
    %v1565 = vld [vmem:[%s1 + $0x2f50] sm:$0xff]
    %v1566 = vld [vmem:[%s1 + $0x2f58] sm:$0xff]
    %v1567 = vld [vmem:[%s1 + $0x2f60] sm:$0xff]
    %v1568 = vld [vmem:[%s1 + $0x2f68] sm:$0xff]
    %v1569 = vld [vmem:[%s1 + $0x2f70] sm:$0xff]
    %v1570 = vld [vmem:[%s1 + $0x2f78] sm:$0xff]
    %v1571 = vld [vmem:[%s1 + $0x2f80] sm:$0xff]
    %v1572 = vld [vmem:[%s1 + $0x2f88] sm:$0xff]
    %v1573 = vld [vmem:[%s1 + $0x2f90] sm:$0xff]
    %v1574 = vld [vmem:[%s1 + $0x2f98] sm:$0xff]
    %v1575 = vld [vmem:[%s1 + $0x2fa0] sm:$0xff]
    %v1576 = vld [vmem:[%s1 + $0x2fa8] sm:$0xff]
    %v1577 = vld [vmem:[%s1 + $0x2fb0] sm:$0xff]
    %v1578 = vld [vmem:[%s1 + $0x2fb8] sm:$0xff]
    %v1579 = vld [vmem:[%s1 + $0x2fc0] sm:$0xff]
    %v1580 = vld [vmem:[%s1 + $0x2fc8] sm:$0xff]
    %v1581 = vld [vmem:[%s1 + $0x2fd0] sm:$0xff]
    %v1582 = vld [vmem:[%s1 + $0x2fd8] sm:$0xff]
    %v1583 = vld [vmem:[%s1 + $0x2fe0] sm:$0xff]
    %v1584 = vld [vmem:[%s1 + $0x2fe8] sm:$0xff]
    %v1585 = vld [vmem:[%s1 + $0x2ff0] sm:$0xff]
    %v1586 = vld [vmem:[%s1 + $0x2ff8] sm:$0xff]
    %v1587 = vld [vmem:[%s1 + $0x3000] sm:$0xff]
    %v1588 = vld [vmem:[%s1 + $0x3008] sm:$0xff]
    %v1589 = vld [vmem:[%s1 + $0x3010] sm:$0xff]
    %v1590 = vld [vmem:[%s1 + $0x3018] sm:$0xff]
    %v1591 = vld [vmem:[%s1 + $0x3020] sm:$0xff]
    %v1592 = vld [vmem:[%s1 + $0x3028] sm:$0xff]
    %v1593 = vld [vmem:[%s1 + $0x3030] sm:$0xff]
    %v1594 = vld [vmem:[%s1 + $0x3038] sm:$0xff]
    %v1595 = vld [vmem:[%s1 + $0x3040] sm:$0xff]
    %v1596 = vld [vmem:[%s1 + $0x3048] sm:$0xff]
    %v1597 = vld [vmem:[%s1 + $0x3050] sm:$0xff]
    %v1598 = vld [vmem:[%s1 + $0x3058] sm:$0xff]
    %v1599 = vld [vmem:[%s1 + $0x3060] sm:$0xff]
    %v1600 = vld [vmem:[%s1 + $0x3068] sm:$0xff]
    %v1601 = vld [vmem:[%s1 + $0x3070] sm:$0xff]
    %v1602 = vld [vmem:[%s1 + $0x3078] sm:$0xff]
    %v1603 = vld [vmem:[%s1 + $0x3080] sm:$0xff]
    %v1604 = vld [vmem:[%s1 + $0x3088] sm:$0xff]
    %v1605 = vld [vmem:[%s1 + $0x3090] sm:$0xff]
    %v1606 = vld [vmem:[%s1 + $0x3098] sm:$0xff]
    %v1607 = vld [vmem:[%s1 + $0x30a0] sm:$0xff]
    %v1608 = vld [vmem:[%s1 + $0x30a8] sm:$0xff]
    %v1609 = vld [vmem:[%s1 + $0x30b0] sm:$0xff]
    %v1610 = vld [vmem:[%s1 + $0x30b8] sm:$0xff]
    %v1611 = vld [vmem:[%s1 + $0x30c0] sm:$0xff]
    %v1612 = vld [vmem:[%s1 + $0x30c8] sm:$0xff]
    %v1613 = vld [vmem:[%s1 + $0x30d0] sm:$0xff]
    %v1614 = vld [vmem:[%s1 + $0x30d8] sm:$0xff]
    %v1615 = vld [vmem:[%s1 + $0x30e0] sm:$0xff]
    %v1616 = vld [vmem:[%s1 + $0x30e8] sm:$0xff]
    %v1617 = vld [vmem:[%s1 + $0x30f0] sm:$0xff]
    %v1618 = vld [vmem:[%s1 + $0x30f8] sm:$0xff]
    %v1619 = vld [vmem:[%s1 + $0x3100] sm:$0xff]
    %v1620 = vld [vmem:[%s1 + $0x3108] sm:$0xff]
    %v1621 = vld [vmem:[%s1 + $0x3110] sm:$0xff]
    %v1622 = vld [vmem:[%s1 + $0x3118] sm:$0xff]
    %v1623 = vld [vmem:[%s1 + $0x3120] sm:$0xff]
    %v1624 = vld [vmem:[%s1 + $0x3128] sm:$0xff]
    %v1625 = vld [vmem:[%s1 + $0x3130] sm:$0xff]
    %v1626 = vld [vmem:[%s1 + $0x3138] sm:$0xff]
    %v1627 = vld [vmem:[%s1 + $0x3140] sm:$0xff]
    %v1628 = vld [vmem:[%s1 + $0x3148] sm:$0xff]
    %v1629 = vld [vmem:[%s1 + $0x3150] sm:$0xff]
    %v1630 = vld [vmem:[%s1 + $0x3158] sm:$0xff]
    %v1631 = vld [vmem:[%s1 + $0x3160] sm:$0xff]
    %v1632 = vld [vmem:[%s1 + $0x3168] sm:$0xff]
    %v1633 = vld [vmem:[%s1 + $0x3170] sm:$0xff]
    %v1634 = vld [vmem:[%s1 + $0x3178] sm:$0xff]
    %v1635 = vld [vmem:[%s1 + $0x3180] sm:$0xff]
    %v1636 = vld [vmem:[%s1 + $0x3188] sm:$0xff]
    %v1637 = vld [vmem:[%s1 + $0x3190] sm:$0xff]
    %v1638 = vld [vmem:[%s1 + $0x3198] sm:$0xff]
    %v1639 = vld [vmem:[%s1 + $0x31a0] sm:$0xff]
    %v1640 = vld [vmem:[%s1 + $0x31a8] sm:$0xff]
    %v1641 = vld [vmem:[%s1 + $0x31b0] sm:$0xff]
    %v1642 = vld [vmem:[%s1 + $0x31b8] sm:$0xff]
    %v1643 = vld [vmem:[%s1 + $0x31c0] sm:$0xff]
    %v1644 = vld [vmem:[%s1 + $0x31c8] sm:$0xff]
    %v1645 = vld [vmem:[%s1 + $0x31d0] sm:$0xff]
    %v1646 = vld [vmem:[%s1 + $0x31d8] sm:$0xff]
    %v1647 = vld [vmem:[%s1 + $0x31e0] sm:$0xff]
    %v1648 = vld [vmem:[%s1 + $0x31e8] sm:$0xff]
    %v1649 = vld [vmem:[%s1 + $0x31f0] sm:$0xff]
    %v1650 = vld [vmem:[%s1 + $0x31f8] sm:$0xff]
    %v1651 = vld [vmem:[%s1 + $0x3200] sm:$0xff]
    %v1652 = vld [vmem:[%s1 + $0x3208] sm:$0xff]
    %v1653 = vld [vmem:[%s1 + $0x3210] sm:$0xff]
    %v1654 = vld [vmem:[%s1 + $0x3218] sm:$0xff]
    %v1655 = vld [vmem:[%s1 + $0x3220] sm:$0xff]
    %v1656 = vld [vmem:[%s1 + $0x3228] sm:$0xff]
    %v1657 = vld [vmem:[%s1 + $0x3230] sm:$0xff]
    %v1658 = vld [vmem:[%s1 + $0x3238] sm:$0xff]
    %v1659 = vld [vmem:[%s1 + $0x3240] sm:$0xff]
    %v1660 = vld [vmem:[%s1 + $0x3248] sm:$0xff]
    %v1661 = vld [vmem:[%s1 + $0x3250] sm:$0xff]
    %v1662 = vld [vmem:[%s1 + $0x3258] sm:$0xff]
    %v1663 = vld [vmem:[%s1 + $0x3260] sm:$0xff]
    %v1664 = vld [vmem:[%s1 + $0x3268] sm:$0xff]
    %v1665 = vld [vmem:[%s1 + $0x3270] sm:$0xff]
    %v1666 = vld [vmem:[%s1 + $0x3278] sm:$0xff]
    %v1667 = vld [vmem:[%s1 + $0x3280] sm:$0xff]
    %v1668 = vld [vmem:[%s1 + $0x3288] sm:$0xff]
    %v1669 = vld [vmem:[%s1 + $0x3290] sm:$0xff]
    %v1670 = vld [vmem:[%s1 + $0x3298] sm:$0xff]
    %v1671 = vld [vmem:[%s1 + $0x32a0] sm:$0xff]
    %v1672 = vld [vmem:[%s1 + $0x32a8] sm:$0xff]
    %v1673 = vld [vmem:[%s1 + $0x32b0] sm:$0xff]
    %v1674 = vld [vmem:[%s1 + $0x32b8] sm:$0xff]
    %v1675 = vld [vmem:[%s1 + $0x32c0] sm:$0xff]
    %v1676 = vld [vmem:[%s1 + $0x32c8] sm:$0xff]
    %v1677 = vld [vmem:[%s1 + $0x32d0] sm:$0xff]
    %v1678 = vld [vmem:[%s1 + $0x32d8] sm:$0xff]
    %v1679 = vld [vmem:[%s1 + $0x32e0] sm:$0xff]
    %v1680 = vld [vmem:[%s1 + $0x32e8] sm:$0xff]
    %v1681 = vld [vmem:[%s1 + $0x32f0] sm:$0xff]
    %v1682 = vld [vmem:[%s1 + $0x32f8] sm:$0xff]
    %v1683 = vld [vmem:[%s1 + $0x3300] sm:$0xff]
    %v1684 = vld [vmem:[%s1 + $0x3308] sm:$0xff]
    %v1685 = vld [vmem:[%s1 + $0x3310] sm:$0xff]
    %v1686 = vld [vmem:[%s1 + $0x3318] sm:$0xff]
    %v1687 = vld [vmem:[%s1 + $0x3320] sm:$0xff]
    %v1688 = vld [vmem:[%s1 + $0x3328] sm:$0xff]
    %v1689 = vld [vmem:[%s1 + $0x3330] sm:$0xff]
    %v1690 = vld [vmem:[%s1 + $0x3338] sm:$0xff]
    %v1691 = vld [vmem:[%s1 + $0x3340] sm:$0xff]
    %v1692 = vld [vmem:[%s1 + $0x3348] sm:$0xff]
    %v1693 = vld [vmem:[%s1 + $0x3350] sm:$0xff]
    %v1694 = vld [vmem:[%s1 + $0x3358] sm:$0xff]
    %v1695 = vld [vmem:[%s1 + $0x3360] sm:$0xff]
    %v1696 = vld [vmem:[%s1 + $0x3368] sm:$0xff]
    %v1697 = vld [vmem:[%s1 + $0x3370] sm:$0xff]
    %v1698 = vld [vmem:[%s1 + $0x3378] sm:$0xff]
    %v1699 = vld [vmem:[%s1 + $0x3380] sm:$0xff]
    %v1700 = vld [vmem:[%s1 + $0x3388] sm:$0xff]
    %v1701 = vld [vmem:[%s1 + $0x3390] sm:$0xff]
    %v1702 = vld [vmem:[%s1 + $0x3398] sm:$0xff]
    %v1703 = vld [vmem:[%s1 + $0x33a0] sm:$0xff]
    %v1704 = vld [vmem:[%s1 + $0x33a8] sm:$0xff]
    %v1705 = vld [vmem:[%s1 + $0x33b0] sm:$0xff]
    %v1706 = vld [vmem:[%s1 + $0x33b8] sm:$0xff]
    %v1707 = vld [vmem:[%s1 + $0x33c0] sm:$0xff]
    %v1708 = vld [vmem:[%s1 + $0x33c8] sm:$0xff]
    %v1709 = vld [vmem:[%s1 + $0x33d0] sm:$0xff]
    %v1710 = vld [vmem:[%s1 + $0x33d8] sm:$0xff]
    %v1711 = vld [vmem:[%s1 + $0x33e0] sm:$0xff]
    %v1712 = vld [vmem:[%s1 + $0x33e8] sm:$0xff]
    %v1713 = vld [vmem:[%s1 + $0x33f0] sm:$0xff]
    %v1714 = vld [vmem:[%s1 + $0x33f8] sm:$0xff]
    %v1715 = vld [vmem:[%s1 + $0x3400] sm:$0xff]
    %v1716 = vld [vmem:[%s1 + $0x3408] sm:$0xff]
    %v1717 = vld [vmem:[%s1 + $0x3410] sm:$0xff]
    %v1718 = vld [vmem:[%s1 + $0x3418] sm:$0xff]
    %v1719 = vld [vmem:[%s1 + $0x3420] sm:$0xff]
    %v1720 = vld [vmem:[%s1 + $0x3428] sm:$0xff]
    %v1721 = vld [vmem:[%s1 + $0x3430] sm:$0xff]
    %v1722 = vld [vmem:[%s1 + $0x3438] sm:$0xff]
    %v1723 = vld [vmem:[%s1 + $0x3440] sm:$0xff]
    %v1724 = vld [vmem:[%s1 + $0x3448] sm:$0xff]
    %v1725 = vld [vmem:[%s1 + $0x3450] sm:$0xff]
    %v1726 = vld [vmem:[%s1 + $0x3458] sm:$0xff]
    %v1727 = vld [vmem:[%s1 + $0x3460] sm:$0xff]
    %v1728 = vld [vmem:[%s1 + $0x3468] sm:$0xff]
    %v1729 = vld [vmem:[%s1 + $0x3470] sm:$0xff]
    %v1730 = vld [vmem:[%s1 + $0x3478] sm:$0xff]
    %v1731 = vld [vmem:[%s1 + $0x3480] sm:$0xff]
    %v1732 = vld [vmem:[%s1 + $0x3488] sm:$0xff]
    %v1733 = vld [vmem:[%s1 + $0x3490] sm:$0xff]
    %v1734 = vld [vmem:[%s1 + $0x3498] sm:$0xff]
    %v1735 = vld [vmem:[%s1 + $0x34a0] sm:$0xff]
    %v1736 = vld [vmem:[%s1 + $0x34a8] sm:$0xff]
    %v1737 = vld [vmem:[%s1 + $0x34b0] sm:$0xff]
    %v1738 = vld [vmem:[%s1 + $0x34b8] sm:$0xff]
    %v1739 = vld [vmem:[%s1 + $0x34c0] sm:$0xff]
    %v1740 = vld [vmem:[%s1 + $0x34c8] sm:$0xff]
    %v1741 = vld [vmem:[%s1 + $0x34d0] sm:$0xff]
    %v1742 = vld [vmem:[%s1 + $0x34d8] sm:$0xff]
    %v1743 = vld [vmem:[%s1 + $0x34e0] sm:$0xff]
    %v1744 = vld [vmem:[%s1 + $0x34e8] sm:$0xff]
    %v1745 = vld [vmem:[%s1 + $0x34f0] sm:$0xff]
    %v1746 = vld [vmem:[%s1 + $0x34f8] sm:$0xff]
    %v1747 = vld [vmem:[%s1 + $0x3500] sm:$0xff]
    %v1748 = vld [vmem:[%s1 + $0x3508] sm:$0xff]
    %v1749 = vld [vmem:[%s1 + $0x3510] sm:$0xff]
    %v1750 = vld [vmem:[%s1 + $0x3518] sm:$0xff]
    %v1751 = vld [vmem:[%s1 + $0x3520] sm:$0xff]
    %v1752 = vld [vmem:[%s1 + $0x3528] sm:$0xff]
    %v1753 = vld [vmem:[%s1 + $0x3530] sm:$0xff]
    %v1754 = vld [vmem:[%s1 + $0x3538] sm:$0xff]
    %v1755 = vld [vmem:[%s1 + $0x3540] sm:$0xff]
    %v1756 = vld [vmem:[%s1 + $0x3548] sm:$0xff]
    %v1757 = vld [vmem:[%s1 + $0x3550] sm:$0xff]
    %v1758 = vld [vmem:[%s1 + $0x3558] sm:$0xff]
    %v1759 = vld [vmem:[%s1 + $0x3560] sm:$0xff]
    %v1760 = vld [vmem:[%s1 + $0x3568] sm:$0xff]
    %v1761 = vld [vmem:[%s1 + $0x3570] sm:$0xff]
    %v1762 = vld [vmem:[%s1 + $0x3578] sm:$0xff]
    %v1763 = vld [vmem:[%s1 + $0x3580] sm:$0xff]
    %v1764 = vld [vmem:[%s1 + $0x3588] sm:$0xff]
    %v1765 = vld [vmem:[%s1 + $0x3590] sm:$0xff]
    %v1766 = vld [vmem:[%s1 + $0x3598] sm:$0xff]
    %v1767 = vld [vmem:[%s1 + $0x35a0] sm:$0xff]
    %v1768 = vld [vmem:[%s1 + $0x35a8] sm:$0xff]
    %v1769 = vld [vmem:[%s1 + $0x35b0] sm:$0xff]
    %v1770 = vld [vmem:[%s1 + $0x35b8] sm:$0xff]
    %v1771 = vld [vmem:[%s1 + $0x35c0] sm:$0xff]
    %v1772 = vld [vmem:[%s1 + $0x35c8] sm:$0xff]
    %v1773 = vld [vmem:[%s1 + $0x35d0] sm:$0xff]
    %v1774 = vld [vmem:[%s1 + $0x35d8] sm:$0xff]
    %v1775 = vld [vmem:[%s1 + $0x35e0] sm:$0xff]
    %v1776 = vld [vmem:[%s1 + $0x35e8] sm:$0xff]
    %v1777 = vld [vmem:[%s1 + $0x35f0] sm:$0xff]
    %v1778 = vld [vmem:[%s1 + $0x35f8] sm:$0xff]
    %v1779 = vld [vmem:[%s1 + $0x3600] sm:$0xff]
    %v1780 = vld [vmem:[%s1 + $0x3608] sm:$0xff]
    %v1781 = vld [vmem:[%s1 + $0x3610] sm:$0xff]
    %v1782 = vld [vmem:[%s1 + $0x3618] sm:$0xff]
    %v1783 = vld [vmem:[%s1 + $0x3620] sm:$0xff]
    %v1784 = vld [vmem:[%s1 + $0x3628] sm:$0xff]
    %v1785 = vld [vmem:[%s1 + $0x3630] sm:$0xff]
    %v1786 = vld [vmem:[%s1 + $0x3638] sm:$0xff]
    %v1787 = vld [vmem:[%s1 + $0x3640] sm:$0xff]
    %v1788 = vld [vmem:[%s1 + $0x3648] sm:$0xff]
    %v1789 = vld [vmem:[%s1 + $0x3650] sm:$0xff]
    %v1790 = vld [vmem:[%s1 + $0x3658] sm:$0xff]
    %v1791 = vld [vmem:[%s1 + $0x3660] sm:$0xff]
    %v1792 = vld [vmem:[%s1 + $0x3668] sm:$0xff]
    %v1793 = vld [vmem:[%s1 + $0x3670] sm:$0xff]
    %v1794 = vld [vmem:[%s1 + $0x3678] sm:$0xff]
    %v1795 = vld [vmem:[%s1 + $0x3680] sm:$0xff]
    %v1796 = vld [vmem:[%s1 + $0x3688] sm:$0xff]
    %v1797 = vld [vmem:[%s1 + $0x3690] sm:$0xff]
    %v1798 = vld [vmem:[%s1 + $0x3698] sm:$0xff]
    %v1799 = vld [vmem:[%s1 + $0x36a0] sm:$0xff]
    %v1800 = vld [vmem:[%s1 + $0x36a8] sm:$0xff]
    %v1801 = vld [vmem:[%s1 + $0x36b0] sm:$0xff]
    %v1802 = vld [vmem:[%s1 + $0x36b8] sm:$0xff]
    %v1803 = vld [vmem:[%s1 + $0x36c0] sm:$0xff]
    %v1804 = vld [vmem:[%s1 + $0x36c8] sm:$0xff]
    %v1805 = vld [vmem:[%s1 + $0x36d0] sm:$0xff]
    %v1806 = vld [vmem:[%s1 + $0x36d8] sm:$0xff]
    %v1807 = vld [vmem:[%s1 + $0x36e0] sm:$0xff]
    %v1808 = vld [vmem:[%s1 + $0x36e8] sm:$0xff]
    %v1809 = vld [vmem:[%s1 + $0x36f0] sm:$0xff]
    %v1810 = vld [vmem:[%s1 + $0x36f8] sm:$0xff]
    %v1811 = vld [vmem:[%s1 + $0x3700] sm:$0xff]
    %v1812 = vld [vmem:[%s1 + $0x3708] sm:$0xff]
    %v1813 = vld [vmem:[%s1 + $0x3710] sm:$0xff]
    %v1814 = vld [vmem:[%s1 + $0x3718] sm:$0xff]
    %v1815 = vld [vmem:[%s1 + $0x3720] sm:$0xff]
    %v1816 = vld [vmem:[%s1 + $0x3728] sm:$0xff]
    %v1817 = vld [vmem:[%s1 + $0x3730] sm:$0xff]
    %v1818 = vld [vmem:[%s1 + $0x3738] sm:$0xff]
    %v1819 = vld [vmem:[%s1 + $0x3740] sm:$0xff]
    %v1820 = vld [vmem:[%s1 + $0x3748] sm:$0xff]
    %v1821 = vld [vmem:[%s1 + $0x3750] sm:$0xff]
    %v1822 = vld [vmem:[%s1 + $0x3758] sm:$0xff]
    %v1823 = vld [vmem:[%s1 + $0x3760] sm:$0xff]
    %v1824 = vld [vmem:[%s1 + $0x3768] sm:$0xff]
    %v1825 = vld [vmem:[%s1 + $0x3770] sm:$0xff]
    %v1826 = vld [vmem:[%s1 + $0x3778] sm:$0xff]
    %v1827 = vld [vmem:[%s1 + $0x3780] sm:$0xff]
    %v1828 = vld [vmem:[%s1 + $0x3788] sm:$0xff]
    %v1829 = vld [vmem:[%s1 + $0x3790] sm:$0xff]
    %v1830 = vld [vmem:[%s1 + $0x3798] sm:$0xff]
    %v1831 = vld [vmem:[%s1 + $0x37a0] sm:$0xff]
    %v1832 = vld [vmem:[%s1 + $0x37a8] sm:$0xff]
    %v1833 = vld [vmem:[%s1 + $0x37b0] sm:$0xff]
    %v1834 = vld [vmem:[%s1 + $0x37b8] sm:$0xff]
    %v1835 = vld [vmem:[%s1 + $0x37c0] sm:$0xff]
    %v1836 = vld [vmem:[%s1 + $0x37c8] sm:$0xff]
    %v1837 = vld [vmem:[%s1 + $0x37d0] sm:$0xff]
    %v1838 = vld [vmem:[%s1 + $0x37d8] sm:$0xff]
    %v1839 = vld [vmem:[%s1 + $0x37e0] sm:$0xff]
    %v1840 = vld [vmem:[%s1 + $0x37e8] sm:$0xff]
    %v1841 = vld [vmem:[%s1 + $0x37f0] sm:$0xff]
    %v1842 = vld [vmem:[%s1 + $0x37f8] sm:$0xff]
    %v1843 = vld [vmem:[%s1 + $0x3800] sm:$0xff]
    %v1844 = vld [vmem:[%s1 + $0x3808] sm:$0xff]
    %v1845 = vld [vmem:[%s1 + $0x3810] sm:$0xff]
    %v1846 = vld [vmem:[%s1 + $0x3818] sm:$0xff]
    %v1847 = vld [vmem:[%s1 + $0x3820] sm:$0xff]
    %v1848 = vld [vmem:[%s1 + $0x3828] sm:$0xff]
    %v1849 = vld [vmem:[%s1 + $0x3830] sm:$0xff]
    %v1850 = vld [vmem:[%s1 + $0x3838] sm:$0xff]
    %v1851 = vld [vmem:[%s1 + $0x3840] sm:$0xff]
    %v1852 = vld [vmem:[%s1 + $0x3848] sm:$0xff]
    %v1853 = vld [vmem:[%s1 + $0x3850] sm:$0xff]
    %v1854 = vld [vmem:[%s1 + $0x3858] sm:$0xff]
    %v1855 = vld [vmem:[%s1 + $0x3860] sm:$0xff]
    %v1856 = vld [vmem:[%s1 + $0x3868] sm:$0xff]
    %v1857 = vld [vmem:[%s1 + $0x3870] sm:$0xff]
    %v1858 = vld [vmem:[%s1 + $0x3878] sm:$0xff]
    %v1859 = vld [vmem:[%s1 + $0x3880] sm:$0xff]
    %v1860 = vld [vmem:[%s1 + $0x3888] sm:$0xff]
    %v1861 = vld [vmem:[%s1 + $0x3890] sm:$0xff]
    %v1862 = vld [vmem:[%s1 + $0x3898] sm:$0xff]
    %v1863 = vld [vmem:[%s1 + $0x38a0] sm:$0xff]
    %v1864 = vld [vmem:[%s1 + $0x38a8] sm:$0xff]
    %v1865 = vld [vmem:[%s1 + $0x38b0] sm:$0xff]
    %v1866 = vld [vmem:[%s1 + $0x38b8] sm:$0xff]
    %v1867 = vld [vmem:[%s1 + $0x38c0] sm:$0xff]
    %v1868 = vld [vmem:[%s1 + $0x38c8] sm:$0xff]
    %v1869 = vld [vmem:[%s1 + $0x38d0] sm:$0xff]
    %v1870 = vld [vmem:[%s1 + $0x38d8] sm:$0xff]
    %v1871 = vld [vmem:[%s1 + $0x38e0] sm:$0xff]
    %v1872 = vld [vmem:[%s1 + $0x38e8] sm:$0xff]
    %v1873 = vld [vmem:[%s1 + $0x38f0] sm:$0xff]
    %v1874 = vld [vmem:[%s1 + $0x38f8] sm:$0xff]
    %v1875 = vld [vmem:[%s1 + $0x3900] sm:$0xff]
    %v1876 = vld [vmem:[%s1 + $0x3908] sm:$0xff]
    %v1877 = vld [vmem:[%s1 + $0x3910] sm:$0xff]
    %v1878 = vld [vmem:[%s1 + $0x3918] sm:$0xff]
    %v1879 = vld [vmem:[%s1 + $0x3920] sm:$0xff]
    %v1880 = vld [vmem:[%s1 + $0x3928] sm:$0xff]
    %v1881 = vld [vmem:[%s1 + $0x3930] sm:$0xff]
    %v1882 = vld [vmem:[%s1 + $0x3938] sm:$0xff]
    %v1883 = vld [vmem:[%s1 + $0x3940] sm:$0xff]
    %v1884 = vld [vmem:[%s1 + $0x3948] sm:$0xff]
    %v1885 = vld [vmem:[%s1 + $0x3950] sm:$0xff]
    %v1886 = vld [vmem:[%s1 + $0x3958] sm:$0xff]
    %v1887 = vld [vmem:[%s1 + $0x3960] sm:$0xff]
    %v1888 = vld [vmem:[%s1 + $0x3968] sm:$0xff]
    %v1889 = vld [vmem:[%s1 + $0x3970] sm:$0xff]
    %v1890 = vld [vmem:[%s1 + $0x3978] sm:$0xff]
    %v1891 = vld [vmem:[%s1 + $0x3980] sm:$0xff]
    %v1892 = vld [vmem:[%s1 + $0x3988] sm:$0xff]
    %v1893 = vld [vmem:[%s1 + $0x3990] sm:$0xff]
    %v1894 = vld [vmem:[%s1 + $0x3998] sm:$0xff]
    %v1895 = vld [vmem:[%s1 + $0x39a0] sm:$0xff]
    %v1896 = vld [vmem:[%s1 + $0x39a8] sm:$0xff]
    %v1897 = vld [vmem:[%s1 + $0x39b0] sm:$0xff]
    %v1898 = vld [vmem:[%s1 + $0x39b8] sm:$0xff]
    %v1899 = vld [vmem:[%s1 + $0x39c0] sm:$0xff]
    %v1900 = vld [vmem:[%s1 + $0x39c8] sm:$0xff]
    %v1901 = vld [vmem:[%s1 + $0x39d0] sm:$0xff]
    %v1902 = vld [vmem:[%s1 + $0x39d8] sm:$0xff]
    %v1903 = vld [vmem:[%s1 + $0x39e0] sm:$0xff]
    %v1904 = vld [vmem:[%s1 + $0x39e8] sm:$0xff]
    %v1905 = vld [vmem:[%s1 + $0x39f0] sm:$0xff]
    %v1906 = vld [vmem:[%s1 + $0x39f8] sm:$0xff]
    %v1907 = vld [vmem:[%s1 + $0x3a00] sm:$0xff]
    %v1908 = vld [vmem:[%s1 + $0x3a08] sm:$0xff]
    %v1909 = vld [vmem:[%s1 + $0x3a10] sm:$0xff]
    %v1910 = vld [vmem:[%s1 + $0x3a18] sm:$0xff]
    %v1911 = vld [vmem:[%s1 + $0x3a20] sm:$0xff]
    %v1912 = vld [vmem:[%s1 + $0x3a28] sm:$0xff]
    %v1913 = vld [vmem:[%s1 + $0x3a30] sm:$0xff]
    %v1914 = vld [vmem:[%s1 + $0x3a38] sm:$0xff]
    %v1915 = vld [vmem:[%s1 + $0x3a40] sm:$0xff]
    %v1916 = vld [vmem:[%s1 + $0x3a48] sm:$0xff]
    %v1917 = vld [vmem:[%s1 + $0x3a50] sm:$0xff]
    %v1918 = vld [vmem:[%s1 + $0x3a58] sm:$0xff]
    %v1919 = vld [vmem:[%s1 + $0x3a60] sm:$0xff]
    %v1920 = vld [vmem:[%s1 + $0x3a68] sm:$0xff]
    %v1921 = vld [vmem:[%s1 + $0x3a70] sm:$0xff]
    %v1922 = vld [vmem:[%s1 + $0x3a78] sm:$0xff]
    %v1923 = vld [vmem:[%s1 + $0x3a80] sm:$0xff]
    %v1924 = vld [vmem:[%s1 + $0x3a88] sm:$0xff]
    %v1925 = vld [vmem:[%s1 + $0x3a90] sm:$0xff]
    %v1926 = vld [vmem:[%s1 + $0x3a98] sm:$0xff]
    %v1927 = vld [vmem:[%s1 + $0x3aa0] sm:$0xff]
    %v1928 = vld [vmem:[%s1 + $0x3aa8] sm:$0xff]
    %v1929 = vld [vmem:[%s1 + $0x3ab0] sm:$0xff]
    %v1930 = vld [vmem:[%s1 + $0x3ab8] sm:$0xff]
    %v1931 = vld [vmem:[%s1 + $0x3ac0] sm:$0xff]
    %v1932 = vld [vmem:[%s1 + $0x3ac8] sm:$0xff]
    %v1933 = vld [vmem:[%s1 + $0x3ad0] sm:$0xff]
    %v1934 = vld [vmem:[%s1 + $0x3ad8] sm:$0xff]
    %v1935 = vld [vmem:[%s1 + $0x3ae0] sm:$0xff]
    %v1936 = vld [vmem:[%s1 + $0x3ae8] sm:$0xff]
    %v1937 = vld [vmem:[%s1 + $0x3af0] sm:$0xff]
    %v1938 = vld [vmem:[%s1 + $0x3af8] sm:$0xff]
    %v1939 = vld [vmem:[%s1 + $0x3b00] sm:$0xff]
    %v1940 = vld [vmem:[%s1 + $0x3b08] sm:$0xff]
    %v1941 = vld [vmem:[%s1 + $0x3b10] sm:$0xff]
    %v1942 = vld [vmem:[%s1 + $0x3b18] sm:$0xff]
    %v1943 = vld [vmem:[%s1 + $0x3b20] sm:$0xff]
    %v1944 = vld [vmem:[%s1 + $0x3b28] sm:$0xff]
    %v1945 = vld [vmem:[%s1 + $0x3b30] sm:$0xff]
    %v1946 = vld [vmem:[%s1 + $0x3b38] sm:$0xff]
    %v1947 = vld [vmem:[%s1 + $0x3b40] sm:$0xff]
    %v1948 = vld [vmem:[%s1 + $0x3b48] sm:$0xff]
    %v1949 = vld [vmem:[%s1 + $0x3b50] sm:$0xff]
    %v1950 = vld [vmem:[%s1 + $0x3b58] sm:$0xff]
    %v1951 = vld [vmem:[%s1 + $0x3b60] sm:$0xff]
    %v1952 = vld [vmem:[%s1 + $0x3b68] sm:$0xff]
    %v1953 = vld [vmem:[%s1 + $0x3b70] sm:$0xff]
    %v1954 = vld [vmem:[%s1 + $0x3b78] sm:$0xff]
    %v1955 = vld [vmem:[%s1 + $0x3b80] sm:$0xff]
    %v1956 = vld [vmem:[%s1 + $0x3b88] sm:$0xff]
    %v1957 = vld [vmem:[%s1 + $0x3b90] sm:$0xff]
    %v1958 = vld [vmem:[%s1 + $0x3b98] sm:$0xff]
    %v1959 = vld [vmem:[%s1 + $0x3ba0] sm:$0xff]
    %v1960 = vld [vmem:[%s1 + $0x3ba8] sm:$0xff]
    %v1961 = vld [vmem:[%s1 + $0x3bb0] sm:$0xff]
    %v1962 = vld [vmem:[%s1 + $0x3bb8] sm:$0xff]
    %v1963 = vld [vmem:[%s1 + $0x3bc0] sm:$0xff]
    %v1964 = vld [vmem:[%s1 + $0x3bc8] sm:$0xff]
    %v1965 = vld [vmem:[%s1 + $0x3bd0] sm:$0xff]
    %v1966 = vld [vmem:[%s1 + $0x3bd8] sm:$0xff]
    %v1967 = vld [vmem:[%s1 + $0x3be0] sm:$0xff]
    %v1968 = vld [vmem:[%s1 + $0x3be8] sm:$0xff]
    %v1969 = vld [vmem:[%s1 + $0x3bf0] sm:$0xff]
    %v1970 = vld [vmem:[%s1 + $0x3bf8] sm:$0xff]
    %v1971 = vld [vmem:[%s2] sm:$0x1f]
    %v1973 = vlaneseq
    %v1974 = vshrl.u32 %v1973, 7
    %v1975 = vsub.s32 0, %v1974
    %v1976 = vrot.slane %v1971, %v1975
    %v1977 = vlaneseq
    %v1978 = vshrl.u32 %v1977, 7
    %v1979 = vsub.s32 1, %v1978
    %v1980 = vrot.slane %v1971, %v1979
    %v1981 = vlaneseq
    %v1982 = vshrl.u32 %v1981, 7
    %v1983 = vsub.s32 2, %v1982
    %v1984 = vrot.slane %v1971, %v1983
    %v1985 = vlaneseq
    %v1986 = vshrl.u32 %v1985, 7
    %v1987 = vsub.s32 3, %v1986
    %v1988 = vrot.slane %v1971, %v1987
    %v1989 = vlaneseq
    %v1990 = vshrl.u32 %v1989, 7
    %v1991 = vsub.s32 4, %v1990
    %v1992 = vrot.slane %v1971, %v1991
    %1998 = vmatprep.subr.mxu0 %v52
    %1999 = vmatpush1.msra.mxu0 %v51
    %2000 = vmatprep.subr.mxu0 %v57
    %2001 = vmatpush1.msra.mxu0 %v56
    %2002 = vmatprep.subr.mxu0 %v62
    %2003 = vmatpush1.msra.mxu0 %v61
    %2004 = vmatprep.subr.mxu0 %v67
    %2005 = vmatpush1.msra.mxu0 %v66
    %2006 = vmatprep.subr.mxu0 %v72
    %2007 = vmatpush1.msra.mxu0 %v71
    %2008 = vmatprep.subr.mxu0 %v77
    %2009 = vmatpush1.msra.mxu0 %v76
    %2010 = vmatprep.subr.mxu0 %v82
    %2011 = vmatpush1.msra.mxu0 %v81
    %2012 = vmatprep.subr.mxu0 %v87
    %2013 = vmatpush1.msra.mxu0 %v86
    %2014 = vmatprep.subr.mxu0 %v92
    %2015 = vmatpush1.msra.mxu0 %v91
    %2016 = vmatprep.subr.mxu0 %v97
    %2017 = vmatpush1.msra.mxu0 %v96
    %2018 = vmatprep.subr.mxu0 %v102
    %2019 = vmatpush1.msra.mxu0 %v101
    %2020 = vmatprep.subr.mxu0 %v107
    %2021 = vmatpush1.msra.mxu0 %v106
    %2022 = vmatprep.subr.mxu0 %v112
    %2023 = vmatpush1.msra.mxu0 %v111
    %2024 = vmatprep.subr.mxu0 %v117
    %2025 = vmatpush1.msra.mxu0 %v116
    %2026 = vmatprep.subr.mxu0 %v122
    %2027 = vmatpush1.msra.mxu0 %v121
    %2028 = vmatprep.subr.mxu0 %v127
    %2029 = vmatpush1.msra.mxu0 %v126
    %2030 = vmatprep.subr.mxu0 %v132
    %2031 = vmatpush1.msra.mxu0 %v131
    %2032 = vmatprep.subr.mxu0 %v137
    %2033 = vmatpush1.msra.mxu0 %v136
    %2034 = vmatprep.subr.mxu0 %v142
    %2035 = vmatpush1.msra.mxu0 %v141
    %2036 = vmatprep.subr.mxu0 %v147
    %2037 = vmatpush1.msra.mxu0 %v146
    %2038 = vmatprep.subr.mxu0 %v152
    %2039 = vmatpush1.msra.mxu0 %v151
    %2040 = vmatprep.subr.mxu0 %v157
    %2041 = vmatpush1.msra.mxu0 %v156
    %2042 = vmatprep.subr.mxu0 %v162
    %2043 = vmatpush1.msra.mxu0 %v161
    %2044 = vmatprep.subr.mxu0 %v167
    %2045 = vmatpush1.msra.mxu0 %v166
    %2046 = vmatprep.subr.mxu0 %v172
    %2047 = vmatpush1.msra.mxu0 %v171
    %2048 = vmatprep.subr.mxu0 %v177
    %2049 = vmatpush1.msra.mxu0 %v176
    %2050 = vmatprep.subr.mxu0 %v182
    %2051 = vmatpush1.msra.mxu0 %v181
    %2052 = vmatprep.subr.mxu0 %v187
    %2053 = vmatpush1.msra.mxu0 %v186
    %2054 = vmatprep.subr.mxu0 %v192
    %2055 = vmatpush1.msra.mxu0 %v191
    %2056 = vmatprep.subr.mxu0 %v197
    %2057 = vmatpush1.msra.mxu0 %v196
    %2058 = vmatprep.subr.mxu0 %v202
    %2059 = vmatpush1.msra.mxu0 %v201
    %2060 = vmatprep.subr.mxu0 %v207
    %2061 = vmatpush1.msra.mxu0 %v206
    %2062 = vmatprep.mubr.f32.mxu0 %v28
    %2063 = vmatmul.mubr.f32.gmra.mrb[0].mxu0 %v27
    %v2064 = vpop.f32.mrb[0].mxu0
    %v2065 = vadd.f32 %v1976, %v2064
    %v2066 = vpop.f32.mrb[0].mxu0
    %v2067 = vadd.f32 %v1980, %v2066
    %2068 = vdwg.mxu0
    %2069 = vmatprep.subr.mxu0 %v212
    %2070 = vmatpush1.msra.mxu0 %v211
    %2071 = vmatprep.subr.mxu0 %v217
    %2072 = vmatpush1.msra.mxu0 %v216
    %2073 = vmatprep.subr.mxu0 %v222
    %2074 = vmatpush1.msra.mxu0 %v221
    %2075 = vmatprep.subr.mxu0 %v227
    %2076 = vmatpush1.msra.mxu0 %v226
    %2077 = vmatprep.subr.mxu0 %v232
    %2078 = vmatpush1.msra.mxu0 %v231
    %2079 = vmatprep.subr.mxu0 %v237
    %2080 = vmatpush1.msra.mxu0 %v236
    %2081 = vmatprep.subr.mxu0 %v242
    %2082 = vmatpush1.msra.mxu0 %v241
    %2083 = vmatprep.subr.mxu0 %v247
    %2084 = vmatpush1.msra.mxu0 %v246
    %2085 = vmatprep.subr.mxu0 %v252
    %2086 = vmatpush1.msra.mxu0 %v251
    %2087 = vmatprep.subr.mxu0 %v257
    %2088 = vmatpush1.msra.mxu0 %v256
    %2089 = vmatprep.subr.mxu0 %v262
    %2090 = vmatpush1.msra.mxu0 %v261
    %2091 = vmatprep.subr.mxu0 %v267
    %2092 = vmatpush1.msra.mxu0 %v266
    %2093 = vmatprep.subr.mxu0 %v272
    %2094 = vmatpush1.msra.mxu0 %v271
    %2095 = vmatprep.subr.mxu0 %v277
    %2096 = vmatpush1.msra.mxu0 %v276
    %2097 = vmatprep.subr.mxu0 %v282
    %2098 = vmatpush1.msra.mxu0 %v281
    %2099 = vmatprep.subr.mxu0 %v287
    %2100 = vmatpush1.msra.mxu0 %v286
    %2101 = vmatprep.subr.mxu0 %v292
    %2102 = vmatpush1.msra.mxu0 %v291
    %2103 = vmatprep.subr.mxu0 %v297
    %2104 = vmatpush1.msra.mxu0 %v296
    %2105 = vmatprep.subr.mxu0 %v302
    %2106 = vmatpush1.msra.mxu0 %v301
    %2107 = vmatprep.subr.mxu0 %v307
    %2108 = vmatpush1.msra.mxu0 %v306
    %2109 = vmatprep.subr.mxu0 %v312
    %2110 = vmatpush1.msra.mxu0 %v311
    %2111 = vmatprep.subr.mxu0 %v317
    %2112 = vmatpush1.msra.mxu0 %v316
    %2113 = vmatprep.subr.mxu0 %v322
    %2114 = vmatpush1.msra.mxu0 %v321
    %2115 = vmatprep.subr.mxu0 %v327
    %2116 = vmatpush1.msra.mxu0 %v326
    %2117 = vmatprep.subr.mxu0 %v332
    %2118 = vmatpush1.msra.mxu0 %v331
    %2119 = vmatprep.subr.mxu0 %v337
    %2120 = vmatpush1.msra.mxu0 %v336
    %2121 = vmatprep.subr.mxu0 %v342
    %2122 = vmatpush1.msra.mxu0 %v341
    %2123 = vmatprep.subr.mxu0 %v347
    %2124 = vmatpush1.msra.mxu0 %v346
    %2125 = vmatprep.subr.mxu0 %v352
    %2126 = vmatpush1.msra.mxu0 %v351
    %2127 = vmatprep.subr.mxu0 %v357
    %2128 = vmatpush1.msra.mxu0 %v356
    %2129 = vmatprep.subr.mxu0 %v362
    %2130 = vmatpush1.msra.mxu0 %v361
    %2131 = vmatprep.subr.mxu0 %v367
    %2132 = vmatpush1.msra.mxu0 %v366
    %2133 = vmatprep.mubr.f32.mxu0 %v30
    %2134 = vmatmul.mubr.f32.gmra.mrb[0].mxu0 %v29
    %v2135 = vpop.f32.mrb[0].mxu0
    %v2136 = vadd.f32 %v2065, %v2135
    %v2137 = vpop.f32.mrb[0].mxu0
    %v2138 = vadd.f32 %v2067, %v2137
    %2139 = vdwg.mxu0
    %2140 = vmatprep.subr.mxu0 %v372
    %2141 = vmatpush1.msra.mxu0 %v371
    %2142 = vmatprep.subr.mxu0 %v377
    %2143 = vmatpush1.msra.mxu0 %v376
    %2144 = vmatprep.subr.mxu0 %v382
    %2145 = vmatpush1.msra.mxu0 %v381
    %2146 = vmatprep.subr.mxu0 %v387
    %2147 = vmatpush1.msra.mxu0 %v386
    %2148 = vmatprep.subr.mxu0 %v392
    %2149 = vmatpush1.msra.mxu0 %v391
    %2150 = vmatprep.subr.mxu0 %v397
    %2151 = vmatpush1.msra.mxu0 %v396
    %2152 = vmatprep.subr.mxu0 %v402
    %2153 = vmatpush1.msra.mxu0 %v401
    %2154 = vmatprep.subr.mxu0 %v407
    %2155 = vmatpush1.msra.mxu0 %v406
    %2156 = vmatprep.subr.mxu0 %v412
    %2157 = vmatpush1.msra.mxu0 %v411
    %2158 = vmatprep.subr.mxu0 %v417
    %2159 = vmatpush1.msra.mxu0 %v416
    %2160 = vmatprep.subr.mxu0 %v422
    %2161 = vmatpush1.msra.mxu0 %v421
    %2162 = vmatprep.subr.mxu0 %v427
    %2163 = vmatpush1.msra.mxu0 %v426
    %2164 = vmatprep.subr.mxu0 %v432
    %2165 = vmatpush1.msra.mxu0 %v431
    %2166 = vmatprep.subr.mxu0 %v437
    %2167 = vmatpush1.msra.mxu0 %v436
    %2168 = vmatprep.subr.mxu0 %v442
    %2169 = vmatpush1.msra.mxu0 %v441
    %2170 = vmatprep.subr.mxu0 %v447
    %2171 = vmatpush1.msra.mxu0 %v446
    %2172 = vmatprep.subr.mxu0 %v452
    %2173 = vmatpush1.msra.mxu0 %v451
    %2174 = vmatprep.subr.mxu0 %v457
    %2175 = vmatpush1.msra.mxu0 %v456
    %2176 = vmatprep.subr.mxu0 %v462
    %2177 = vmatpush1.msra.mxu0 %v461
    %2178 = vmatprep.subr.mxu0 %v467
    %2179 = vmatpush1.msra.mxu0 %v466
    %2180 = vmatprep.subr.mxu0 %v472
    %2181 = vmatpush1.msra.mxu0 %v471
    %2182 = vmatprep.subr.mxu0 %v477
    %2183 = vmatpush1.msra.mxu0 %v476
    %2184 = vmatprep.subr.mxu0 %v482
    %2185 = vmatpush1.msra.mxu0 %v481
    %2186 = vmatprep.subr.mxu0 %v487
    %2187 = vmatpush1.msra.mxu0 %v486
    %2188 = vmatprep.subr.mxu0 %v492
    %2189 = vmatpush1.msra.mxu0 %v491
    %2190 = vmatprep.subr.mxu0 %v497
    %2191 = vmatpush1.msra.mxu0 %v496
    %2192 = vmatprep.subr.mxu0 %v502
    %2193 = vmatpush1.msra.mxu0 %v501
    %2194 = vmatprep.subr.mxu0 %v507
    %2195 = vmatpush1.msra.mxu0 %v506
    %2196 = vmatprep.subr.mxu0 %v512
    %2197 = vmatpush1.msra.mxu0 %v511
    %2198 = vmatprep.subr.mxu0 %v517
    %2199 = vmatpush1.msra.mxu0 %v516
    %2200 = vmatprep.subr.mxu0 %v522
    %2201 = vmatpush1.msra.mxu0 %v521
    %2202 = vmatprep.subr.mxu0 %v527
    %2203 = vmatpush1.msra.mxu0 %v526
    %2204 = vmatprep.mubr.f32.mxu0 %v32
    %2205 = vmatmul.mubr.f32.gmra.mrb[0].mxu0 %v31
    %v2206 = vpop.f32.mrb[0].mxu0
    %v2207 = vadd.f32 %v2136, %v2206
    %v2208 = vpop.f32.mrb[0].mxu0
    %v2209 = vadd.f32 %v2138, %v2208
    %2210 = vdwg.mxu0
    %2211 = vmatprep.subr.mxu0 %v532
    %2212 = vmatpush1.msra.mxu0 %v531
    %2213 = vmatprep.subr.mxu0 %v537
    %2214 = vmatpush1.msra.mxu0 %v536
    %2215 = vmatprep.subr.mxu0 %v542
    %2216 = vmatpush1.msra.mxu0 %v541
    %2217 = vmatprep.subr.mxu0 %v547
    %2218 = vmatpush1.msra.mxu0 %v546
    %2219 = vmatprep.subr.mxu0 %v552
    %2220 = vmatpush1.msra.mxu0 %v551
    %2221 = vmatprep.subr.mxu0 %v557
    %2222 = vmatpush1.msra.mxu0 %v556
    %2223 = vmatprep.subr.mxu0 %v562
    %2224 = vmatpush1.msra.mxu0 %v561
    %2225 = vmatprep.subr.mxu0 %v567
    %2226 = vmatpush1.msra.mxu0 %v566
    %2227 = vmatprep.subr.mxu0 %v572
    %2228 = vmatpush1.msra.mxu0 %v571
    %2229 = vmatprep.subr.mxu0 %v577
    %2230 = vmatpush1.msra.mxu0 %v576
    %2231 = vmatprep.subr.mxu0 %v582
    %2232 = vmatpush1.msra.mxu0 %v581
    %2233 = vmatprep.subr.mxu0 %v587
    %2234 = vmatpush1.msra.mxu0 %v586
    %2235 = vmatprep.subr.mxu0 %v592
    %2236 = vmatpush1.msra.mxu0 %v591
    %2237 = vmatprep.subr.mxu0 %v597
    %2238 = vmatpush1.msra.mxu0 %v596
    %2239 = vmatprep.subr.mxu0 %v602
    %2240 = vmatpush1.msra.mxu0 %v601
    %2241 = vmatprep.subr.mxu0 %v607
    %2242 = vmatpush1.msra.mxu0 %v606
    %2243 = vmatprep.subr.mxu0 %v612
    %2244 = vmatpush1.msra.mxu0 %v611
    %2245 = vmatprep.subr.mxu0 %v617
    %2246 = vmatpush1.msra.mxu0 %v616
    %2247 = vmatprep.subr.mxu0 %v622
    %2248 = vmatpush1.msra.mxu0 %v621
    %2249 = vmatprep.subr.mxu0 %v627
    %2250 = vmatpush1.msra.mxu0 %v626
    %2251 = vmatprep.subr.mxu0 %v632
    %2252 = vmatpush1.msra.mxu0 %v631
    %2253 = vmatprep.subr.mxu0 %v637
    %2254 = vmatpush1.msra.mxu0 %v636
    %2255 = vmatprep.subr.mxu0 %v642
    %2256 = vmatpush1.msra.mxu0 %v641
    %2257 = vmatprep.subr.mxu0 %v647
    %2258 = vmatpush1.msra.mxu0 %v646
    %2259 = vmatprep.subr.mxu0 %v652
    %2260 = vmatpush1.msra.mxu0 %v651
    %2261 = vmatprep.subr.mxu0 %v657
    %2262 = vmatpush1.msra.mxu0 %v656
    %2263 = vmatprep.subr.mxu0 %v662
    %2264 = vmatpush1.msra.mxu0 %v661
    %2265 = vmatprep.subr.mxu0 %v667
    %2266 = vmatpush1.msra.mxu0 %v666
    %2267 = vmatprep.subr.mxu0 %v672
    %2268 = vmatpush1.msra.mxu0 %v671
    %2269 = vmatprep.subr.mxu0 %v677
    %2270 = vmatpush1.msra.mxu0 %v676
    %2271 = vmatprep.subr.mxu0 %v682
    %2272 = vmatpush1.msra.mxu0 %v681
    %2273 = vmatprep.subr.mxu0 %v687
    %2274 = vmatpush1.msra.mxu0 %v686
    %2275 = vmatprep.mubr.f32.mxu0 %v34
    %2276 = vmatmul.mubr.f32.gmra.mrb[0].mxu0 %v33
    %v2277 = vpop.f32.mrb[0].mxu0
    %v2278 = vadd.f32 %v2207, %v2277
    %v2279 = vpop.f32.mrb[0].mxu0
    %v2280 = vadd.f32 %v2209, %v2279
    %2281 = vdwg.mxu0
    %2282 = vmatprep.subr.mxu0 %v692
    %2283 = vmatpush1.msra.mxu0 %v691
    %2284 = vmatprep.subr.mxu0 %v697
    %2285 = vmatpush1.msra.mxu0 %v696
    %2286 = vmatprep.subr.mxu0 %v702
    %2287 = vmatpush1.msra.mxu0 %v701
    %2288 = vmatprep.subr.mxu0 %v707
    %2289 = vmatpush1.msra.mxu0 %v706
    %2290 = vmatprep.subr.mxu0 %v712
    %2291 = vmatpush1.msra.mxu0 %v711
    %2292 = vmatprep.subr.mxu0 %v717
    %2293 = vmatpush1.msra.mxu0 %v716
    %2294 = vmatprep.subr.mxu0 %v722
    %2295 = vmatpush1.msra.mxu0 %v721
    %2296 = vmatprep.subr.mxu0 %v727
    %2297 = vmatpush1.msra.mxu0 %v726
    %2298 = vmatprep.subr.mxu0 %v732
    %2299 = vmatpush1.msra.mxu0 %v731
    %2300 = vmatprep.subr.mxu0 %v737
    %2301 = vmatpush1.msra.mxu0 %v736
    %2302 = vmatprep.subr.mxu0 %v742
    %2303 = vmatpush1.msra.mxu0 %v741
    %2304 = vmatprep.subr.mxu0 %v747
    %2305 = vmatpush1.msra.mxu0 %v746
    %2306 = vmatprep.subr.mxu0 %v752
    %2307 = vmatpush1.msra.mxu0 %v751
    %2308 = vmatprep.subr.mxu0 %v757
    %2309 = vmatpush1.msra.mxu0 %v756
    %2310 = vmatprep.subr.mxu0 %v762
    %2311 = vmatpush1.msra.mxu0 %v761
    %2312 = vmatprep.subr.mxu0 %v767
    %2313 = vmatpush1.msra.mxu0 %v766
    %2314 = vmatprep.subr.mxu0 %v772
    %2315 = vmatpush1.msra.mxu0 %v771
    %2316 = vmatprep.subr.mxu0 %v777
    %2317 = vmatpush1.msra.mxu0 %v776
    %2318 = vmatprep.subr.mxu0 %v782
    %2319 = vmatpush1.msra.mxu0 %v781
    %2320 = vmatprep.subr.mxu0 %v787
    %2321 = vmatpush1.msra.mxu0 %v786
    %2322 = vmatprep.subr.mxu0 %v792
    %2323 = vmatpush1.msra.mxu0 %v791
    %2324 = vmatprep.subr.mxu0 %v797
    %2325 = vmatpush1.msra.mxu0 %v796
    %2326 = vmatprep.subr.mxu0 %v802
    %2327 = vmatpush1.msra.mxu0 %v801
    %2328 = vmatprep.subr.mxu0 %v807
    %2329 = vmatpush1.msra.mxu0 %v806
    %2330 = vmatprep.subr.mxu0 %v812
    %2331 = vmatpush1.msra.mxu0 %v811
    %2332 = vmatprep.subr.mxu0 %v817
    %2333 = vmatpush1.msra.mxu0 %v816
    %2334 = vmatprep.subr.mxu0 %v822
    %2335 = vmatpush1.msra.mxu0 %v821
    %2336 = vmatprep.subr.mxu0 %v827
    %2337 = vmatpush1.msra.mxu0 %v826
    %2338 = vmatprep.subr.mxu0 %v832
    %2339 = vmatpush1.msra.mxu0 %v831
    %2340 = vmatprep.subr.mxu0 %v837
    %2341 = vmatpush1.msra.mxu0 %v836
    %2342 = vmatprep.subr.mxu0 %v842
    %2343 = vmatpush1.msra.mxu0 %v841
    %2344 = vmatprep.subr.mxu0 %v847
    %2345 = vmatpush1.msra.mxu0 %v846
    %2346 = vmatprep.mubr.f32.mxu0 %v36
    %2347 = vmatmul.mubr.f32.gmra.mrb[0].mxu0 %v35
    %v2348 = vpop.f32.mrb[0].mxu0
    %v2349 = vadd.f32 %v2278, %v2348
    %v2350 = vpop.f32.mrb[0].mxu0
    %v2351 = vadd.f32 %v2280, %v2350
    %2352 = vdwg.mxu0
    %2353 = vmatprep.subr.mxu0 %v852
    %2354 = vmatpush1.msra.mxu0 %v851
    %2355 = vmatprep.subr.mxu0 %v857
    %2356 = vmatpush1.msra.mxu0 %v856
    %2357 = vmatprep.subr.mxu0 %v862
    %2358 = vmatpush1.msra.mxu0 %v861
    %2359 = vmatprep.subr.mxu0 %v867
    %2360 = vmatpush1.msra.mxu0 %v866
    %2361 = vmatprep.subr.mxu0 %v872
    %2362 = vmatpush1.msra.mxu0 %v871
    %2363 = vmatprep.subr.mxu0 %v877
    %2364 = vmatpush1.msra.mxu0 %v876
    %2365 = vmatprep.subr.mxu0 %v882
    %2366 = vmatpush1.msra.mxu0 %v881
    %2367 = vmatprep.subr.mxu0 %v887
    %2368 = vmatpush1.msra.mxu0 %v886
    %2369 = vmatprep.subr.mxu0 %v892
    %2370 = vmatpush1.msra.mxu0 %v891
    %2371 = vmatprep.subr.mxu0 %v897
    %2372 = vmatpush1.msra.mxu0 %v896
    %2373 = vmatprep.subr.mxu0 %v902
    %2374 = vmatpush1.msra.mxu0 %v901
    %2375 = vmatprep.subr.mxu0 %v907
    %2376 = vmatpush1.msra.mxu0 %v906
    %2377 = vmatprep.subr.mxu0 %v912
    %2378 = vmatpush1.msra.mxu0 %v911
    %2379 = vmatprep.subr.mxu0 %v917
    %2380 = vmatpush1.msra.mxu0 %v916
    %2381 = vmatprep.subr.mxu0 %v922
    %2382 = vmatpush1.msra.mxu0 %v921
    %2383 = vmatprep.subr.mxu0 %v927
    %2384 = vmatpush1.msra.mxu0 %v926
    %2385 = vmatprep.subr.mxu0 %v932
    %2386 = vmatpush1.msra.mxu0 %v931
    %2387 = vmatprep.subr.mxu0 %v937
    %2388 = vmatpush1.msra.mxu0 %v936
    %2389 = vmatprep.subr.mxu0 %v942
    %2390 = vmatpush1.msra.mxu0 %v941
    %2391 = vmatprep.subr.mxu0 %v947
    %2392 = vmatpush1.msra.mxu0 %v946
    %2393 = vmatprep.subr.mxu0 %v952
    %2394 = vmatpush1.msra.mxu0 %v951
    %2395 = vmatprep.subr.mxu0 %v957
    %2396 = vmatpush1.msra.mxu0 %v956
    %2397 = vmatprep.subr.mxu0 %v962
    %2398 = vmatpush1.msra.mxu0 %v961
    %2399 = vmatprep.subr.mxu0 %v967
    %2400 = vmatpush1.msra.mxu0 %v966
    %2401 = vmatprep.subr.mxu0 %v972
    %2402 = vmatpush1.msra.mxu0 %v971
    %2403 = vmatprep.subr.mxu0 %v977
    %2404 = vmatpush1.msra.mxu0 %v976
    %2405 = vmatprep.subr.mxu0 %v982
    %2406 = vmatpush1.msra.mxu0 %v981
    %2407 = vmatprep.subr.mxu0 %v987
    %2408 = vmatpush1.msra.mxu0 %v986
    %2409 = vmatprep.subr.mxu0 %v992
    %2410 = vmatpush1.msra.mxu0 %v991
    %2411 = vmatprep.subr.mxu0 %v997
    %2412 = vmatpush1.msra.mxu0 %v996
    %2413 = vmatprep.subr.mxu0 %v1002
    %2414 = vmatpush1.msra.mxu0 %v1001
    %2415 = vmatprep.subr.mxu0 %v1007
    %2416 = vmatpush1.msra.mxu0 %v1006
    %2417 = vmatprep.mubr.f32.mxu0 %v38
    %2418 = vmatmul.mubr.f32.gmra.mrb[0].mxu0 %v37
    %v2419 = vpop.f32.mrb[0].mxu0
    %v2420 = vadd.f32 %v2349, %v2419
    %v2421 = vpop.f32.mrb[0].mxu0
    %v2422 = vadd.f32 %v2351, %v2421
    %2423 = vdwg.mxu0
    %2424 = vmatprep.subr.mxu0 %v1012
    %2425 = vmatpush1.msra.mxu0 %v1011
    %2426 = vmatprep.subr.mxu0 %v1017
    %2427 = vmatpush1.msra.mxu0 %v1016
    %2428 = vmatprep.subr.mxu0 %v1022
    %2429 = vmatpush1.msra.mxu0 %v1021
    %2430 = vmatprep.subr.mxu0 %v1027
    %2431 = vmatpush1.msra.mxu0 %v1026
    %2432 = vmatprep.subr.mxu0 %v1032
    %2433 = vmatpush1.msra.mxu0 %v1031
    %2434 = vmatprep.subr.mxu0 %v1037
    %2435 = vmatpush1.msra.mxu0 %v1036
    %2436 = vmatprep.subr.mxu0 %v1042
    %2437 = vmatpush1.msra.mxu0 %v1041
    %2438 = vmatprep.subr.mxu0 %v1047
    %2439 = vmatpush1.msra.mxu0 %v1046
    %2440 = vmatprep.subr.mxu0 %v1052
    %2441 = vmatpush1.msra.mxu0 %v1051
    %2442 = vmatprep.subr.mxu0 %v1057
    %2443 = vmatpush1.msra.mxu0 %v1056
    %2444 = vmatprep.subr.mxu0 %v1062
    %2445 = vmatpush1.msra.mxu0 %v1061
    %2446 = vmatprep.subr.mxu0 %v1067
    %2447 = vmatpush1.msra.mxu0 %v1066
    %2448 = vmatprep.subr.mxu0 %v1072
    %2449 = vmatpush1.msra.mxu0 %v1071
    %2450 = vmatprep.subr.mxu0 %v1077
    %2451 = vmatpush1.msra.mxu0 %v1076
    %2452 = vmatprep.subr.mxu0 %v1082
    %2453 = vmatpush1.msra.mxu0 %v1081
    %2454 = vmatprep.subr.mxu0 %v1087
    %2455 = vmatpush1.msra.mxu0 %v1086
    %2456 = vmatprep.subr.mxu0 %v1092
    %2457 = vmatpush1.msra.mxu0 %v1091
    %2458 = vmatprep.subr.mxu0 %v1097
    %2459 = vmatpush1.msra.mxu0 %v1096
    %2460 = vmatprep.subr.mxu0 %v1102
    %2461 = vmatpush1.msra.mxu0 %v1101
    %2462 = vmatprep.subr.mxu0 %v1107
    %2463 = vmatpush1.msra.mxu0 %v1106
    %2464 = vmatprep.subr.mxu0 %v1112
    %2465 = vmatpush1.msra.mxu0 %v1111
    %2466 = vmatprep.subr.mxu0 %v1117
    %2467 = vmatpush1.msra.mxu0 %v1116
    %2468 = vmatprep.subr.mxu0 %v1122
    %2469 = vmatpush1.msra.mxu0 %v1121
    %2470 = vmatprep.subr.mxu0 %v1127
    %2471 = vmatpush1.msra.mxu0 %v1126
    %2472 = vmatprep.subr.mxu0 %v1132
    %2473 = vmatpush1.msra.mxu0 %v1131
    %2474 = vmatprep.subr.mxu0 %v1137
    %2475 = vmatpush1.msra.mxu0 %v1136
    %2476 = vmatprep.subr.mxu0 %v1142
    %2477 = vmatpush1.msra.mxu0 %v1141
    %2478 = vmatprep.subr.mxu0 %v1147
    %2479 = vmatpush1.msra.mxu0 %v1146
    %2480 = vmatprep.subr.mxu0 %v1152
    %2481 = vmatpush1.msra.mxu0 %v1151
    %2482 = vmatprep.subr.mxu0 %v1157
    %2483 = vmatpush1.msra.mxu0 %v1156
    %2484 = vmatprep.subr.mxu0 %v1162
    %2485 = vmatpush1.msra.mxu0 %v1161
    %2486 = vmatprep.subr.mxu0 %v1167
    %2487 = vmatpush1.msra.mxu0 %v1166
    %2488 = vmatprep.mubr.f32.mxu0 %v40
    %2489 = vmatmul.mubr.f32.gmra.mrb[0].mxu0 %v39
    %v2490 = vpop.f32.mrb[0].mxu0
    %v2491 = vadd.f32 %v2420, %v2490
    %v2492 = vpop.f32.mrb[0].mxu0
    %v2493 = vadd.f32 %v2422, %v2492
    %2494 = vdwg.mxu0
    %2495 = vmatprep.subr.mxu0 %v1172
    %2496 = vmatpush1.msra.mxu0 %v1171
    %2497 = vmatprep.subr.mxu0 %v1177
    %2498 = vmatpush1.msra.mxu0 %v1176
    %2499 = vmatprep.subr.mxu0 %v1182
    %2500 = vmatpush1.msra.mxu0 %v1181
    %2501 = vmatprep.subr.mxu0 %v1187
    %2502 = vmatpush1.msra.mxu0 %v1186
    %2503 = vmatprep.subr.mxu0 %v1192
    %2504 = vmatpush1.msra.mxu0 %v1191
    %2505 = vmatprep.subr.mxu0 %v1197
    %2506 = vmatpush1.msra.mxu0 %v1196
    %2507 = vmatprep.subr.mxu0 %v1202
    %2508 = vmatpush1.msra.mxu0 %v1201
    %2509 = vmatprep.subr.mxu0 %v1207
    %2510 = vmatpush1.msra.mxu0 %v1206
    %2511 = vmatprep.subr.mxu0 %v1212
    %2512 = vmatpush1.msra.mxu0 %v1211
    %2513 = vmatprep.subr.mxu0 %v1217
    %2514 = vmatpush1.msra.mxu0 %v1216
    %2515 = vmatprep.subr.mxu0 %v1222
    %2516 = vmatpush1.msra.mxu0 %v1221
    %2517 = vmatprep.subr.mxu0 %v1227
    %2518 = vmatpush1.msra.mxu0 %v1226
    %2519 = vmatprep.subr.mxu0 %v1232
    %2520 = vmatpush1.msra.mxu0 %v1231
    %2521 = vmatprep.subr.mxu0 %v1237
    %2522 = vmatpush1.msra.mxu0 %v1236
    %2523 = vmatprep.subr.mxu0 %v1242
    %2524 = vmatpush1.msra.mxu0 %v1241
    %2525 = vmatprep.subr.mxu0 %v1247
    %2526 = vmatpush1.msra.mxu0 %v1246
    %2527 = vmatprep.subr.mxu0 %v1252
    %2528 = vmatpush1.msra.mxu0 %v1251
    %2529 = vmatprep.subr.mxu0 %v1257
    %2530 = vmatpush1.msra.mxu0 %v1256
    %2531 = vmatprep.subr.mxu0 %v1262
    %2532 = vmatpush1.msra.mxu0 %v1261
    %2533 = vmatprep.subr.mxu0 %v1267
    %2534 = vmatpush1.msra.mxu0 %v1266
    %2535 = vmatprep.subr.mxu0 %v1272
    %2536 = vmatpush1.msra.mxu0 %v1271
    %2537 = vmatprep.subr.mxu0 %v1277
    %2538 = vmatpush1.msra.mxu0 %v1276
    %2539 = vmatprep.subr.mxu0 %v1282
    %2540 = vmatpush1.msra.mxu0 %v1281
    %2541 = vmatprep.subr.mxu0 %v1287
    %2542 = vmatpush1.msra.mxu0 %v1286
    %2543 = vmatprep.subr.mxu0 %v1292
    %2544 = vmatpush1.msra.mxu0 %v1291
    %2545 = vmatprep.subr.mxu0 %v1297
    %2546 = vmatpush1.msra.mxu0 %v1296
    %2547 = vmatprep.subr.mxu0 %v1302
    %2548 = vmatpush1.msra.mxu0 %v1301
    %2549 = vmatprep.subr.mxu0 %v1307
    %2550 = vmatpush1.msra.mxu0 %v1306
    %2551 = vmatprep.subr.mxu0 %v1312
    %2552 = vmatpush1.msra.mxu0 %v1311
    %2553 = vmatprep.subr.mxu0 %v1317
    %2554 = vmatpush1.msra.mxu0 %v1316
    %2555 = vmatprep.subr.mxu0 %v1322
    %2556 = vmatpush1.msra.mxu0 %v1321
    %2557 = vmatprep.subr.mxu0 %v1327
    %2558 = vmatpush1.msra.mxu0 %v1326
    %2559 = vmatprep.mubr.f32.mxu0 %v42
    %2560 = vmatmul.mubr.f32.gmra.mrb[0].mxu0 %v41
    %v2561 = vpop.f32.mrb[0].mxu0
    %v2562 = vadd.f32 %v2491, %v2561
    %v2563 = vpop.f32.mrb[0].mxu0
    %v2564 = vadd.f32 %v2493, %v2563
    %2565 = vdwg.mxu0
    %2566 = vmatprep.subr.mxu0 %v1332
    %2567 = vmatpush1.msra.mxu0 %v1331
    %2568 = vmatprep.subr.mxu0 %v1337
    %2569 = vmatpush1.msra.mxu0 %v1336
    %2570 = vmatprep.subr.mxu0 %v1342
    %2571 = vmatpush1.msra.mxu0 %v1341
    %2572 = vmatprep.subr.mxu0 %v1347
    %2573 = vmatpush1.msra.mxu0 %v1346
    %2574 = vmatprep.subr.mxu0 %v1352
    %2575 = vmatpush1.msra.mxu0 %v1351
    %2576 = vmatprep.subr.mxu0 %v1357
    %2577 = vmatpush1.msra.mxu0 %v1356
    %2578 = vmatprep.subr.mxu0 %v1362
    %2579 = vmatpush1.msra.mxu0 %v1361
    %2580 = vmatprep.subr.mxu0 %v1367
    %2581 = vmatpush1.msra.mxu0 %v1366
    %2582 = vmatprep.subr.mxu0 %v1372
    %2583 = vmatpush1.msra.mxu0 %v1371
    %2584 = vmatprep.subr.mxu0 %v1377
    %2585 = vmatpush1.msra.mxu0 %v1376
    %2586 = vmatprep.subr.mxu0 %v1382
    %2587 = vmatpush1.msra.mxu0 %v1381
    %2588 = vmatprep.subr.mxu0 %v1387
    %2589 = vmatpush1.msra.mxu0 %v1386
    %2590 = vmatprep.subr.mxu0 %v1392
    %2591 = vmatpush1.msra.mxu0 %v1391
    %2592 = vmatprep.subr.mxu0 %v1397
    %2593 = vmatpush1.msra.mxu0 %v1396
    %2594 = vmatprep.subr.mxu0 %v1402
    %2595 = vmatpush1.msra.mxu0 %v1401
    %2596 = vmatprep.subr.mxu0 %v1407
    %2597 = vmatpush1.msra.mxu0 %v1406
    %2598 = vmatprep.subr.mxu0 %v1412
    %2599 = vmatpush1.msra.mxu0 %v1411
    %2600 = vmatprep.subr.mxu0 %v1417
    %2601 = vmatpush1.msra.mxu0 %v1416
    %2602 = vmatprep.subr.mxu0 %v1422
    %2603 = vmatpush1.msra.mxu0 %v1421
    %2604 = vmatprep.subr.mxu0 %v1427
    %2605 = vmatpush1.msra.mxu0 %v1426
    %2606 = vmatprep.subr.mxu0 %v1432
    %2607 = vmatpush1.msra.mxu0 %v1431
    %2608 = vmatprep.subr.mxu0 %v1437
    %2609 = vmatpush1.msra.mxu0 %v1436
    %2610 = vmatprep.subr.mxu0 %v1442
    %2611 = vmatpush1.msra.mxu0 %v1441
    %2612 = vmatprep.subr.mxu0 %v1447
    %2613 = vmatpush1.msra.mxu0 %v1446
    %2614 = vmatprep.subr.mxu0 %v1452
    %2615 = vmatpush1.msra.mxu0 %v1451
    %2616 = vmatprep.subr.mxu0 %v1457
    %2617 = vmatpush1.msra.mxu0 %v1456
    %2618 = vmatprep.subr.mxu0 %v1462
    %2619 = vmatpush1.msra.mxu0 %v1461
    %2620 = vmatprep.subr.mxu0 %v1467
    %2621 = vmatpush1.msra.mxu0 %v1466
    %2622 = vmatprep.subr.mxu0 %v1472
    %2623 = vmatpush1.msra.mxu0 %v1471
    %2624 = vmatprep.subr.mxu0 %v1477
    %2625 = vmatpush1.msra.mxu0 %v1476
    %2626 = vmatprep.subr.mxu0 %v1482
    %2627 = vmatpush1.msra.mxu0 %v1481
    %2628 = vmatprep.subr.mxu0 %v1487
    %2629 = vmatpush1.msra.mxu0 %v1486
    %2630 = vmatprep.mubr.f32.mxu0 %v44
    %2631 = vmatmul.mubr.f32.gmra.mrb[0].mxu0 %v43
    %v2632 = vpop.f32.mrb[0].mxu0
    %v2633 = vadd.f32 %v2562, %v2632
    %v2634 = vpop.f32.mrb[0].mxu0
    %v2635 = vadd.f32 %v2564, %v2634
    %2636 = vdwg.mxu0
    %2637 = vmatprep.subr.mxu0 %v1492
    %2638 = vmatpush1.msra.mxu0 %v1491
    %2639 = vmatprep.subr.mxu0 %v1497
    %2640 = vmatpush1.msra.mxu0 %v1496
    %2641 = vmatprep.subr.mxu0 %v1502
    %2642 = vmatpush1.msra.mxu0 %v1501
    %2643 = vmatprep.subr.mxu0 %v1507
    %2644 = vmatpush1.msra.mxu0 %v1506
    %2645 = vmatprep.subr.mxu0 %v1512
    %2646 = vmatpush1.msra.mxu0 %v1511
    %2647 = vmatprep.subr.mxu0 %v1517
    %2648 = vmatpush1.msra.mxu0 %v1516
    %2649 = vmatprep.subr.mxu0 %v1522
    %2650 = vmatpush1.msra.mxu0 %v1521
    %2651 = vmatprep.subr.mxu0 %v1527
    %2652 = vmatpush1.msra.mxu0 %v1526
    %2653 = vmatprep.subr.mxu0 %v1532
    %2654 = vmatpush1.msra.mxu0 %v1531
    %2655 = vmatprep.subr.mxu0 %v1537
    %2656 = vmatpush1.msra.mxu0 %v1536
    %2657 = vmatprep.subr.mxu0 %v1542
    %2658 = vmatpush1.msra.mxu0 %v1541
    %2659 = vmatprep.subr.mxu0 %v1547
    %2660 = vmatpush1.msra.mxu0 %v1546
    %2661 = vmatprep.subr.mxu0 %v1552
    %2662 = vmatpush1.msra.mxu0 %v1551
    %2663 = vmatprep.subr.mxu0 %v1557
    %2664 = vmatpush1.msra.mxu0 %v1556
    %2665 = vmatprep.subr.mxu0 %v1562
    %2666 = vmatpush1.msra.mxu0 %v1561
    %2667 = vmatprep.subr.mxu0 %v1567
    %2668 = vmatpush1.msra.mxu0 %v1566
    %2669 = vmatprep.subr.mxu0 %v1572
    %2670 = vmatpush1.msra.mxu0 %v1571
    %2671 = vmatprep.subr.mxu0 %v1577
    %2672 = vmatpush1.msra.mxu0 %v1576
    %2673 = vmatprep.subr.mxu0 %v1582
    %2674 = vmatpush1.msra.mxu0 %v1581
    %2675 = vmatprep.subr.mxu0 %v1587
    %2676 = vmatpush1.msra.mxu0 %v1586
    %2677 = vmatprep.subr.mxu0 %v1592
    %2678 = vmatpush1.msra.mxu0 %v1591
    %2679 = vmatprep.subr.mxu0 %v1597
    %2680 = vmatpush1.msra.mxu0 %v1596
    %2681 = vmatprep.subr.mxu0 %v1602
    %2682 = vmatpush1.msra.mxu0 %v1601
    %2683 = vmatprep.subr.mxu0 %v1607
    %2684 = vmatpush1.msra.mxu0 %v1606
    %2685 = vmatprep.subr.mxu0 %v1612
    %2686 = vmatpush1.msra.mxu0 %v1611
    %2687 = vmatprep.subr.mxu0 %v1617
    %2688 = vmatpush1.msra.mxu0 %v1616
    %2689 = vmatprep.subr.mxu0 %v1622
    %2690 = vmatpush1.msra.mxu0 %v1621
    %2691 = vmatprep.subr.mxu0 %v1627
    %2692 = vmatpush1.msra.mxu0 %v1626
    %2693 = vmatprep.subr.mxu0 %v1632
    %2694 = vmatpush1.msra.mxu0 %v1631
    %2695 = vmatprep.subr.mxu0 %v1637
    %2696 = vmatpush1.msra.mxu0 %v1636
    %2697 = vmatprep.subr.mxu0 %v1642
    %2698 = vmatpush1.msra.mxu0 %v1641
    %2699 = vmatprep.subr.mxu0 %v1647
    %2700 = vmatpush1.msra.mxu0 %v1646
    %2701 = vmatprep.mubr.f32.mxu0 %v46
    %2702 = vmatmul.mubr.f32.gmra.mrb[0].mxu0 %v45
    %v2703 = vpop.f32.mrb[0].mxu0
    %v2704 = vadd.f32 %v2633, %v2703
    %v2705 = vpop.f32.mrb[0].mxu0
    %v2706 = vadd.f32 %v2635, %v2705
    %2707 = vdwg.mxu0
    %2708 = vmatprep.subr.mxu0 %v1652
    %2709 = vmatpush1.msra.mxu0 %v1651
    %2710 = vmatprep.subr.mxu0 %v1657
    %2711 = vmatpush1.msra.mxu0 %v1656
    %2712 = vmatprep.subr.mxu0 %v1662
    %2713 = vmatpush1.msra.mxu0 %v1661
    %2714 = vmatprep.subr.mxu0 %v1667
    %2715 = vmatpush1.msra.mxu0 %v1666
    %2716 = vmatprep.subr.mxu0 %v1672
    %2717 = vmatpush1.msra.mxu0 %v1671
    %2718 = vmatprep.subr.mxu0 %v1677
    %2719 = vmatpush1.msra.mxu0 %v1676
    %2720 = vmatprep.subr.mxu0 %v1682
    %2721 = vmatpush1.msra.mxu0 %v1681
    %2722 = vmatprep.subr.mxu0 %v1687
    %2723 = vmatpush1.msra.mxu0 %v1686
    %2724 = vmatprep.subr.mxu0 %v1692
    %2725 = vmatpush1.msra.mxu0 %v1691
    %2726 = vmatprep.subr.mxu0 %v1697
    %2727 = vmatpush1.msra.mxu0 %v1696
    %2728 = vmatprep.subr.mxu0 %v1702
    %2729 = vmatpush1.msra.mxu0 %v1701
    %2730 = vmatprep.subr.mxu0 %v1707
    %2731 = vmatpush1.msra.mxu0 %v1706
    %2732 = vmatprep.subr.mxu0 %v1712
    %2733 = vmatpush1.msra.mxu0 %v1711
    %2734 = vmatprep.subr.mxu0 %v1717
    %2735 = vmatpush1.msra.mxu0 %v1716
    %2736 = vmatprep.subr.mxu0 %v1722
    %2737 = vmatpush1.msra.mxu0 %v1721
    %2738 = vmatprep.subr.mxu0 %v1727
    %2739 = vmatpush1.msra.mxu0 %v1726
    %2740 = vmatprep.subr.mxu0 %v1732
    %2741 = vmatpush1.msra.mxu0 %v1731
    %2742 = vmatprep.subr.mxu0 %v1737
    %2743 = vmatpush1.msra.mxu0 %v1736
    %2744 = vmatprep.subr.mxu0 %v1742
    %2745 = vmatpush1.msra.mxu0 %v1741
    %2746 = vmatprep.subr.mxu0 %v1747
    %2747 = vmatpush1.msra.mxu0 %v1746
    %2748 = vmatprep.subr.mxu0 %v1752
    %2749 = vmatpush1.msra.mxu0 %v1751
    %2750 = vmatprep.subr.mxu0 %v1757
    %2751 = vmatpush1.msra.mxu0 %v1756
    %2752 = vmatprep.subr.mxu0 %v1762
    %2753 = vmatpush1.msra.mxu0 %v1761
    %2754 = vmatprep.subr.mxu0 %v1767
    %2755 = vmatpush1.msra.mxu0 %v1766
    %2756 = vmatprep.subr.mxu0 %v1772
    %2757 = vmatpush1.msra.mxu0 %v1771
    %2758 = vmatprep.subr.mxu0 %v1777
    %2759 = vmatpush1.msra.mxu0 %v1776
    %2760 = vmatprep.subr.mxu0 %v1782
    %2761 = vmatpush1.msra.mxu0 %v1781
    %2762 = vmatprep.subr.mxu0 %v1787
    %2763 = vmatpush1.msra.mxu0 %v1786
    %2764 = vmatprep.subr.mxu0 %v1792
    %2765 = vmatpush1.msra.mxu0 %v1791
    %2766 = vmatprep.subr.mxu0 %v1797
    %2767 = vmatpush1.msra.mxu0 %v1796
    %2768 = vmatprep.subr.mxu0 %v1802
    %2769 = vmatpush1.msra.mxu0 %v1801
    %2770 = vmatprep.subr.mxu0 %v1807
    %2771 = vmatpush1.msra.mxu0 %v1806
    %2772 = vmatprep.mubr.f32.mxu0 %v48
    %2773 = vmatmul.mubr.f32.gmra.mrb[0].mxu0 %v47
    %v2774 = vpop.f32.mrb[0].mxu0
    %v2775 = vadd.f32 %v2704, %v2774
    %v2776 = vpop.f32.mrb[0].mxu0
    %v2777 = vadd.f32 %v2706, %v2776
    %2778 = vdwg.mxu0
    %2779 = vmatprep.subr.mxu0 %v1812
    %2780 = vmatpush1.msra.mxu0 %v1811
    %2781 = vmatprep.subr.mxu0 %v1817
    %2782 = vmatpush1.msra.mxu0 %v1816
    %2783 = vmatprep.subr.mxu0 %v1822
    %2784 = vmatpush1.msra.mxu0 %v1821
    %2785 = vmatprep.subr.mxu0 %v1827
    %2786 = vmatpush1.msra.mxu0 %v1826
    %2787 = vmatprep.subr.mxu0 %v1832
    %2788 = vmatpush1.msra.mxu0 %v1831
    %2789 = vmatprep.subr.mxu0 %v1837
    %2790 = vmatpush1.msra.mxu0 %v1836
    %2791 = vmatprep.subr.mxu0 %v1842
    %2792 = vmatpush1.msra.mxu0 %v1841
    %2793 = vmatprep.subr.mxu0 %v1847
    %2794 = vmatpush1.msra.mxu0 %v1846
    %2795 = vmatprep.subr.mxu0 %v1852
    %2796 = vmatpush1.msra.mxu0 %v1851
    %2797 = vmatprep.subr.mxu0 %v1857
    %2798 = vmatpush1.msra.mxu0 %v1856
    %2799 = vmatprep.subr.mxu0 %v1862
    %2800 = vmatpush1.msra.mxu0 %v1861
    %2801 = vmatprep.subr.mxu0 %v1867
    %2802 = vmatpush1.msra.mxu0 %v1866
    %2803 = vmatprep.subr.mxu0 %v1872
    %2804 = vmatpush1.msra.mxu0 %v1871
    %2805 = vmatprep.subr.mxu0 %v1877
    %2806 = vmatpush1.msra.mxu0 %v1876
    %2807 = vmatprep.subr.mxu0 %v1882
    %2808 = vmatpush1.msra.mxu0 %v1881
    %2809 = vmatprep.subr.mxu0 %v1887
    %2810 = vmatpush1.msra.mxu0 %v1886
    %2811 = vmatprep.subr.mxu0 %v1892
    %2812 = vmatpush1.msra.mxu0 %v1891
    %2813 = vmatprep.subr.mxu0 %v1897
    %2814 = vmatpush1.msra.mxu0 %v1896
    %2815 = vmatprep.subr.mxu0 %v1902
    %2816 = vmatpush1.msra.mxu0 %v1901
    %2817 = vmatprep.subr.mxu0 %v1907
    %2818 = vmatpush1.msra.mxu0 %v1906
    %2819 = vmatprep.subr.mxu0 %v1912
    %2820 = vmatpush1.msra.mxu0 %v1911
    %2821 = vmatprep.subr.mxu0 %v1917
    %2822 = vmatpush1.msra.mxu0 %v1916
    %2823 = vmatprep.subr.mxu0 %v1922
    %2824 = vmatpush1.msra.mxu0 %v1921
    %2825 = vmatprep.subr.mxu0 %v1927
    %2826 = vmatpush1.msra.mxu0 %v1926
    %2827 = vmatprep.subr.mxu0 %v1932
    %2828 = vmatpush1.msra.mxu0 %v1931
    %2829 = vmatprep.subr.mxu0 %v1937
    %2830 = vmatpush1.msra.mxu0 %v1936
    %2831 = vmatprep.subr.mxu0 %v1942
    %2832 = vmatpush1.msra.mxu0 %v1941
    %2833 = vmatprep.subr.mxu0 %v1947
    %2834 = vmatpush1.msra.mxu0 %v1946
    %2835 = vmatprep.subr.mxu0 %v1952
    %2836 = vmatpush1.msra.mxu0 %v1951
    %2837 = vmatprep.subr.mxu0 %v1957
    %2838 = vmatpush1.msra.mxu0 %v1956
    %2839 = vmatprep.subr.mxu0 %v1962
    %2840 = vmatpush1.msra.mxu0 %v1961
    %2841 = vmatprep.subr.mxu0 %v1967
    %2842 = vmatpush1.msra.mxu0 %v1966
    %2843 = vmatprep.mubr.f32.mxu0 %v50
    %2844 = vmatmul.mubr.f32.gmra.mrb[0].mxu0 %v49
    %v2845 = vpop.f32.mrb[0].mxu0
    %v2846 = vadd.f32 %v2775, %v2845
    %v2847 = vpop.f32.mrb[0].mxu0
    %v2848 = vadd.f32 %v2777, %v2847
    %2849 = vdwg.mxu0
    %2850 = vmatprep.subr.mxu0 %v54
    %2851 = vmatpush1.msra.mxu0 %v53
    %2852 = vmatprep.subr.mxu0 %v59
    %2853 = vmatpush1.msra.mxu0 %v58
    %2854 = vmatprep.subr.mxu0 %v64
    %2855 = vmatpush1.msra.mxu0 %v63
    %2856 = vmatprep.subr.mxu0 %v69
    %2857 = vmatpush1.msra.mxu0 %v68
    %2858 = vmatprep.subr.mxu0 %v74
    %2859 = vmatpush1.msra.mxu0 %v73
    %2860 = vmatprep.subr.mxu0 %v79
    %2861 = vmatpush1.msra.mxu0 %v78
    %2862 = vmatprep.subr.mxu0 %v84
    %2863 = vmatpush1.msra.mxu0 %v83
    %2864 = vmatprep.subr.mxu0 %v89
    %2865 = vmatpush1.msra.mxu0 %v88
    %2866 = vmatprep.subr.mxu0 %v94
    %2867 = vmatpush1.msra.mxu0 %v93
    %2868 = vmatprep.subr.mxu0 %v99
    %2869 = vmatpush1.msra.mxu0 %v98
    %2870 = vmatprep.subr.mxu0 %v104
    %2871 = vmatpush1.msra.mxu0 %v103
    %2872 = vmatprep.subr.mxu0 %v109
    %2873 = vmatpush1.msra.mxu0 %v108
    %2874 = vmatprep.subr.mxu0 %v114
    %2875 = vmatpush1.msra.mxu0 %v113
    %2876 = vmatprep.subr.mxu0 %v119
    %2877 = vmatpush1.msra.mxu0 %v118
    %2878 = vmatprep.subr.mxu0 %v124
    %2879 = vmatpush1.msra.mxu0 %v123
    %2880 = vmatprep.subr.mxu0 %v129
    %2881 = vmatpush1.msra.mxu0 %v128
    %2882 = vmatprep.subr.mxu0 %v134
    %2883 = vmatpush1.msra.mxu0 %v133
    %2884 = vmatprep.subr.mxu0 %v139
    %2885 = vmatpush1.msra.mxu0 %v138
    %2886 = vmatprep.subr.mxu0 %v144
    %2887 = vmatpush1.msra.mxu0 %v143
    %2888 = vmatprep.subr.mxu0 %v149
    %2889 = vmatpush1.msra.mxu0 %v148
    %2890 = vmatprep.subr.mxu0 %v154
    %2891 = vmatpush1.msra.mxu0 %v153
    %2892 = vmatprep.subr.mxu0 %v159
    %2893 = vmatpush1.msra.mxu0 %v158
    %2894 = vmatprep.subr.mxu0 %v164
    %2895 = vmatpush1.msra.mxu0 %v163
    %2896 = vmatprep.subr.mxu0 %v169
    %2897 = vmatpush1.msra.mxu0 %v168
    %2898 = vmatprep.subr.mxu0 %v174
    %2899 = vmatpush1.msra.mxu0 %v173
    %2900 = vmatprep.subr.mxu0 %v179
    %2901 = vmatpush1.msra.mxu0 %v178
    %2902 = vmatprep.subr.mxu0 %v184
    %2903 = vmatpush1.msra.mxu0 %v183
    %2904 = vmatprep.subr.mxu0 %v189
    %2905 = vmatpush1.msra.mxu0 %v188
    %2906 = vmatprep.subr.mxu0 %v194
    %2907 = vmatpush1.msra.mxu0 %v193
    %2908 = vmatprep.subr.mxu0 %v199
    %2909 = vmatpush1.msra.mxu0 %v198
    %2910 = vmatprep.subr.mxu0 %v204
    %2911 = vmatpush1.msra.mxu0 %v203
    %2912 = vmatprep.subr.mxu0 %v209
    %2913 = vmatpush1.msra.mxu0 %v208
    %2914 = vmatprep.mubr.f32.mxu0 %v28
    %2915 = vmatmul.mubr.f32.gmra.mrb[0].mxu0 %v27
    %v2916 = vpop.f32.mrb[0].mxu0
    %v2917 = vadd.f32 %v1984, %v2916
    %v2918 = vpop.f32.mrb[0].mxu0
    %v2919 = vadd.f32 %v1988, %v2918
    %2920 = vdwg.mxu0
    %2921 = vmatprep.subr.mxu0 %v214
    %2922 = vmatpush1.msra.mxu0 %v213
    %2923 = vmatprep.subr.mxu0 %v219
    %2924 = vmatpush1.msra.mxu0 %v218
    %2925 = vmatprep.subr.mxu0 %v224
    %2926 = vmatpush1.msra.mxu0 %v223
    %2927 = vmatprep.subr.mxu0 %v229
    %2928 = vmatpush1.msra.mxu0 %v228
    %2929 = vmatprep.subr.mxu0 %v234
    %2930 = vmatpush1.msra.mxu0 %v233
    %2931 = vmatprep.subr.mxu0 %v239
    %2932 = vmatpush1.msra.mxu0 %v238
    %2933 = vmatprep.subr.mxu0 %v244
    %2934 = vmatpush1.msra.mxu0 %v243
    %2935 = vmatprep.subr.mxu0 %v249
    %2936 = vmatpush1.msra.mxu0 %v248
    %2937 = vmatprep.subr.mxu0 %v254
    %2938 = vmatpush1.msra.mxu0 %v253
    %2939 = vmatprep.subr.mxu0 %v259
    %2940 = vmatpush1.msra.mxu0 %v258
    %2941 = vmatprep.subr.mxu0 %v264
    %2942 = vmatpush1.msra.mxu0 %v263
    %2943 = vmatprep.subr.mxu0 %v269
    %2944 = vmatpush1.msra.mxu0 %v268
    %2945 = vmatprep.subr.mxu0 %v274
    %2946 = vmatpush1.msra.mxu0 %v273
    %2947 = vmatprep.subr.mxu0 %v279
    %2948 = vmatpush1.msra.mxu0 %v278
    %2949 = vmatprep.subr.mxu0 %v284
    %2950 = vmatpush1.msra.mxu0 %v283
    %2951 = vmatprep.subr.mxu0 %v289
    %2952 = vmatpush1.msra.mxu0 %v288
    %2953 = vmatprep.subr.mxu0 %v294
    %2954 = vmatpush1.msra.mxu0 %v293
    %2955 = vmatprep.subr.mxu0 %v299
    %2956 = vmatpush1.msra.mxu0 %v298
    %2957 = vmatprep.subr.mxu0 %v304
    %2958 = vmatpush1.msra.mxu0 %v303
    %2959 = vmatprep.subr.mxu0 %v309
    %2960 = vmatpush1.msra.mxu0 %v308
    %2961 = vmatprep.subr.mxu0 %v314
    %2962 = vmatpush1.msra.mxu0 %v313
    %2963 = vmatprep.subr.mxu0 %v319
    %2964 = vmatpush1.msra.mxu0 %v318
    %2965 = vmatprep.subr.mxu0 %v324
    %2966 = vmatpush1.msra.mxu0 %v323
    %2967 = vmatprep.subr.mxu0 %v329
    %2968 = vmatpush1.msra.mxu0 %v328
    %2969 = vmatprep.subr.mxu0 %v334
    %2970 = vmatpush1.msra.mxu0 %v333
    %2971 = vmatprep.subr.mxu0 %v339
    %2972 = vmatpush1.msra.mxu0 %v338
    %2973 = vmatprep.subr.mxu0 %v344
    %2974 = vmatpush1.msra.mxu0 %v343
    %2975 = vmatprep.subr.mxu0 %v349
    %2976 = vmatpush1.msra.mxu0 %v348
    %2977 = vmatprep.subr.mxu0 %v354
    %2978 = vmatpush1.msra.mxu0 %v353
    %2979 = vmatprep.subr.mxu0 %v359
    %2980 = vmatpush1.msra.mxu0 %v358
    %2981 = vmatprep.subr.mxu0 %v364
    %2982 = vmatpush1.msra.mxu0 %v363
    %2983 = vmatprep.subr.mxu0 %v369
    %2984 = vmatpush1.msra.mxu0 %v368
    %2985 = vmatprep.mubr.f32.mxu0 %v30
    %2986 = vmatmul.mubr.f32.gmra.mrb[0].mxu0 %v29
    %v2987 = vpop.f32.mrb[0].mxu0
    %v2988 = vadd.f32 %v2917, %v2987
    %v2989 = vpop.f32.mrb[0].mxu0
    %v2990 = vadd.f32 %v2919, %v2989
    %2991 = vdwg.mxu0
    %2992 = vmatprep.subr.mxu0 %v374
    %2993 = vmatpush1.msra.mxu0 %v373
    %2994 = vmatprep.subr.mxu0 %v379
    %2995 = vmatpush1.msra.mxu0 %v378
    %2996 = vmatprep.subr.mxu0 %v384
    %2997 = vmatpush1.msra.mxu0 %v383
    %2998 = vmatprep.subr.mxu0 %v389
    %2999 = vmatpush1.msra.mxu0 %v388
    %3000 = vmatprep.subr.mxu0 %v394
    %3001 = vmatpush1.msra.mxu0 %v393
    %3002 = vmatprep.subr.mxu0 %v399
    %3003 = vmatpush1.msra.mxu0 %v398
    %3004 = vmatprep.subr.mxu0 %v404
    %3005 = vmatpush1.msra.mxu0 %v403
    %3006 = vmatprep.subr.mxu0 %v409
    %3007 = vmatpush1.msra.mxu0 %v408
    %3008 = vmatprep.subr.mxu0 %v414
    %3009 = vmatpush1.msra.mxu0 %v413
    %3010 = vmatprep.subr.mxu0 %v419
    %3011 = vmatpush1.msra.mxu0 %v418
    %3012 = vmatprep.subr.mxu0 %v424
    %3013 = vmatpush1.msra.mxu0 %v423
    %3014 = vmatprep.subr.mxu0 %v429
    %3015 = vmatpush1.msra.mxu0 %v428
    %3016 = vmatprep.subr.mxu0 %v434
    %3017 = vmatpush1.msra.mxu0 %v433
    %3018 = vmatprep.subr.mxu0 %v439
    %3019 = vmatpush1.msra.mxu0 %v438
    %3020 = vmatprep.subr.mxu0 %v444
    %3021 = vmatpush1.msra.mxu0 %v443
    %3022 = vmatprep.subr.mxu0 %v449
    %3023 = vmatpush1.msra.mxu0 %v448
    %3024 = vmatprep.subr.mxu0 %v454
    %3025 = vmatpush1.msra.mxu0 %v453
    %3026 = vmatprep.subr.mxu0 %v459
    %3027 = vmatpush1.msra.mxu0 %v458
    %3028 = vmatprep.subr.mxu0 %v464
    %3029 = vmatpush1.msra.mxu0 %v463
    %3030 = vmatprep.subr.mxu0 %v469
    %3031 = vmatpush1.msra.mxu0 %v468
    %3032 = vmatprep.subr.mxu0 %v474
    %3033 = vmatpush1.msra.mxu0 %v473
    %3034 = vmatprep.subr.mxu0 %v479
    %3035 = vmatpush1.msra.mxu0 %v478
    %3036 = vmatprep.subr.mxu0 %v484
    %3037 = vmatpush1.msra.mxu0 %v483
    %3038 = vmatprep.subr.mxu0 %v489
    %3039 = vmatpush1.msra.mxu0 %v488
    %3040 = vmatprep.subr.mxu0 %v494
    %3041 = vmatpush1.msra.mxu0 %v493
    %3042 = vmatprep.subr.mxu0 %v499
    %3043 = vmatpush1.msra.mxu0 %v498
    %3044 = vmatprep.subr.mxu0 %v504
    %3045 = vmatpush1.msra.mxu0 %v503
    %3046 = vmatprep.subr.mxu0 %v509
    %3047 = vmatpush1.msra.mxu0 %v508
    %3048 = vmatprep.subr.mxu0 %v514
    %3049 = vmatpush1.msra.mxu0 %v513
    %3050 = vmatprep.subr.mxu0 %v519
    %3051 = vmatpush1.msra.mxu0 %v518
    %3052 = vmatprep.subr.mxu0 %v524
    %3053 = vmatpush1.msra.mxu0 %v523
    %3054 = vmatprep.subr.mxu0 %v529
    %3055 = vmatpush1.msra.mxu0 %v528
    %3056 = vmatprep.mubr.f32.mxu0 %v32
    %3057 = vmatmul.mubr.f32.gmra.mrb[0].mxu0 %v31
    %v3058 = vpop.f32.mrb[0].mxu0
    %v3059 = vadd.f32 %v2988, %v3058
    %v3060 = vpop.f32.mrb[0].mxu0
    %v3061 = vadd.f32 %v2990, %v3060
    %3062 = vdwg.mxu0
    %3063 = vmatprep.subr.mxu0 %v534
    %3064 = vmatpush1.msra.mxu0 %v533
    %3065 = vmatprep.subr.mxu0 %v539
    %3066 = vmatpush1.msra.mxu0 %v538
    %3067 = vmatprep.subr.mxu0 %v544
    %3068 = vmatpush1.msra.mxu0 %v543
    %3069 = vmatprep.subr.mxu0 %v549
    %3070 = vmatpush1.msra.mxu0 %v548
    %3071 = vmatprep.subr.mxu0 %v554
    %3072 = vmatpush1.msra.mxu0 %v553
    %3073 = vmatprep.subr.mxu0 %v559
    %3074 = vmatpush1.msra.mxu0 %v558
    %3075 = vmatprep.subr.mxu0 %v564
    %3076 = vmatpush1.msra.mxu0 %v563
    %3077 = vmatprep.subr.mxu0 %v569
    %3078 = vmatpush1.msra.mxu0 %v568
    %3079 = vmatprep.subr.mxu0 %v574
    %3080 = vmatpush1.msra.mxu0 %v573
    %3081 = vmatprep.subr.mxu0 %v579
    %3082 = vmatpush1.msra.mxu0 %v578
    %3083 = vmatprep.subr.mxu0 %v584
    %3084 = vmatpush1.msra.mxu0 %v583
    %3085 = vmatprep.subr.mxu0 %v589
    %3086 = vmatpush1.msra.mxu0 %v588
    %3087 = vmatprep.subr.mxu0 %v594
    %3088 = vmatpush1.msra.mxu0 %v593
    %3089 = vmatprep.subr.mxu0 %v599
    %3090 = vmatpush1.msra.mxu0 %v598
    %3091 = vmatprep.subr.mxu0 %v604
    %3092 = vmatpush1.msra.mxu0 %v603
    %3093 = vmatprep.subr.mxu0 %v609
    %3094 = vmatpush1.msra.mxu0 %v608
    %3095 = vmatprep.subr.mxu0 %v614
    %3096 = vmatpush1.msra.mxu0 %v613
    %3097 = vmatprep.subr.mxu0 %v619
    %3098 = vmatpush1.msra.mxu0 %v618
    %3099 = vmatprep.subr.mxu0 %v624
    %3100 = vmatpush1.msra.mxu0 %v623
    %3101 = vmatprep.subr.mxu0 %v629
    %3102 = vmatpush1.msra.mxu0 %v628
    %3103 = vmatprep.subr.mxu0 %v634
    %3104 = vmatpush1.msra.mxu0 %v633
    %3105 = vmatprep.subr.mxu0 %v639
    %3106 = vmatpush1.msra.mxu0 %v638
    %3107 = vmatprep.subr.mxu0 %v644
    %3108 = vmatpush1.msra.mxu0 %v643
    %3109 = vmatprep.subr.mxu0 %v649
    %3110 = vmatpush1.msra.mxu0 %v648
    %3111 = vmatprep.subr.mxu0 %v654
    %3112 = vmatpush1.msra.mxu0 %v653
    %3113 = vmatprep.subr.mxu0 %v659
    %3114 = vmatpush1.msra.mxu0 %v658
    %3115 = vmatprep.subr.mxu0 %v664
    %3116 = vmatpush1.msra.mxu0 %v663
    %3117 = vmatprep.subr.mxu0 %v669
    %3118 = vmatpush1.msra.mxu0 %v668
    %3119 = vmatprep.subr.mxu0 %v674
    %3120 = vmatpush1.msra.mxu0 %v673
    %3121 = vmatprep.subr.mxu0 %v679
    %3122 = vmatpush1.msra.mxu0 %v678
    %3123 = vmatprep.subr.mxu0 %v684
    %3124 = vmatpush1.msra.mxu0 %v683
    %3125 = vmatprep.subr.mxu0 %v689
    %3126 = vmatpush1.msra.mxu0 %v688
    %3127 = vmatprep.mubr.f32.mxu0 %v34
    %3128 = vmatmul.mubr.f32.gmra.mrb[0].mxu0 %v33
    %v3129 = vpop.f32.mrb[0].mxu0
    %v3130 = vadd.f32 %v3059, %v3129
    %v3131 = vpop.f32.mrb[0].mxu0
    %v3132 = vadd.f32 %v3061, %v3131
    %3133 = vdwg.mxu0
    %3134 = vmatprep.subr.mxu0 %v694
    %3135 = vmatpush1.msra.mxu0 %v693
    %3136 = vmatprep.subr.mxu0 %v699
    %3137 = vmatpush1.msra.mxu0 %v698
    %3138 = vmatprep.subr.mxu0 %v704
    %3139 = vmatpush1.msra.mxu0 %v703
    %3140 = vmatprep.subr.mxu0 %v709
    %3141 = vmatpush1.msra.mxu0 %v708
    %3142 = vmatprep.subr.mxu0 %v714
    %3143 = vmatpush1.msra.mxu0 %v713
    %3144 = vmatprep.subr.mxu0 %v719
    %3145 = vmatpush1.msra.mxu0 %v718
    %3146 = vmatprep.subr.mxu0 %v724
    %3147 = vmatpush1.msra.mxu0 %v723
    %3148 = vmatprep.subr.mxu0 %v729
    %3149 = vmatpush1.msra.mxu0 %v728
    %3150 = vmatprep.subr.mxu0 %v734
    %3151 = vmatpush1.msra.mxu0 %v733
    %3152 = vmatprep.subr.mxu0 %v739
    %3153 = vmatpush1.msra.mxu0 %v738
    %3154 = vmatprep.subr.mxu0 %v744
    %3155 = vmatpush1.msra.mxu0 %v743
    %3156 = vmatprep.subr.mxu0 %v749
    %3157 = vmatpush1.msra.mxu0 %v748
    %3158 = vmatprep.subr.mxu0 %v754
    %3159 = vmatpush1.msra.mxu0 %v753
    %3160 = vmatprep.subr.mxu0 %v759
    %3161 = vmatpush1.msra.mxu0 %v758
    %3162 = vmatprep.subr.mxu0 %v764
    %3163 = vmatpush1.msra.mxu0 %v763
    %3164 = vmatprep.subr.mxu0 %v769
    %3165 = vmatpush1.msra.mxu0 %v768
    %3166 = vmatprep.subr.mxu0 %v774
    %3167 = vmatpush1.msra.mxu0 %v773
    %3168 = vmatprep.subr.mxu0 %v779
    %3169 = vmatpush1.msra.mxu0 %v778
    %3170 = vmatprep.subr.mxu0 %v784
    %3171 = vmatpush1.msra.mxu0 %v783
    %3172 = vmatprep.subr.mxu0 %v789
    %3173 = vmatpush1.msra.mxu0 %v788
    %3174 = vmatprep.subr.mxu0 %v794
    %3175 = vmatpush1.msra.mxu0 %v793
    %3176 = vmatprep.subr.mxu0 %v799
    %3177 = vmatpush1.msra.mxu0 %v798
    %3178 = vmatprep.subr.mxu0 %v804
    %3179 = vmatpush1.msra.mxu0 %v803
    %3180 = vmatprep.subr.mxu0 %v809
    %3181 = vmatpush1.msra.mxu0 %v808
    %3182 = vmatprep.subr.mxu0 %v814
    %3183 = vmatpush1.msra.mxu0 %v813
    %3184 = vmatprep.subr.mxu0 %v819
    %3185 = vmatpush1.msra.mxu0 %v818
    %3186 = vmatprep.subr.mxu0 %v824
    %3187 = vmatpush1.msra.mxu0 %v823
    %3188 = vmatprep.subr.mxu0 %v829
    %3189 = vmatpush1.msra.mxu0 %v828
    %3190 = vmatprep.subr.mxu0 %v834
    %3191 = vmatpush1.msra.mxu0 %v833
    %3192 = vmatprep.subr.mxu0 %v839
    %3193 = vmatpush1.msra.mxu0 %v838
    %3194 = vmatprep.subr.mxu0 %v844
    %3195 = vmatpush1.msra.mxu0 %v843
    %3196 = vmatprep.subr.mxu0 %v849
    %3197 = vmatpush1.msra.mxu0 %v848
    %3198 = vmatprep.mubr.f32.mxu0 %v36
    %3199 = vmatmul.mubr.f32.gmra.mrb[0].mxu0 %v35
    %v3200 = vpop.f32.mrb[0].mxu0
    %v3201 = vadd.f32 %v3130, %v3200
    %v3202 = vpop.f32.mrb[0].mxu0
    %v3203 = vadd.f32 %v3132, %v3202
    %3204 = vdwg.mxu0
    %3205 = vmatprep.subr.mxu0 %v854
    %3206 = vmatpush1.msra.mxu0 %v853
    %3207 = vmatprep.subr.mxu0 %v859
    %3208 = vmatpush1.msra.mxu0 %v858
    %3209 = vmatprep.subr.mxu0 %v864
    %3210 = vmatpush1.msra.mxu0 %v863
    %3211 = vmatprep.subr.mxu0 %v869
    %3212 = vmatpush1.msra.mxu0 %v868
    %3213 = vmatprep.subr.mxu0 %v874
    %3214 = vmatpush1.msra.mxu0 %v873
    %3215 = vmatprep.subr.mxu0 %v879
    %3216 = vmatpush1.msra.mxu0 %v878
    %3217 = vmatprep.subr.mxu0 %v884
    %3218 = vmatpush1.msra.mxu0 %v883
    %3219 = vmatprep.subr.mxu0 %v889
    %3220 = vmatpush1.msra.mxu0 %v888
    %3221 = vmatprep.subr.mxu0 %v894
    %3222 = vmatpush1.msra.mxu0 %v893
    %3223 = vmatprep.subr.mxu0 %v899
    %3224 = vmatpush1.msra.mxu0 %v898
    %3225 = vmatprep.subr.mxu0 %v904
    %3226 = vmatpush1.msra.mxu0 %v903
    %3227 = vmatprep.subr.mxu0 %v909
    %3228 = vmatpush1.msra.mxu0 %v908
    %3229 = vmatprep.subr.mxu0 %v914
    %3230 = vmatpush1.msra.mxu0 %v913
    %3231 = vmatprep.subr.mxu0 %v919
    %3232 = vmatpush1.msra.mxu0 %v918
    %3233 = vmatprep.subr.mxu0 %v924
    %3234 = vmatpush1.msra.mxu0 %v923
    %3235 = vmatprep.subr.mxu0 %v929
    %3236 = vmatpush1.msra.mxu0 %v928
    %3237 = vmatprep.subr.mxu0 %v934
    %3238 = vmatpush1.msra.mxu0 %v933
    %3239 = vmatprep.subr.mxu0 %v939
    %3240 = vmatpush1.msra.mxu0 %v938
    %3241 = vmatprep.subr.mxu0 %v944
    %3242 = vmatpush1.msra.mxu0 %v943
    %3243 = vmatprep.subr.mxu0 %v949
    %3244 = vmatpush1.msra.mxu0 %v948
    %3245 = vmatprep.subr.mxu0 %v954
    %3246 = vmatpush1.msra.mxu0 %v953
    %3247 = vmatprep.subr.mxu0 %v959
    %3248 = vmatpush1.msra.mxu0 %v958
    %3249 = vmatprep.subr.mxu0 %v964
    %3250 = vmatpush1.msra.mxu0 %v963
    %3251 = vmatprep.subr.mxu0 %v969
    %3252 = vmatpush1.msra.mxu0 %v968
    %3253 = vmatprep.subr.mxu0 %v974
    %3254 = vmatpush1.msra.mxu0 %v973
    %3255 = vmatprep.subr.mxu0 %v979
    %3256 = vmatpush1.msra.mxu0 %v978
    %3257 = vmatprep.subr.mxu0 %v984
    %3258 = vmatpush1.msra.mxu0 %v983
    %3259 = vmatprep.subr.mxu0 %v989
    %3260 = vmatpush1.msra.mxu0 %v988
    %3261 = vmatprep.subr.mxu0 %v994
    %3262 = vmatpush1.msra.mxu0 %v993
    %3263 = vmatprep.subr.mxu0 %v999
    %3264 = vmatpush1.msra.mxu0 %v998
    %3265 = vmatprep.subr.mxu0 %v1004
    %3266 = vmatpush1.msra.mxu0 %v1003
    %3267 = vmatprep.subr.mxu0 %v1009
    %3268 = vmatpush1.msra.mxu0 %v1008
    %3269 = vmatprep.mubr.f32.mxu0 %v38
    %3270 = vmatmul.mubr.f32.gmra.mrb[0].mxu0 %v37
    %v3271 = vpop.f32.mrb[0].mxu0
    %v3272 = vadd.f32 %v3201, %v3271
    %v3273 = vpop.f32.mrb[0].mxu0
    %v3274 = vadd.f32 %v3203, %v3273
    %3275 = vdwg.mxu0
    %3276 = vmatprep.subr.mxu0 %v1014
    %3277 = vmatpush1.msra.mxu0 %v1013
    %3278 = vmatprep.subr.mxu0 %v1019
    %3279 = vmatpush1.msra.mxu0 %v1018
    %3280 = vmatprep.subr.mxu0 %v1024
    %3281 = vmatpush1.msra.mxu0 %v1023
    %3282 = vmatprep.subr.mxu0 %v1029
    %3283 = vmatpush1.msra.mxu0 %v1028
    %3284 = vmatprep.subr.mxu0 %v1034
    %3285 = vmatpush1.msra.mxu0 %v1033
    %3286 = vmatprep.subr.mxu0 %v1039
    %3287 = vmatpush1.msra.mxu0 %v1038
    %3288 = vmatprep.subr.mxu0 %v1044
    %3289 = vmatpush1.msra.mxu0 %v1043
    %3290 = vmatprep.subr.mxu0 %v1049
    %3291 = vmatpush1.msra.mxu0 %v1048
    %3292 = vmatprep.subr.mxu0 %v1054
    %3293 = vmatpush1.msra.mxu0 %v1053
    %3294 = vmatprep.subr.mxu0 %v1059
    %3295 = vmatpush1.msra.mxu0 %v1058
    %3296 = vmatprep.subr.mxu0 %v1064
    %3297 = vmatpush1.msra.mxu0 %v1063
    %3298 = vmatprep.subr.mxu0 %v1069
    %3299 = vmatpush1.msra.mxu0 %v1068
    %3300 = vmatprep.subr.mxu0 %v1074
    %3301 = vmatpush1.msra.mxu0 %v1073
    %3302 = vmatprep.subr.mxu0 %v1079
    %3303 = vmatpush1.msra.mxu0 %v1078
    %3304 = vmatprep.subr.mxu0 %v1084
    %3305 = vmatpush1.msra.mxu0 %v1083
    %3306 = vmatprep.subr.mxu0 %v1089
    %3307 = vmatpush1.msra.mxu0 %v1088
    %3308 = vmatprep.subr.mxu0 %v1094
    %3309 = vmatpush1.msra.mxu0 %v1093
    %3310 = vmatprep.subr.mxu0 %v1099
    %3311 = vmatpush1.msra.mxu0 %v1098
    %3312 = vmatprep.subr.mxu0 %v1104
    %3313 = vmatpush1.msra.mxu0 %v1103
    %3314 = vmatprep.subr.mxu0 %v1109
    %3315 = vmatpush1.msra.mxu0 %v1108
    %3316 = vmatprep.subr.mxu0 %v1114
    %3317 = vmatpush1.msra.mxu0 %v1113
    %3318 = vmatprep.subr.mxu0 %v1119
    %3319 = vmatpush1.msra.mxu0 %v1118
    %3320 = vmatprep.subr.mxu0 %v1124
    %3321 = vmatpush1.msra.mxu0 %v1123
    %3322 = vmatprep.subr.mxu0 %v1129
    %3323 = vmatpush1.msra.mxu0 %v1128
    %3324 = vmatprep.subr.mxu0 %v1134
    %3325 = vmatpush1.msra.mxu0 %v1133
    %3326 = vmatprep.subr.mxu0 %v1139
    %3327 = vmatpush1.msra.mxu0 %v1138
    %3328 = vmatprep.subr.mxu0 %v1144
    %3329 = vmatpush1.msra.mxu0 %v1143
    %3330 = vmatprep.subr.mxu0 %v1149
    %3331 = vmatpush1.msra.mxu0 %v1148
    %3332 = vmatprep.subr.mxu0 %v1154
    %3333 = vmatpush1.msra.mxu0 %v1153
    %3334 = vmatprep.subr.mxu0 %v1159
    %3335 = vmatpush1.msra.mxu0 %v1158
    %3336 = vmatprep.subr.mxu0 %v1164
    %3337 = vmatpush1.msra.mxu0 %v1163
    %3338 = vmatprep.subr.mxu0 %v1169
    %3339 = vmatpush1.msra.mxu0 %v1168
    %3340 = vmatprep.mubr.f32.mxu0 %v40
    %3341 = vmatmul.mubr.f32.gmra.mrb[0].mxu0 %v39
    %v3342 = vpop.f32.mrb[0].mxu0
    %v3343 = vadd.f32 %v3272, %v3342
    %v3344 = vpop.f32.mrb[0].mxu0
    %v3345 = vadd.f32 %v3274, %v3344
    %3346 = vdwg.mxu0
    %3347 = vmatprep.subr.mxu0 %v1174
    %3348 = vmatpush1.msra.mxu0 %v1173
    %3349 = vmatprep.subr.mxu0 %v1179
    %3350 = vmatpush1.msra.mxu0 %v1178
    %3351 = vmatprep.subr.mxu0 %v1184
    %3352 = vmatpush1.msra.mxu0 %v1183
    %3353 = vmatprep.subr.mxu0 %v1189
    %3354 = vmatpush1.msra.mxu0 %v1188
    %3355 = vmatprep.subr.mxu0 %v1194
    %3356 = vmatpush1.msra.mxu0 %v1193
    %3357 = vmatprep.subr.mxu0 %v1199
    %3358 = vmatpush1.msra.mxu0 %v1198
    %3359 = vmatprep.subr.mxu0 %v1204
    %3360 = vmatpush1.msra.mxu0 %v1203
    %3361 = vmatprep.subr.mxu0 %v1209
    %3362 = vmatpush1.msra.mxu0 %v1208
    %3363 = vmatprep.subr.mxu0 %v1214
    %3364 = vmatpush1.msra.mxu0 %v1213
    %3365 = vmatprep.subr.mxu0 %v1219
    %3366 = vmatpush1.msra.mxu0 %v1218
    %3367 = vmatprep.subr.mxu0 %v1224
    %3368 = vmatpush1.msra.mxu0 %v1223
    %3369 = vmatprep.subr.mxu0 %v1229
    %3370 = vmatpush1.msra.mxu0 %v1228
    %3371 = vmatprep.subr.mxu0 %v1234
    %3372 = vmatpush1.msra.mxu0 %v1233
    %3373 = vmatprep.subr.mxu0 %v1239
    %3374 = vmatpush1.msra.mxu0 %v1238
    %3375 = vmatprep.subr.mxu0 %v1244
    %3376 = vmatpush1.msra.mxu0 %v1243
    %3377 = vmatprep.subr.mxu0 %v1249
    %3378 = vmatpush1.msra.mxu0 %v1248
    %3379 = vmatprep.subr.mxu0 %v1254
    %3380 = vmatpush1.msra.mxu0 %v1253
    %3381 = vmatprep.subr.mxu0 %v1259
    %3382 = vmatpush1.msra.mxu0 %v1258
    %3383 = vmatprep.subr.mxu0 %v1264
    %3384 = vmatpush1.msra.mxu0 %v1263
    %3385 = vmatprep.subr.mxu0 %v1269
    %3386 = vmatpush1.msra.mxu0 %v1268
    %3387 = vmatprep.subr.mxu0 %v1274
    %3388 = vmatpush1.msra.mxu0 %v1273
    %3389 = vmatprep.subr.mxu0 %v1279
    %3390 = vmatpush1.msra.mxu0 %v1278
    %3391 = vmatprep.subr.mxu0 %v1284
    %3392 = vmatpush1.msra.mxu0 %v1283
    %3393 = vmatprep.subr.mxu0 %v1289
    %3394 = vmatpush1.msra.mxu0 %v1288
    %3395 = vmatprep.subr.mxu0 %v1294
    %3396 = vmatpush1.msra.mxu0 %v1293
    %3397 = vmatprep.subr.mxu0 %v1299
    %3398 = vmatpush1.msra.mxu0 %v1298
    %3399 = vmatprep.subr.mxu0 %v1304
    %3400 = vmatpush1.msra.mxu0 %v1303
    %3401 = vmatprep.subr.mxu0 %v1309
    %3402 = vmatpush1.msra.mxu0 %v1308
    %3403 = vmatprep.subr.mxu0 %v1314
    %3404 = vmatpush1.msra.mxu0 %v1313
    %3405 = vmatprep.subr.mxu0 %v1319
    %3406 = vmatpush1.msra.mxu0 %v1318
    %3407 = vmatprep.subr.mxu0 %v1324
    %3408 = vmatpush1.msra.mxu0 %v1323
    %3409 = vmatprep.subr.mxu0 %v1329
    %3410 = vmatpush1.msra.mxu0 %v1328
    %3411 = vmatprep.mubr.f32.mxu0 %v42
    %3412 = vmatmul.mubr.f32.gmra.mrb[0].mxu0 %v41
    %v3413 = vpop.f32.mrb[0].mxu0
    %v3414 = vadd.f32 %v3343, %v3413
    %v3415 = vpop.f32.mrb[0].mxu0
    %v3416 = vadd.f32 %v3345, %v3415
    %3417 = vdwg.mxu0
    %3418 = vmatprep.subr.mxu0 %v1334
    %3419 = vmatpush1.msra.mxu0 %v1333
    %3420 = vmatprep.subr.mxu0 %v1339
    %3421 = vmatpush1.msra.mxu0 %v1338
    %3422 = vmatprep.subr.mxu0 %v1344
    %3423 = vmatpush1.msra.mxu0 %v1343
    %3424 = vmatprep.subr.mxu0 %v1349
    %3425 = vmatpush1.msra.mxu0 %v1348
    %3426 = vmatprep.subr.mxu0 %v1354
    %3427 = vmatpush1.msra.mxu0 %v1353
    %3428 = vmatprep.subr.mxu0 %v1359
    %3429 = vmatpush1.msra.mxu0 %v1358
    %3430 = vmatprep.subr.mxu0 %v1364
    %3431 = vmatpush1.msra.mxu0 %v1363
    %3432 = vmatprep.subr.mxu0 %v1369
    %3433 = vmatpush1.msra.mxu0 %v1368
    %3434 = vmatprep.subr.mxu0 %v1374
    %3435 = vmatpush1.msra.mxu0 %v1373
    %3436 = vmatprep.subr.mxu0 %v1379
    %3437 = vmatpush1.msra.mxu0 %v1378
    %3438 = vmatprep.subr.mxu0 %v1384
    %3439 = vmatpush1.msra.mxu0 %v1383
    %3440 = vmatprep.subr.mxu0 %v1389
    %3441 = vmatpush1.msra.mxu0 %v1388
    %3442 = vmatprep.subr.mxu0 %v1394
    %3443 = vmatpush1.msra.mxu0 %v1393
    %3444 = vmatprep.subr.mxu0 %v1399
    %3445 = vmatpush1.msra.mxu0 %v1398
    %3446 = vmatprep.subr.mxu0 %v1404
    %3447 = vmatpush1.msra.mxu0 %v1403
    %3448 = vmatprep.subr.mxu0 %v1409
    %3449 = vmatpush1.msra.mxu0 %v1408
    %3450 = vmatprep.subr.mxu0 %v1414
    %3451 = vmatpush1.msra.mxu0 %v1413
    %3452 = vmatprep.subr.mxu0 %v1419
    %3453 = vmatpush1.msra.mxu0 %v1418
    %3454 = vmatprep.subr.mxu0 %v1424
    %3455 = vmatpush1.msra.mxu0 %v1423
    %3456 = vmatprep.subr.mxu0 %v1429
    %3457 = vmatpush1.msra.mxu0 %v1428
    %3458 = vmatprep.subr.mxu0 %v1434
    %3459 = vmatpush1.msra.mxu0 %v1433
    %3460 = vmatprep.subr.mxu0 %v1439
    %3461 = vmatpush1.msra.mxu0 %v1438
    %3462 = vmatprep.subr.mxu0 %v1444
    %3463 = vmatpush1.msra.mxu0 %v1443
    %3464 = vmatprep.subr.mxu0 %v1449
    %3465 = vmatpush1.msra.mxu0 %v1448
    %3466 = vmatprep.subr.mxu0 %v1454
    %3467 = vmatpush1.msra.mxu0 %v1453
    %3468 = vmatprep.subr.mxu0 %v1459
    %3469 = vmatpush1.msra.mxu0 %v1458
    %3470 = vmatprep.subr.mxu0 %v1464
    %3471 = vmatpush1.msra.mxu0 %v1463
    %3472 = vmatprep.subr.mxu0 %v1469
    %3473 = vmatpush1.msra.mxu0 %v1468
    %3474 = vmatprep.subr.mxu0 %v1474
    %3475 = vmatpush1.msra.mxu0 %v1473
    %3476 = vmatprep.subr.mxu0 %v1479
    %3477 = vmatpush1.msra.mxu0 %v1478
    %3478 = vmatprep.subr.mxu0 %v1484
    %3479 = vmatpush1.msra.mxu0 %v1483
    %3480 = vmatprep.subr.mxu0 %v1489
    %3481 = vmatpush1.msra.mxu0 %v1488
    %3482 = vmatprep.mubr.f32.mxu0 %v44
    %3483 = vmatmul.mubr.f32.gmra.mrb[0].mxu0 %v43
    %v3484 = vpop.f32.mrb[0].mxu0
    %v3485 = vadd.f32 %v3414, %v3484
    %v3486 = vpop.f32.mrb[0].mxu0
    %v3487 = vadd.f32 %v3416, %v3486
    %3488 = vdwg.mxu0
    %3489 = vmatprep.subr.mxu0 %v1494
    %3490 = vmatpush1.msra.mxu0 %v1493
    %3491 = vmatprep.subr.mxu0 %v1499
    %3492 = vmatpush1.msra.mxu0 %v1498
    %3493 = vmatprep.subr.mxu0 %v1504
    %3494 = vmatpush1.msra.mxu0 %v1503
    %3495 = vmatprep.subr.mxu0 %v1509
    %3496 = vmatpush1.msra.mxu0 %v1508
    %3497 = vmatprep.subr.mxu0 %v1514
    %3498 = vmatpush1.msra.mxu0 %v1513
    %3499 = vmatprep.subr.mxu0 %v1519
    %3500 = vmatpush1.msra.mxu0 %v1518
    %3501 = vmatprep.subr.mxu0 %v1524
    %3502 = vmatpush1.msra.mxu0 %v1523
    %3503 = vmatprep.subr.mxu0 %v1529
    %3504 = vmatpush1.msra.mxu0 %v1528
    %3505 = vmatprep.subr.mxu0 %v1534
    %3506 = vmatpush1.msra.mxu0 %v1533
    %3507 = vmatprep.subr.mxu0 %v1539
    %3508 = vmatpush1.msra.mxu0 %v1538
    %3509 = vmatprep.subr.mxu0 %v1544
    %3510 = vmatpush1.msra.mxu0 %v1543
    %3511 = vmatprep.subr.mxu0 %v1549
    %3512 = vmatpush1.msra.mxu0 %v1548
    %3513 = vmatprep.subr.mxu0 %v1554
    %3514 = vmatpush1.msra.mxu0 %v1553
    %3515 = vmatprep.subr.mxu0 %v1559
    %3516 = vmatpush1.msra.mxu0 %v1558
    %3517 = vmatprep.subr.mxu0 %v1564
    %3518 = vmatpush1.msra.mxu0 %v1563
    %3519 = vmatprep.subr.mxu0 %v1569
    %3520 = vmatpush1.msra.mxu0 %v1568
    %3521 = vmatprep.subr.mxu0 %v1574
    %3522 = vmatpush1.msra.mxu0 %v1573
    %3523 = vmatprep.subr.mxu0 %v1579
    %3524 = vmatpush1.msra.mxu0 %v1578
    %3525 = vmatprep.subr.mxu0 %v1584
    %3526 = vmatpush1.msra.mxu0 %v1583
    %3527 = vmatprep.subr.mxu0 %v1589
    %3528 = vmatpush1.msra.mxu0 %v1588
    %3529 = vmatprep.subr.mxu0 %v1594
    %3530 = vmatpush1.msra.mxu0 %v1593
    %3531 = vmatprep.subr.mxu0 %v1599
    %3532 = vmatpush1.msra.mxu0 %v1598
    %3533 = vmatprep.subr.mxu0 %v1604
    %3534 = vmatpush1.msra.mxu0 %v1603
    %3535 = vmatprep.subr.mxu0 %v1609
    %3536 = vmatpush1.msra.mxu0 %v1608
    %3537 = vmatprep.subr.mxu0 %v1614
    %3538 = vmatpush1.msra.mxu0 %v1613
    %3539 = vmatprep.subr.mxu0 %v1619
    %3540 = vmatpush1.msra.mxu0 %v1618
    %3541 = vmatprep.subr.mxu0 %v1624
    %3542 = vmatpush1.msra.mxu0 %v1623
    %3543 = vmatprep.subr.mxu0 %v1629
    %3544 = vmatpush1.msra.mxu0 %v1628
    %3545 = vmatprep.subr.mxu0 %v1634
    %3546 = vmatpush1.msra.mxu0 %v1633
    %3547 = vmatprep.subr.mxu0 %v1639
    %3548 = vmatpush1.msra.mxu0 %v1638
    %3549 = vmatprep.subr.mxu0 %v1644
    %3550 = vmatpush1.msra.mxu0 %v1643
    %3551 = vmatprep.subr.mxu0 %v1649
    %3552 = vmatpush1.msra.mxu0 %v1648
    %3553 = vmatprep.mubr.f32.mxu0 %v46
    %3554 = vmatmul.mubr.f32.gmra.mrb[0].mxu0 %v45
    %v3555 = vpop.f32.mrb[0].mxu0
    %v3556 = vadd.f32 %v3485, %v3555
    %v3557 = vpop.f32.mrb[0].mxu0
    %v3558 = vadd.f32 %v3487, %v3557
    %3559 = vdwg.mxu0
    %3560 = vmatprep.subr.mxu0 %v1654
    %3561 = vmatpush1.msra.mxu0 %v1653
    %3562 = vmatprep.subr.mxu0 %v1659
    %3563 = vmatpush1.msra.mxu0 %v1658
    %3564 = vmatprep.subr.mxu0 %v1664
    %3565 = vmatpush1.msra.mxu0 %v1663
    %3566 = vmatprep.subr.mxu0 %v1669
    %3567 = vmatpush1.msra.mxu0 %v1668
    %3568 = vmatprep.subr.mxu0 %v1674
    %3569 = vmatpush1.msra.mxu0 %v1673
    %3570 = vmatprep.subr.mxu0 %v1679
    %3571 = vmatpush1.msra.mxu0 %v1678
    %3572 = vmatprep.subr.mxu0 %v1684
    %3573 = vmatpush1.msra.mxu0 %v1683
    %3574 = vmatprep.subr.mxu0 %v1689
    %3575 = vmatpush1.msra.mxu0 %v1688
    %3576 = vmatprep.subr.mxu0 %v1694
    %3577 = vmatpush1.msra.mxu0 %v1693
    %3578 = vmatprep.subr.mxu0 %v1699
    %3579 = vmatpush1.msra.mxu0 %v1698
    %3580 = vmatprep.subr.mxu0 %v1704
    %3581 = vmatpush1.msra.mxu0 %v1703
    %3582 = vmatprep.subr.mxu0 %v1709
    %3583 = vmatpush1.msra.mxu0 %v1708
    %3584 = vmatprep.subr.mxu0 %v1714
    %3585 = vmatpush1.msra.mxu0 %v1713
    %3586 = vmatprep.subr.mxu0 %v1719
    %3587 = vmatpush1.msra.mxu0 %v1718
    %3588 = vmatprep.subr.mxu0 %v1724
    %3589 = vmatpush1.msra.mxu0 %v1723
    %3590 = vmatprep.subr.mxu0 %v1729
    %3591 = vmatpush1.msra.mxu0 %v1728
    %3592 = vmatprep.subr.mxu0 %v1734
    %3593 = vmatpush1.msra.mxu0 %v1733
    %3594 = vmatprep.subr.mxu0 %v1739
    %3595 = vmatpush1.msra.mxu0 %v1738
    %3596 = vmatprep.subr.mxu0 %v1744
    %3597 = vmatpush1.msra.mxu0 %v1743
    %3598 = vmatprep.subr.mxu0 %v1749
    %3599 = vmatpush1.msra.mxu0 %v1748
    %3600 = vmatprep.subr.mxu0 %v1754
    %3601 = vmatpush1.msra.mxu0 %v1753
    %3602 = vmatprep.subr.mxu0 %v1759
    %3603 = vmatpush1.msra.mxu0 %v1758
    %3604 = vmatprep.subr.mxu0 %v1764
    %3605 = vmatpush1.msra.mxu0 %v1763
    %3606 = vmatprep.subr.mxu0 %v1769
    %3607 = vmatpush1.msra.mxu0 %v1768
    %3608 = vmatprep.subr.mxu0 %v1774
    %3609 = vmatpush1.msra.mxu0 %v1773
    %3610 = vmatprep.subr.mxu0 %v1779
    %3611 = vmatpush1.msra.mxu0 %v1778
    %3612 = vmatprep.subr.mxu0 %v1784
    %3613 = vmatpush1.msra.mxu0 %v1783
    %3614 = vmatprep.subr.mxu0 %v1789
    %3615 = vmatpush1.msra.mxu0 %v1788
    %3616 = vmatprep.subr.mxu0 %v1794
    %3617 = vmatpush1.msra.mxu0 %v1793
    %3618 = vmatprep.subr.mxu0 %v1799
    %3619 = vmatpush1.msra.mxu0 %v1798
    %3620 = vmatprep.subr.mxu0 %v1804
    %3621 = vmatpush1.msra.mxu0 %v1803
    %3622 = vmatprep.subr.mxu0 %v1809
    %3623 = vmatpush1.msra.mxu0 %v1808
    %3624 = vmatprep.mubr.f32.mxu0 %v48
    %3625 = vmatmul.mubr.f32.gmra.mrb[0].mxu0 %v47
    %v3626 = vpop.f32.mrb[0].mxu0
    %v3627 = vadd.f32 %v3556, %v3626
    %v3628 = vpop.f32.mrb[0].mxu0
    %v3629 = vadd.f32 %v3558, %v3628
    %3630 = vdwg.mxu0
    %3631 = vmatprep.subr.mxu0 %v1814
    %3632 = vmatpush1.msra.mxu0 %v1813
    %3633 = vmatprep.subr.mxu0 %v1819
    %3634 = vmatpush1.msra.mxu0 %v1818
    %3635 = vmatprep.subr.mxu0 %v1824
    %3636 = vmatpush1.msra.mxu0 %v1823
    %3637 = vmatprep.subr.mxu0 %v1829
    %3638 = vmatpush1.msra.mxu0 %v1828
    %3639 = vmatprep.subr.mxu0 %v1834
    %3640 = vmatpush1.msra.mxu0 %v1833
    %3641 = vmatprep.subr.mxu0 %v1839
    %3642 = vmatpush1.msra.mxu0 %v1838
    %3643 = vmatprep.subr.mxu0 %v1844
    %3644 = vmatpush1.msra.mxu0 %v1843
    %3645 = vmatprep.subr.mxu0 %v1849
    %3646 = vmatpush1.msra.mxu0 %v1848
    %3647 = vmatprep.subr.mxu0 %v1854
    %3648 = vmatpush1.msra.mxu0 %v1853
    %3649 = vmatprep.subr.mxu0 %v1859
    %3650 = vmatpush1.msra.mxu0 %v1858
    %3651 = vmatprep.subr.mxu0 %v1864
    %3652 = vmatpush1.msra.mxu0 %v1863
    %3653 = vmatprep.subr.mxu0 %v1869
    %3654 = vmatpush1.msra.mxu0 %v1868
    %3655 = vmatprep.subr.mxu0 %v1874
    %3656 = vmatpush1.msra.mxu0 %v1873
    %3657 = vmatprep.subr.mxu0 %v1879
    %3658 = vmatpush1.msra.mxu0 %v1878
    %3659 = vmatprep.subr.mxu0 %v1884
    %3660 = vmatpush1.msra.mxu0 %v1883
    %3661 = vmatprep.subr.mxu0 %v1889
    %3662 = vmatpush1.msra.mxu0 %v1888
    %3663 = vmatprep.subr.mxu0 %v1894
    %3664 = vmatpush1.msra.mxu0 %v1893
    %3665 = vmatprep.subr.mxu0 %v1899
    %3666 = vmatpush1.msra.mxu0 %v1898
    %3667 = vmatprep.subr.mxu0 %v1904
    %3668 = vmatpush1.msra.mxu0 %v1903
    %3669 = vmatprep.subr.mxu0 %v1909
    %3670 = vmatpush1.msra.mxu0 %v1908
    %3671 = vmatprep.subr.mxu0 %v1914
    %3672 = vmatpush1.msra.mxu0 %v1913
    %3673 = vmatprep.subr.mxu0 %v1919
    %3674 = vmatpush1.msra.mxu0 %v1918
    %3675 = vmatprep.subr.mxu0 %v1924
    %3676 = vmatpush1.msra.mxu0 %v1923
    %3677 = vmatprep.subr.mxu0 %v1929
    %3678 = vmatpush1.msra.mxu0 %v1928
    %3679 = vmatprep.subr.mxu0 %v1934
    %3680 = vmatpush1.msra.mxu0 %v1933
    %3681 = vmatprep.subr.mxu0 %v1939
    %3682 = vmatpush1.msra.mxu0 %v1938
    %3683 = vmatprep.subr.mxu0 %v1944
    %3684 = vmatpush1.msra.mxu0 %v1943
    %3685 = vmatprep.subr.mxu0 %v1949
    %3686 = vmatpush1.msra.mxu0 %v1948
    %3687 = vmatprep.subr.mxu0 %v1954
    %3688 = vmatpush1.msra.mxu0 %v1953
    %3689 = vmatprep.subr.mxu0 %v1959
    %3690 = vmatpush1.msra.mxu0 %v1958
    %3691 = vmatprep.subr.mxu0 %v1964
    %3692 = vmatpush1.msra.mxu0 %v1963
    %3693 = vmatprep.subr.mxu0 %v1969
    %3694 = vmatpush1.msra.mxu0 %v1968
    %3695 = vmatprep.mubr.f32.mxu0 %v50
    %3696 = vmatmul.mubr.f32.gmra.mrb[0].mxu0 %v49
    %v3697 = vpop.f32.mrb[0].mxu0
    %v3698 = vadd.f32 %v3627, %v3697
    %v3699 = vpop.f32.mrb[0].mxu0
    %v3700 = vadd.f32 %v3629, %v3699
    %3701 = vdwg.mxu0
    %3702 = vmatprep.subr.mxu0 0.0
    %3703 = vmatpush1.msra.mxu0 %v55
    %3704 = vmatprep.subr.mxu0 0.0
    %3705 = vmatpush1.msra.mxu0 %v60
    %3706 = vmatprep.subr.mxu0 0.0
    %3707 = vmatpush1.msra.mxu0 %v65
    %3708 = vmatprep.subr.mxu0 0.0
    %3709 = vmatpush1.msra.mxu0 %v70
    %3710 = vmatprep.subr.mxu0 0.0
    %3711 = vmatpush1.msra.mxu0 %v75
    %3712 = vmatprep.subr.mxu0 0.0
    %3713 = vmatpush1.msra.mxu0 %v80
    %3714 = vmatprep.subr.mxu0 0.0
    %3715 = vmatpush1.msra.mxu0 %v85
    %3716 = vmatprep.subr.mxu0 0.0
    %3717 = vmatpush1.msra.mxu0 %v90
    %3718 = vmatprep.subr.mxu0 0.0
    %3719 = vmatpush1.msra.mxu0 %v95
    %3720 = vmatprep.subr.mxu0 0.0
    %3721 = vmatpush1.msra.mxu0 %v100
    %3722 = vmatprep.subr.mxu0 0.0
    %3723 = vmatpush1.msra.mxu0 %v105
    %3724 = vmatprep.subr.mxu0 0.0
    %3725 = vmatpush1.msra.mxu0 %v110
    %3726 = vmatprep.subr.mxu0 0.0
    %3727 = vmatpush1.msra.mxu0 %v115
    %3728 = vmatprep.subr.mxu0 0.0
    %3729 = vmatpush1.msra.mxu0 %v120
    %3730 = vmatprep.subr.mxu0 0.0
    %3731 = vmatpush1.msra.mxu0 %v125
    %3732 = vmatprep.subr.mxu0 0.0
    %3733 = vmatpush1.msra.mxu0 %v130
    %3734 = vmatprep.subr.mxu0 0.0
    %3735 = vmatpush1.msra.mxu0 %v135
    %3736 = vmatprep.subr.mxu0 0.0
    %3737 = vmatpush1.msra.mxu0 %v140
    %3738 = vmatprep.subr.mxu0 0.0
    %3739 = vmatpush1.msra.mxu0 %v145
    %3740 = vmatprep.subr.mxu0 0.0
    %3741 = vmatpush1.msra.mxu0 %v150
    %3742 = vmatprep.subr.mxu0 0.0
    %3743 = vmatpush1.msra.mxu0 %v155
    %3744 = vmatprep.subr.mxu0 0.0
    %3745 = vmatpush1.msra.mxu0 %v160
    %3746 = vmatprep.subr.mxu0 0.0
    %3747 = vmatpush1.msra.mxu0 %v165
    %3748 = vmatprep.subr.mxu0 0.0
    %3749 = vmatpush1.msra.mxu0 %v170
    %3750 = vmatprep.subr.mxu0 0.0
    %3751 = vmatpush1.msra.mxu0 %v175
    %3752 = vmatprep.subr.mxu0 0.0
    %3753 = vmatpush1.msra.mxu0 %v180
    %3754 = vmatprep.subr.mxu0 0.0
    %3755 = vmatpush1.msra.mxu0 %v185
    %3756 = vmatprep.subr.mxu0 0.0
    %3757 = vmatpush1.msra.mxu0 %v190
    %3758 = vmatprep.subr.mxu0 0.0
    %3759 = vmatpush1.msra.mxu0 %v195
    %3760 = vmatprep.subr.mxu0 0.0
    %3761 = vmatpush1.msra.mxu0 %v200
    %3762 = vmatprep.subr.mxu0 0.0
    %3763 = vmatpush1.msra.mxu0 %v205
    %3764 = vmatprep.subr.mxu0 0.0
    %3765 = vmatpush1.msra.mxu0 %v210
    %3766 = vmatprep.mubr.f32.mxu0 %v28
    %3767 = vmatmul.mubr.f32.gmra.mrb[0].mxu0 %v27
    %v3768 = vpop.f32.mrb[0].mxu0
    %v3769 = vadd.f32 %v1992, %v3768
    %v3770 = vpop.f32.mrb[0].mxu0
    %3771 = vdwg.mxu0
    %3772 = vmatprep.subr.mxu0 0.0
    %3773 = vmatpush1.msra.mxu0 %v215
    %3774 = vmatprep.subr.mxu0 0.0
    %3775 = vmatpush1.msra.mxu0 %v220
    %3776 = vmatprep.subr.mxu0 0.0
    %3777 = vmatpush1.msra.mxu0 %v225
    %3778 = vmatprep.subr.mxu0 0.0
    %3779 = vmatpush1.msra.mxu0 %v230
    %3780 = vmatprep.subr.mxu0 0.0
    %3781 = vmatpush1.msra.mxu0 %v235
    %3782 = vmatprep.subr.mxu0 0.0
    %3783 = vmatpush1.msra.mxu0 %v240
    %3784 = vmatprep.subr.mxu0 0.0
    %3785 = vmatpush1.msra.mxu0 %v245
    %3786 = vmatprep.subr.mxu0 0.0
    %3787 = vmatpush1.msra.mxu0 %v250
    %3788 = vmatprep.subr.mxu0 0.0
    %3789 = vmatpush1.msra.mxu0 %v255
    %3790 = vmatprep.subr.mxu0 0.0
    %3791 = vmatpush1.msra.mxu0 %v260
    %3792 = vmatprep.subr.mxu0 0.0
    %3793 = vmatpush1.msra.mxu0 %v265
    %3794 = vmatprep.subr.mxu0 0.0
    %3795 = vmatpush1.msra.mxu0 %v270
    %3796 = vmatprep.subr.mxu0 0.0
    %3797 = vmatpush1.msra.mxu0 %v275
    %3798 = vmatprep.subr.mxu0 0.0
    %3799 = vmatpush1.msra.mxu0 %v280
    %3800 = vmatprep.subr.mxu0 0.0
    %3801 = vmatpush1.msra.mxu0 %v285
    %3802 = vmatprep.subr.mxu0 0.0
    %3803 = vmatpush1.msra.mxu0 %v290
    %3804 = vmatprep.subr.mxu0 0.0
    %3805 = vmatpush1.msra.mxu0 %v295
    %3806 = vmatprep.subr.mxu0 0.0
    %3807 = vmatpush1.msra.mxu0 %v300
    %3808 = vmatprep.subr.mxu0 0.0
    %3809 = vmatpush1.msra.mxu0 %v305
    %3810 = vmatprep.subr.mxu0 0.0
    %3811 = vmatpush1.msra.mxu0 %v310
    %3812 = vmatprep.subr.mxu0 0.0
    %3813 = vmatpush1.msra.mxu0 %v315
    %3814 = vmatprep.subr.mxu0 0.0
    %3815 = vmatpush1.msra.mxu0 %v320
    %3816 = vmatprep.subr.mxu0 0.0
    %3817 = vmatpush1.msra.mxu0 %v325
    %3818 = vmatprep.subr.mxu0 0.0
    %3819 = vmatpush1.msra.mxu0 %v330
    %3820 = vmatprep.subr.mxu0 0.0
    %3821 = vmatpush1.msra.mxu0 %v335
    %3822 = vmatprep.subr.mxu0 0.0
    %3823 = vmatpush1.msra.mxu0 %v340
    %3824 = vmatprep.subr.mxu0 0.0
    %3825 = vmatpush1.msra.mxu0 %v345
    %3826 = vmatprep.subr.mxu0 0.0
    %3827 = vmatpush1.msra.mxu0 %v350
    %3828 = vmatprep.subr.mxu0 0.0
    %3829 = vmatpush1.msra.mxu0 %v355
    %3830 = vmatprep.subr.mxu0 0.0
    %3831 = vmatpush1.msra.mxu0 %v360
    %3832 = vmatprep.subr.mxu0 0.0
    %3833 = vmatpush1.msra.mxu0 %v365
    %3834 = vmatprep.subr.mxu0 0.0
    %3835 = vmatpush1.msra.mxu0 %v370
    %3836 = vmatprep.mubr.f32.mxu0 %v30
    %3837 = vmatmul.mubr.f32.gmra.mrb[0].mxu0 %v29
    %v3838 = vpop.f32.mrb[0].mxu0
    %v3839 = vadd.f32 %v3769, %v3838
    %v3840 = vpop.f32.mrb[0].mxu0
    %3841 = vdwg.mxu0
    %3842 = vmatprep.subr.mxu0 0.0
    %3843 = vmatpush1.msra.mxu0 %v375
    %3844 = vmatprep.subr.mxu0 0.0
    %3845 = vmatpush1.msra.mxu0 %v380
    %3846 = vmatprep.subr.mxu0 0.0
    %3847 = vmatpush1.msra.mxu0 %v385
    %3848 = vmatprep.subr.mxu0 0.0
    %3849 = vmatpush1.msra.mxu0 %v390
    %3850 = vmatprep.subr.mxu0 0.0
    %3851 = vmatpush1.msra.mxu0 %v395
    %3852 = vmatprep.subr.mxu0 0.0
    %3853 = vmatpush1.msra.mxu0 %v400
    %3854 = vmatprep.subr.mxu0 0.0
    %3855 = vmatpush1.msra.mxu0 %v405
    %3856 = vmatprep.subr.mxu0 0.0
    %3857 = vmatpush1.msra.mxu0 %v410
    %3858 = vmatprep.subr.mxu0 0.0
    %3859 = vmatpush1.msra.mxu0 %v415
    %3860 = vmatprep.subr.mxu0 0.0
    %3861 = vmatpush1.msra.mxu0 %v420
    %3862 = vmatprep.subr.mxu0 0.0
    %3863 = vmatpush1.msra.mxu0 %v425
    %3864 = vmatprep.subr.mxu0 0.0
    %3865 = vmatpush1.msra.mxu0 %v430
    %3866 = vmatprep.subr.mxu0 0.0
    %3867 = vmatpush1.msra.mxu0 %v435
    %3868 = vmatprep.subr.mxu0 0.0
    %3869 = vmatpush1.msra.mxu0 %v440
    %3870 = vmatprep.subr.mxu0 0.0
    %3871 = vmatpush1.msra.mxu0 %v445
    %3872 = vmatprep.subr.mxu0 0.0
    %3873 = vmatpush1.msra.mxu0 %v450
    %3874 = vmatprep.subr.mxu0 0.0
    %3875 = vmatpush1.msra.mxu0 %v455
    %3876 = vmatprep.subr.mxu0 0.0
    %3877 = vmatpush1.msra.mxu0 %v460
    %3878 = vmatprep.subr.mxu0 0.0
    %3879 = vmatpush1.msra.mxu0 %v465
    %3880 = vmatprep.subr.mxu0 0.0
    %3881 = vmatpush1.msra.mxu0 %v470
    %3882 = vmatprep.subr.mxu0 0.0
    %3883 = vmatpush1.msra.mxu0 %v475
    %3884 = vmatprep.subr.mxu0 0.0
    %3885 = vmatpush1.msra.mxu0 %v480
    %3886 = vmatprep.subr.mxu0 0.0
    %3887 = vmatpush1.msra.mxu0 %v485
    %3888 = vmatprep.subr.mxu0 0.0
    %3889 = vmatpush1.msra.mxu0 %v490
    %3890 = vmatprep.subr.mxu0 0.0
    %3891 = vmatpush1.msra.mxu0 %v495
    %3892 = vmatprep.subr.mxu0 0.0
    %3893 = vmatpush1.msra.mxu0 %v500
    %3894 = vmatprep.subr.mxu0 0.0
    %3895 = vmatpush1.msra.mxu0 %v505
    %3896 = vmatprep.subr.mxu0 0.0
    %3897 = vmatpush1.msra.mxu0 %v510
    %3898 = vmatprep.subr.mxu0 0.0
    %3899 = vmatpush1.msra.mxu0 %v515
    %3900 = vmatprep.subr.mxu0 0.0
    %3901 = vmatpush1.msra.mxu0 %v520
    %3902 = vmatprep.subr.mxu0 0.0
    %3903 = vmatpush1.msra.mxu0 %v525
    %3904 = vmatprep.subr.mxu0 0.0
    %3905 = vmatpush1.msra.mxu0 %v530
    %3906 = vmatprep.mubr.f32.mxu0 %v32
    %3907 = vmatmul.mubr.f32.gmra.mrb[0].mxu0 %v31
    %v3908 = vpop.f32.mrb[0].mxu0
    %v3909 = vadd.f32 %v3839, %v3908
    %v3910 = vpop.f32.mrb[0].mxu0
    %3911 = vdwg.mxu0
    %3912 = vmatprep.subr.mxu0 0.0
    %3913 = vmatpush1.msra.mxu0 %v535
    %3914 = vmatprep.subr.mxu0 0.0
    %3915 = vmatpush1.msra.mxu0 %v540
    %3916 = vmatprep.subr.mxu0 0.0
    %3917 = vmatpush1.msra.mxu0 %v545
    %3918 = vmatprep.subr.mxu0 0.0
    %3919 = vmatpush1.msra.mxu0 %v550
    %3920 = vmatprep.subr.mxu0 0.0
    %3921 = vmatpush1.msra.mxu0 %v555
    %3922 = vmatprep.subr.mxu0 0.0
    %3923 = vmatpush1.msra.mxu0 %v560
    %3924 = vmatprep.subr.mxu0 0.0
    %3925 = vmatpush1.msra.mxu0 %v565
    %3926 = vmatprep.subr.mxu0 0.0
    %3927 = vmatpush1.msra.mxu0 %v570
    %3928 = vmatprep.subr.mxu0 0.0
    %3929 = vmatpush1.msra.mxu0 %v575
    %3930 = vmatprep.subr.mxu0 0.0
    %3931 = vmatpush1.msra.mxu0 %v580
    %3932 = vmatprep.subr.mxu0 0.0
    %3933 = vmatpush1.msra.mxu0 %v585
    %3934 = vmatprep.subr.mxu0 0.0
    %3935 = vmatpush1.msra.mxu0 %v590
    %3936 = vmatprep.subr.mxu0 0.0
    %3937 = vmatpush1.msra.mxu0 %v595
    %3938 = vmatprep.subr.mxu0 0.0
    %3939 = vmatpush1.msra.mxu0 %v600
    %3940 = vmatprep.subr.mxu0 0.0
    %3941 = vmatpush1.msra.mxu0 %v605
    %3942 = vmatprep.subr.mxu0 0.0
    %3943 = vmatpush1.msra.mxu0 %v610
    %3944 = vmatprep.subr.mxu0 0.0
    %3945 = vmatpush1.msra.mxu0 %v615
    %3946 = vmatprep.subr.mxu0 0.0
    %3947 = vmatpush1.msra.mxu0 %v620
    %3948 = vmatprep.subr.mxu0 0.0
    %3949 = vmatpush1.msra.mxu0 %v625
    %3950 = vmatprep.subr.mxu0 0.0
    %3951 = vmatpush1.msra.mxu0 %v630
    %3952 = vmatprep.subr.mxu0 0.0
    %3953 = vmatpush1.msra.mxu0 %v635
    %3954 = vmatprep.subr.mxu0 0.0
    %3955 = vmatpush1.msra.mxu0 %v640
    %3956 = vmatprep.subr.mxu0 0.0
    %3957 = vmatpush1.msra.mxu0 %v645
    %3958 = vmatprep.subr.mxu0 0.0
    %3959 = vmatpush1.msra.mxu0 %v650
    %3960 = vmatprep.subr.mxu0 0.0
    %3961 = vmatpush1.msra.mxu0 %v655
    %3962 = vmatprep.subr.mxu0 0.0
    %3963 = vmatpush1.msra.mxu0 %v660
    %3964 = vmatprep.subr.mxu0 0.0
    %3965 = vmatpush1.msra.mxu0 %v665
    %3966 = vmatprep.subr.mxu0 0.0
    %3967 = vmatpush1.msra.mxu0 %v670
    %3968 = vmatprep.subr.mxu0 0.0
    %3969 = vmatpush1.msra.mxu0 %v675
    %3970 = vmatprep.subr.mxu0 0.0
    %3971 = vmatpush1.msra.mxu0 %v680
    %3972 = vmatprep.subr.mxu0 0.0
    %3973 = vmatpush1.msra.mxu0 %v685
    %3974 = vmatprep.subr.mxu0 0.0
    %3975 = vmatpush1.msra.mxu0 %v690
    %3976 = vmatprep.mubr.f32.mxu0 %v34
    %3977 = vmatmul.mubr.f32.gmra.mrb[0].mxu0 %v33
    %v3978 = vpop.f32.mrb[0].mxu0
    %v3979 = vadd.f32 %v3909, %v3978
    %v3980 = vpop.f32.mrb[0].mxu0
    %3981 = vdwg.mxu0
    %3982 = vmatprep.subr.mxu0 0.0
    %3983 = vmatpush1.msra.mxu0 %v695
    %3984 = vmatprep.subr.mxu0 0.0
    %3985 = vmatpush1.msra.mxu0 %v700
    %3986 = vmatprep.subr.mxu0 0.0
    %3987 = vmatpush1.msra.mxu0 %v705
    %3988 = vmatprep.subr.mxu0 0.0
    %3989 = vmatpush1.msra.mxu0 %v710
    %3990 = vmatprep.subr.mxu0 0.0
    %3991 = vmatpush1.msra.mxu0 %v715
    %3992 = vmatprep.subr.mxu0 0.0
    %3993 = vmatpush1.msra.mxu0 %v720
    %3994 = vmatprep.subr.mxu0 0.0
    %3995 = vmatpush1.msra.mxu0 %v725
    %3996 = vmatprep.subr.mxu0 0.0
    %3997 = vmatpush1.msra.mxu0 %v730
    %3998 = vmatprep.subr.mxu0 0.0
    %3999 = vmatpush1.msra.mxu0 %v735
    %4000 = vmatprep.subr.mxu0 0.0
    %4001 = vmatpush1.msra.mxu0 %v740
    %4002 = vmatprep.subr.mxu0 0.0
    %4003 = vmatpush1.msra.mxu0 %v745
    %4004 = vmatprep.subr.mxu0 0.0
    %4005 = vmatpush1.msra.mxu0 %v750
    %4006 = vmatprep.subr.mxu0 0.0
    %4007 = vmatpush1.msra.mxu0 %v755
    %4008 = vmatprep.subr.mxu0 0.0
    %4009 = vmatpush1.msra.mxu0 %v760
    %4010 = vmatprep.subr.mxu0 0.0
    %4011 = vmatpush1.msra.mxu0 %v765
    %4012 = vmatprep.subr.mxu0 0.0
    %4013 = vmatpush1.msra.mxu0 %v770
    %4014 = vmatprep.subr.mxu0 0.0
    %4015 = vmatpush1.msra.mxu0 %v775
    %4016 = vmatprep.subr.mxu0 0.0
    %4017 = vmatpush1.msra.mxu0 %v780
    %4018 = vmatprep.subr.mxu0 0.0
    %4019 = vmatpush1.msra.mxu0 %v785
    %4020 = vmatprep.subr.mxu0 0.0
    %4021 = vmatpush1.msra.mxu0 %v790
    %4022 = vmatprep.subr.mxu0 0.0
    %4023 = vmatpush1.msra.mxu0 %v795
    %4024 = vmatprep.subr.mxu0 0.0
    %4025 = vmatpush1.msra.mxu0 %v800
    %4026 = vmatprep.subr.mxu0 0.0
    %4027 = vmatpush1.msra.mxu0 %v805
    %4028 = vmatprep.subr.mxu0 0.0
    %4029 = vmatpush1.msra.mxu0 %v810
    %4030 = vmatprep.subr.mxu0 0.0
    %4031 = vmatpush1.msra.mxu0 %v815
    %4032 = vmatprep.subr.mxu0 0.0
    %4033 = vmatpush1.msra.mxu0 %v820
    %4034 = vmatprep.subr.mxu0 0.0
    %4035 = vmatpush1.msra.mxu0 %v825
    %4036 = vmatprep.subr.mxu0 0.0
    %4037 = vmatpush1.msra.mxu0 %v830
    %4038 = vmatprep.subr.mxu0 0.0
    %4039 = vmatpush1.msra.mxu0 %v835
    %4040 = vmatprep.subr.mxu0 0.0
    %4041 = vmatpush1.msra.mxu0 %v840
    %4042 = vmatprep.subr.mxu0 0.0
    %4043 = vmatpush1.msra.mxu0 %v845
    %4044 = vmatprep.subr.mxu0 0.0
    %4045 = vmatpush1.msra.mxu0 %v850
    %4046 = vmatprep.mubr.f32.mxu0 %v36
    %4047 = vmatmul.mubr.f32.gmra.mrb[0].mxu0 %v35
    %v4048 = vpop.f32.mrb[0].mxu0
    %v4049 = vadd.f32 %v3979, %v4048
    %v4050 = vpop.f32.mrb[0].mxu0
    %4051 = vdwg.mxu0
    %4052 = vmatprep.subr.mxu0 0.0
    %4053 = vmatpush1.msra.mxu0 %v855
    %4054 = vmatprep.subr.mxu0 0.0
    %4055 = vmatpush1.msra.mxu0 %v860
    %4056 = vmatprep.subr.mxu0 0.0
    %4057 = vmatpush1.msra.mxu0 %v865
    %4058 = vmatprep.subr.mxu0 0.0
    %4059 = vmatpush1.msra.mxu0 %v870
    %4060 = vmatprep.subr.mxu0 0.0
    %4061 = vmatpush1.msra.mxu0 %v875
    %4062 = vmatprep.subr.mxu0 0.0
    %4063 = vmatpush1.msra.mxu0 %v880
    %4064 = vmatprep.subr.mxu0 0.0
    %4065 = vmatpush1.msra.mxu0 %v885
    %4066 = vmatprep.subr.mxu0 0.0
    %4067 = vmatpush1.msra.mxu0 %v890
    %4068 = vmatprep.subr.mxu0 0.0
    %4069 = vmatpush1.msra.mxu0 %v895
    %4070 = vmatprep.subr.mxu0 0.0
    %4071 = vmatpush1.msra.mxu0 %v900
    %4072 = vmatprep.subr.mxu0 0.0
    %4073 = vmatpush1.msra.mxu0 %v905
    %4074 = vmatprep.subr.mxu0 0.0
    %4075 = vmatpush1.msra.mxu0 %v910
    %4076 = vmatprep.subr.mxu0 0.0
    %4077 = vmatpush1.msra.mxu0 %v915
    %4078 = vmatprep.subr.mxu0 0.0
    %4079 = vmatpush1.msra.mxu0 %v920
    %4080 = vmatprep.subr.mxu0 0.0
    %4081 = vmatpush1.msra.mxu0 %v925
    %4082 = vmatprep.subr.mxu0 0.0
    %4083 = vmatpush1.msra.mxu0 %v930
    %4084 = vmatprep.subr.mxu0 0.0
    %4085 = vmatpush1.msra.mxu0 %v935
    %4086 = vmatprep.subr.mxu0 0.0
    %4087 = vmatpush1.msra.mxu0 %v940
    %4088 = vmatprep.subr.mxu0 0.0
    %4089 = vmatpush1.msra.mxu0 %v945
    %4090 = vmatprep.subr.mxu0 0.0
    %4091 = vmatpush1.msra.mxu0 %v950
    %4092 = vmatprep.subr.mxu0 0.0
    %4093 = vmatpush1.msra.mxu0 %v955
    %4094 = vmatprep.subr.mxu0 0.0
    %4095 = vmatpush1.msra.mxu0 %v960
    %4096 = vmatprep.subr.mxu0 0.0
    %4097 = vmatpush1.msra.mxu0 %v965
    %4098 = vmatprep.subr.mxu0 0.0
    %4099 = vmatpush1.msra.mxu0 %v970
    %4100 = vmatprep.subr.mxu0 0.0
    %4101 = vmatpush1.msra.mxu0 %v975
    %4102 = vmatprep.subr.mxu0 0.0
    %4103 = vmatpush1.msra.mxu0 %v980
    %4104 = vmatprep.subr.mxu0 0.0
    %4105 = vmatpush1.msra.mxu0 %v985
    %4106 = vmatprep.subr.mxu0 0.0
    %4107 = vmatpush1.msra.mxu0 %v990
    %4108 = vmatprep.subr.mxu0 0.0
    %4109 = vmatpush1.msra.mxu0 %v995
    %4110 = vmatprep.subr.mxu0 0.0
    %4111 = vmatpush1.msra.mxu0 %v1000
    %4112 = vmatprep.subr.mxu0 0.0
    %4113 = vmatpush1.msra.mxu0 %v1005
    %4114 = vmatprep.subr.mxu0 0.0
    %4115 = vmatpush1.msra.mxu0 %v1010
    %4116 = vmatprep.mubr.f32.mxu0 %v38
    %4117 = vmatmul.mubr.f32.gmra.mrb[0].mxu0 %v37
    %v4118 = vpop.f32.mrb[0].mxu0
    %v4119 = vadd.f32 %v4049, %v4118
    %v4120 = vpop.f32.mrb[0].mxu0
    %4121 = vdwg.mxu0
    %4122 = vmatprep.subr.mxu0 0.0
    %4123 = vmatpush1.msra.mxu0 %v1015
    %4124 = vmatprep.subr.mxu0 0.0
    %4125 = vmatpush1.msra.mxu0 %v1020
    %4126 = vmatprep.subr.mxu0 0.0
    %4127 = vmatpush1.msra.mxu0 %v1025
    %4128 = vmatprep.subr.mxu0 0.0
    %4129 = vmatpush1.msra.mxu0 %v1030
    %4130 = vmatprep.subr.mxu0 0.0
    %4131 = vmatpush1.msra.mxu0 %v1035
    %4132 = vmatprep.subr.mxu0 0.0
    %4133 = vmatpush1.msra.mxu0 %v1040
    %4134 = vmatprep.subr.mxu0 0.0
    %4135 = vmatpush1.msra.mxu0 %v1045
    %4136 = vmatprep.subr.mxu0 0.0
    %4137 = vmatpush1.msra.mxu0 %v1050
    %4138 = vmatprep.subr.mxu0 0.0
    %4139 = vmatpush1.msra.mxu0 %v1055
    %4140 = vmatprep.subr.mxu0 0.0
    %4141 = vmatpush1.msra.mxu0 %v1060
    %4142 = vmatprep.subr.mxu0 0.0
    %4143 = vmatpush1.msra.mxu0 %v1065
    %4144 = vmatprep.subr.mxu0 0.0
    %4145 = vmatpush1.msra.mxu0 %v1070
    %4146 = vmatprep.subr.mxu0 0.0
    %4147 = vmatpush1.msra.mxu0 %v1075
    %4148 = vmatprep.subr.mxu0 0.0
    %4149 = vmatpush1.msra.mxu0 %v1080
    %4150 = vmatprep.subr.mxu0 0.0
    %4151 = vmatpush1.msra.mxu0 %v1085
    %4152 = vmatprep.subr.mxu0 0.0
    %4153 = vmatpush1.msra.mxu0 %v1090
    %4154 = vmatprep.subr.mxu0 0.0
    %4155 = vmatpush1.msra.mxu0 %v1095
    %4156 = vmatprep.subr.mxu0 0.0
    %4157 = vmatpush1.msra.mxu0 %v1100
    %4158 = vmatprep.subr.mxu0 0.0
    %4159 = vmatpush1.msra.mxu0 %v1105
    %4160 = vmatprep.subr.mxu0 0.0
    %4161 = vmatpush1.msra.mxu0 %v1110
    %4162 = vmatprep.subr.mxu0 0.0
    %4163 = vmatpush1.msra.mxu0 %v1115
    %4164 = vmatprep.subr.mxu0 0.0
    %4165 = vmatpush1.msra.mxu0 %v1120
    %4166 = vmatprep.subr.mxu0 0.0
    %4167 = vmatpush1.msra.mxu0 %v1125
    %4168 = vmatprep.subr.mxu0 0.0
    %4169 = vmatpush1.msra.mxu0 %v1130
    %4170 = vmatprep.subr.mxu0 0.0
    %4171 = vmatpush1.msra.mxu0 %v1135
    %4172 = vmatprep.subr.mxu0 0.0
    %4173 = vmatpush1.msra.mxu0 %v1140
    %4174 = vmatprep.subr.mxu0 0.0
    %4175 = vmatpush1.msra.mxu0 %v1145
    %4176 = vmatprep.subr.mxu0 0.0
    %4177 = vmatpush1.msra.mxu0 %v1150
    %4178 = vmatprep.subr.mxu0 0.0
    %4179 = vmatpush1.msra.mxu0 %v1155
    %4180 = vmatprep.subr.mxu0 0.0
    %4181 = vmatpush1.msra.mxu0 %v1160
    %4182 = vmatprep.subr.mxu0 0.0
    %4183 = vmatpush1.msra.mxu0 %v1165
    %4184 = vmatprep.subr.mxu0 0.0
    %4185 = vmatpush1.msra.mxu0 %v1170
    %4186 = vmatprep.mubr.f32.mxu0 %v40
    %4187 = vmatmul.mubr.f32.gmra.mrb[0].mxu0 %v39
    %v4188 = vpop.f32.mrb[0].mxu0
    %v4189 = vadd.f32 %v4119, %v4188
    %v4190 = vpop.f32.mrb[0].mxu0
    %4191 = vdwg.mxu0
    %4192 = vmatprep.subr.mxu0 0.0
    %4193 = vmatpush1.msra.mxu0 %v1175
    %4194 = vmatprep.subr.mxu0 0.0
    %4195 = vmatpush1.msra.mxu0 %v1180
    %4196 = vmatprep.subr.mxu0 0.0
    %4197 = vmatpush1.msra.mxu0 %v1185
    %4198 = vmatprep.subr.mxu0 0.0
    %4199 = vmatpush1.msra.mxu0 %v1190
    %4200 = vmatprep.subr.mxu0 0.0
    %4201 = vmatpush1.msra.mxu0 %v1195
    %4202 = vmatprep.subr.mxu0 0.0
    %4203 = vmatpush1.msra.mxu0 %v1200
    %4204 = vmatprep.subr.mxu0 0.0
    %4205 = vmatpush1.msra.mxu0 %v1205
    %4206 = vmatprep.subr.mxu0 0.0
    %4207 = vmatpush1.msra.mxu0 %v1210
    %4208 = vmatprep.subr.mxu0 0.0
    %4209 = vmatpush1.msra.mxu0 %v1215
    %4210 = vmatprep.subr.mxu0 0.0
    %4211 = vmatpush1.msra.mxu0 %v1220
    %4212 = vmatprep.subr.mxu0 0.0
    %4213 = vmatpush1.msra.mxu0 %v1225
    %4214 = vmatprep.subr.mxu0 0.0
    %4215 = vmatpush1.msra.mxu0 %v1230
    %4216 = vmatprep.subr.mxu0 0.0
    %4217 = vmatpush1.msra.mxu0 %v1235
    %4218 = vmatprep.subr.mxu0 0.0
    %4219 = vmatpush1.msra.mxu0 %v1240
    %4220 = vmatprep.subr.mxu0 0.0
    %4221 = vmatpush1.msra.mxu0 %v1245
    %4222 = vmatprep.subr.mxu0 0.0
    %4223 = vmatpush1.msra.mxu0 %v1250
    %4224 = vmatprep.subr.mxu0 0.0
    %4225 = vmatpush1.msra.mxu0 %v1255
    %4226 = vmatprep.subr.mxu0 0.0
    %4227 = vmatpush1.msra.mxu0 %v1260
    %4228 = vmatprep.subr.mxu0 0.0
    %4229 = vmatpush1.msra.mxu0 %v1265
    %4230 = vmatprep.subr.mxu0 0.0
    %4231 = vmatpush1.msra.mxu0 %v1270
    %4232 = vmatprep.subr.mxu0 0.0
    %4233 = vmatpush1.msra.mxu0 %v1275
    %4234 = vmatprep.subr.mxu0 0.0
    %4235 = vmatpush1.msra.mxu0 %v1280
    %4236 = vmatprep.subr.mxu0 0.0
    %4237 = vmatpush1.msra.mxu0 %v1285
    %4238 = vmatprep.subr.mxu0 0.0
    %4239 = vmatpush1.msra.mxu0 %v1290
    %4240 = vmatprep.subr.mxu0 0.0
    %4241 = vmatpush1.msra.mxu0 %v1295
    %4242 = vmatprep.subr.mxu0 0.0
    %4243 = vmatpush1.msra.mxu0 %v1300
    %4244 = vmatprep.subr.mxu0 0.0
    %4245 = vmatpush1.msra.mxu0 %v1305
    %4246 = vmatprep.subr.mxu0 0.0
    %4247 = vmatpush1.msra.mxu0 %v1310
    %4248 = vmatprep.subr.mxu0 0.0
    %4249 = vmatpush1.msra.mxu0 %v1315
    %4250 = vmatprep.subr.mxu0 0.0
    %4251 = vmatpush1.msra.mxu0 %v1320
    %4252 = vmatprep.subr.mxu0 0.0
    %4253 = vmatpush1.msra.mxu0 %v1325
    %4254 = vmatprep.subr.mxu0 0.0
    %4255 = vmatpush1.msra.mxu0 %v1330
    %4256 = vmatprep.mubr.f32.mxu0 %v42
    %4257 = vmatmul.mubr.f32.gmra.mrb[0].mxu0 %v41
    %v4258 = vpop.f32.mrb[0].mxu0
    %v4259 = vadd.f32 %v4189, %v4258
    %v4260 = vpop.f32.mrb[0].mxu0
    %4261 = vdwg.mxu0
    %4262 = vmatprep.subr.mxu0 0.0
    %4263 = vmatpush1.msra.mxu0 %v1335
    %4264 = vmatprep.subr.mxu0 0.0
    %4265 = vmatpush1.msra.mxu0 %v1340
    %4266 = vmatprep.subr.mxu0 0.0
    %4267 = vmatpush1.msra.mxu0 %v1345
    %4268 = vmatprep.subr.mxu0 0.0
    %4269 = vmatpush1.msra.mxu0 %v1350
    %4270 = vmatprep.subr.mxu0 0.0
    %4271 = vmatpush1.msra.mxu0 %v1355
    %4272 = vmatprep.subr.mxu0 0.0
    %4273 = vmatpush1.msra.mxu0 %v1360
    %4274 = vmatprep.subr.mxu0 0.0
    %4275 = vmatpush1.msra.mxu0 %v1365
    %4276 = vmatprep.subr.mxu0 0.0
    %4277 = vmatpush1.msra.mxu0 %v1370
    %4278 = vmatprep.subr.mxu0 0.0
    %4279 = vmatpush1.msra.mxu0 %v1375
    %4280 = vmatprep.subr.mxu0 0.0
    %4281 = vmatpush1.msra.mxu0 %v1380
    %4282 = vmatprep.subr.mxu0 0.0
    %4283 = vmatpush1.msra.mxu0 %v1385
    %4284 = vmatprep.subr.mxu0 0.0
    %4285 = vmatpush1.msra.mxu0 %v1390
    %4286 = vmatprep.subr.mxu0 0.0
    %4287 = vmatpush1.msra.mxu0 %v1395
    %4288 = vmatprep.subr.mxu0 0.0
    %4289 = vmatpush1.msra.mxu0 %v1400
    %4290 = vmatprep.subr.mxu0 0.0
    %4291 = vmatpush1.msra.mxu0 %v1405
    %4292 = vmatprep.subr.mxu0 0.0
    %4293 = vmatpush1.msra.mxu0 %v1410
    %4294 = vmatprep.subr.mxu0 0.0
    %4295 = vmatpush1.msra.mxu0 %v1415
    %4296 = vmatprep.subr.mxu0 0.0
    %4297 = vmatpush1.msra.mxu0 %v1420
    %4298 = vmatprep.subr.mxu0 0.0
    %4299 = vmatpush1.msra.mxu0 %v1425
    %4300 = vmatprep.subr.mxu0 0.0
    %4301 = vmatpush1.msra.mxu0 %v1430
    %4302 = vmatprep.subr.mxu0 0.0
    %4303 = vmatpush1.msra.mxu0 %v1435
    %4304 = vmatprep.subr.mxu0 0.0
    %4305 = vmatpush1.msra.mxu0 %v1440
    %4306 = vmatprep.subr.mxu0 0.0
    %4307 = vmatpush1.msra.mxu0 %v1445
    %4308 = vmatprep.subr.mxu0 0.0
    %4309 = vmatpush1.msra.mxu0 %v1450
    %4310 = vmatprep.subr.mxu0 0.0
    %4311 = vmatpush1.msra.mxu0 %v1455
    %4312 = vmatprep.subr.mxu0 0.0
    %4313 = vmatpush1.msra.mxu0 %v1460
    %4314 = vmatprep.subr.mxu0 0.0
    %4315 = vmatpush1.msra.mxu0 %v1465
    %4316 = vmatprep.subr.mxu0 0.0
    %4317 = vmatpush1.msra.mxu0 %v1470
    %4318 = vmatprep.subr.mxu0 0.0
    %4319 = vmatpush1.msra.mxu0 %v1475
    %4320 = vmatprep.subr.mxu0 0.0
    %4321 = vmatpush1.msra.mxu0 %v1480
    %4322 = vmatprep.subr.mxu0 0.0
    %4323 = vmatpush1.msra.mxu0 %v1485
    %4324 = vmatprep.subr.mxu0 0.0
    %4325 = vmatpush1.msra.mxu0 %v1490
    %4326 = vmatprep.mubr.f32.mxu0 %v44
    %4327 = vmatmul.mubr.f32.gmra.mrb[0].mxu0 %v43
    %v4328 = vpop.f32.mrb[0].mxu0
    %v4329 = vadd.f32 %v4259, %v4328
    %v4330 = vpop.f32.mrb[0].mxu0
    %4331 = vdwg.mxu0
    %4332 = vmatprep.subr.mxu0 0.0
    %4333 = vmatpush1.msra.mxu0 %v1495
    %4334 = vmatprep.subr.mxu0 0.0
    %4335 = vmatpush1.msra.mxu0 %v1500
    %4336 = vmatprep.subr.mxu0 0.0
    %4337 = vmatpush1.msra.mxu0 %v1505
    %4338 = vmatprep.subr.mxu0 0.0
    %4339 = vmatpush1.msra.mxu0 %v1510
    %4340 = vmatprep.subr.mxu0 0.0
    %4341 = vmatpush1.msra.mxu0 %v1515
    %4342 = vmatprep.subr.mxu0 0.0
    %4343 = vmatpush1.msra.mxu0 %v1520
    %4344 = vmatprep.subr.mxu0 0.0
    %4345 = vmatpush1.msra.mxu0 %v1525
    %4346 = vmatprep.subr.mxu0 0.0
    %4347 = vmatpush1.msra.mxu0 %v1530
    %4348 = vmatprep.subr.mxu0 0.0
    %4349 = vmatpush1.msra.mxu0 %v1535
    %4350 = vmatprep.subr.mxu0 0.0
    %4351 = vmatpush1.msra.mxu0 %v1540
    %4352 = vmatprep.subr.mxu0 0.0
    %4353 = vmatpush1.msra.mxu0 %v1545
    %4354 = vmatprep.subr.mxu0 0.0
    %4355 = vmatpush1.msra.mxu0 %v1550
    %4356 = vmatprep.subr.mxu0 0.0
    %4357 = vmatpush1.msra.mxu0 %v1555
    %4358 = vmatprep.subr.mxu0 0.0
    %4359 = vmatpush1.msra.mxu0 %v1560
    %4360 = vmatprep.subr.mxu0 0.0
    %4361 = vmatpush1.msra.mxu0 %v1565
    %4362 = vmatprep.subr.mxu0 0.0
    %4363 = vmatpush1.msra.mxu0 %v1570
    %4364 = vmatprep.subr.mxu0 0.0
    %4365 = vmatpush1.msra.mxu0 %v1575
    %4366 = vmatprep.subr.mxu0 0.0
    %4367 = vmatpush1.msra.mxu0 %v1580
    %4368 = vmatprep.subr.mxu0 0.0
    %4369 = vmatpush1.msra.mxu0 %v1585
    %4370 = vmatprep.subr.mxu0 0.0
    %4371 = vmatpush1.msra.mxu0 %v1590
    %4372 = vmatprep.subr.mxu0 0.0
    %4373 = vmatpush1.msra.mxu0 %v1595
    %4374 = vmatprep.subr.mxu0 0.0
    %4375 = vmatpush1.msra.mxu0 %v1600
    %4376 = vmatprep.subr.mxu0 0.0
    %4377 = vmatpush1.msra.mxu0 %v1605
    %4378 = vmatprep.subr.mxu0 0.0
    %4379 = vmatpush1.msra.mxu0 %v1610
    %4380 = vmatprep.subr.mxu0 0.0
    %4381 = vmatpush1.msra.mxu0 %v1615
    %4382 = vmatprep.subr.mxu0 0.0
    %4383 = vmatpush1.msra.mxu0 %v1620
    %4384 = vmatprep.subr.mxu0 0.0
    %4385 = vmatpush1.msra.mxu0 %v1625
    %4386 = vmatprep.subr.mxu0 0.0
    %4387 = vmatpush1.msra.mxu0 %v1630
    %4388 = vmatprep.subr.mxu0 0.0
    %4389 = vmatpush1.msra.mxu0 %v1635
    %4390 = vmatprep.subr.mxu0 0.0
    %4391 = vmatpush1.msra.mxu0 %v1640
    %4392 = vmatprep.subr.mxu0 0.0
    %4393 = vmatpush1.msra.mxu0 %v1645
    %4394 = vmatprep.subr.mxu0 0.0
    %4395 = vmatpush1.msra.mxu0 %v1650
    %4396 = vmatprep.mubr.f32.mxu0 %v46
    %4397 = vmatmul.mubr.f32.gmra.mrb[0].mxu0 %v45
    %v4398 = vpop.f32.mrb[0].mxu0
    %v4399 = vadd.f32 %v4329, %v4398
    %v4400 = vpop.f32.mrb[0].mxu0
    %4401 = vdwg.mxu0
    %4402 = vmatprep.subr.mxu0 0.0
    %4403 = vmatpush1.msra.mxu0 %v1655
    %4404 = vmatprep.subr.mxu0 0.0
    %4405 = vmatpush1.msra.mxu0 %v1660
    %4406 = vmatprep.subr.mxu0 0.0
    %4407 = vmatpush1.msra.mxu0 %v1665
    %4408 = vmatprep.subr.mxu0 0.0
    %4409 = vmatpush1.msra.mxu0 %v1670
    %4410 = vmatprep.subr.mxu0 0.0
    %4411 = vmatpush1.msra.mxu0 %v1675
    %4412 = vmatprep.subr.mxu0 0.0
    %4413 = vmatpush1.msra.mxu0 %v1680
    %4414 = vmatprep.subr.mxu0 0.0
    %4415 = vmatpush1.msra.mxu0 %v1685
    %4416 = vmatprep.subr.mxu0 0.0
    %4417 = vmatpush1.msra.mxu0 %v1690
    %4418 = vmatprep.subr.mxu0 0.0
    %4419 = vmatpush1.msra.mxu0 %v1695
    %4420 = vmatprep.subr.mxu0 0.0
    %4421 = vmatpush1.msra.mxu0 %v1700
    %4422 = vmatprep.subr.mxu0 0.0
    %4423 = vmatpush1.msra.mxu0 %v1705
    %4424 = vmatprep.subr.mxu0 0.0
    %4425 = vmatpush1.msra.mxu0 %v1710
    %4426 = vmatprep.subr.mxu0 0.0
    %4427 = vmatpush1.msra.mxu0 %v1715
    %4428 = vmatprep.subr.mxu0 0.0
    %4429 = vmatpush1.msra.mxu0 %v1720
    %4430 = vmatprep.subr.mxu0 0.0
    %4431 = vmatpush1.msra.mxu0 %v1725
    %4432 = vmatprep.subr.mxu0 0.0
    %4433 = vmatpush1.msra.mxu0 %v1730
    %4434 = vmatprep.subr.mxu0 0.0
    %4435 = vmatpush1.msra.mxu0 %v1735
    %4436 = vmatprep.subr.mxu0 0.0
    %4437 = vmatpush1.msra.mxu0 %v1740
    %4438 = vmatprep.subr.mxu0 0.0
    %4439 = vmatpush1.msra.mxu0 %v1745
    %4440 = vmatprep.subr.mxu0 0.0
    %4441 = vmatpush1.msra.mxu0 %v1750
    %4442 = vmatprep.subr.mxu0 0.0
    %4443 = vmatpush1.msra.mxu0 %v1755
    %4444 = vmatprep.subr.mxu0 0.0
    %4445 = vmatpush1.msra.mxu0 %v1760
    %4446 = vmatprep.subr.mxu0 0.0
    %4447 = vmatpush1.msra.mxu0 %v1765
    %4448 = vmatprep.subr.mxu0 0.0
    %4449 = vmatpush1.msra.mxu0 %v1770
    %4450 = vmatprep.subr.mxu0 0.0
    %4451 = vmatpush1.msra.mxu0 %v1775
    %4452 = vmatprep.subr.mxu0 0.0
    %4453 = vmatpush1.msra.mxu0 %v1780
    %4454 = vmatprep.subr.mxu0 0.0
    %4455 = vmatpush1.msra.mxu0 %v1785
    %4456 = vmatprep.subr.mxu0 0.0
    %4457 = vmatpush1.msra.mxu0 %v1790
    %4458 = vmatprep.subr.mxu0 0.0
    %4459 = vmatpush1.msra.mxu0 %v1795
    %4460 = vmatprep.subr.mxu0 0.0
    %4461 = vmatpush1.msra.mxu0 %v1800
    %4462 = vmatprep.subr.mxu0 0.0
    %4463 = vmatpush1.msra.mxu0 %v1805
    %4464 = vmatprep.subr.mxu0 0.0
    %4465 = vmatpush1.msra.mxu0 %v1810
    %4466 = vmatprep.mubr.f32.mxu0 %v48
    %4467 = vmatmul.mubr.f32.gmra.mrb[0].mxu0 %v47
    %v4468 = vpop.f32.mrb[0].mxu0
    %v4469 = vadd.f32 %v4399, %v4468
    %v4470 = vpop.f32.mrb[0].mxu0
    %4471 = vdwg.mxu0
    %4472 = vmatprep.subr.mxu0 0.0
    %4473 = vmatpush1.msra.mxu0 %v1815
    %4474 = vmatprep.subr.mxu0 0.0
    %4475 = vmatpush1.msra.mxu0 %v1820
    %4476 = vmatprep.subr.mxu0 0.0
    %4477 = vmatpush1.msra.mxu0 %v1825
    %4478 = vmatprep.subr.mxu0 0.0
    %4479 = vmatpush1.msra.mxu0 %v1830
    %4480 = vmatprep.subr.mxu0 0.0
    %4481 = vmatpush1.msra.mxu0 %v1835
    %4482 = vmatprep.subr.mxu0 0.0
    %4483 = vmatpush1.msra.mxu0 %v1840
    %4484 = vmatprep.subr.mxu0 0.0
    %4485 = vmatpush1.msra.mxu0 %v1845
    %4486 = vmatprep.subr.mxu0 0.0
    %4487 = vmatpush1.msra.mxu0 %v1850
    %4488 = vmatprep.subr.mxu0 0.0
    %4489 = vmatpush1.msra.mxu0 %v1855
    %4490 = vmatprep.subr.mxu0 0.0
    %4491 = vmatpush1.msra.mxu0 %v1860
    %4492 = vmatprep.subr.mxu0 0.0
    %4493 = vmatpush1.msra.mxu0 %v1865
    %4494 = vmatprep.subr.mxu0 0.0
    %4495 = vmatpush1.msra.mxu0 %v1870
    %4496 = vmatprep.subr.mxu0 0.0
    %4497 = vmatpush1.msra.mxu0 %v1875
    %4498 = vmatprep.subr.mxu0 0.0
    %4499 = vmatpush1.msra.mxu0 %v1880
    %4500 = vmatprep.subr.mxu0 0.0
    %4501 = vmatpush1.msra.mxu0 %v1885
    %4502 = vmatprep.subr.mxu0 0.0
    %4503 = vmatpush1.msra.mxu0 %v1890
    %4504 = vmatprep.subr.mxu0 0.0
    %4505 = vmatpush1.msra.mxu0 %v1895
    %4506 = vmatprep.subr.mxu0 0.0
    %4507 = vmatpush1.msra.mxu0 %v1900
    %4508 = vmatprep.subr.mxu0 0.0
    %4509 = vmatpush1.msra.mxu0 %v1905
    %4510 = vmatprep.subr.mxu0 0.0
    %4511 = vmatpush1.msra.mxu0 %v1910
    %4512 = vmatprep.subr.mxu0 0.0
    %4513 = vmatpush1.msra.mxu0 %v1915
    %4514 = vmatprep.subr.mxu0 0.0
    %4515 = vmatpush1.msra.mxu0 %v1920
    %4516 = vmatprep.subr.mxu0 0.0
    %4517 = vmatpush1.msra.mxu0 %v1925
    %4518 = vmatprep.subr.mxu0 0.0
    %4519 = vmatpush1.msra.mxu0 %v1930
    %4520 = vmatprep.subr.mxu0 0.0
    %4521 = vmatpush1.msra.mxu0 %v1935
    %4522 = vmatprep.subr.mxu0 0.0
    %4523 = vmatpush1.msra.mxu0 %v1940
    %4524 = vmatprep.subr.mxu0 0.0
    %4525 = vmatpush1.msra.mxu0 %v1945
    %4526 = vmatprep.subr.mxu0 0.0
    %4527 = vmatpush1.msra.mxu0 %v1950
    %4528 = vmatprep.subr.mxu0 0.0
    %4529 = vmatpush1.msra.mxu0 %v1955
    %4530 = vmatprep.subr.mxu0 0.0
    %4531 = vmatpush1.msra.mxu0 %v1960
    %4532 = vmatprep.subr.mxu0 0.0
    %4533 = vmatpush1.msra.mxu0 %v1965
    %4534 = vmatprep.subr.mxu0 0.0
    %4535 = vmatpush1.msra.mxu0 %v1970
    %4536 = vmatprep.mubr.f32.mxu0 %v50
    %4537 = vmatmul.mubr.f32.gmra.mrb[0].mxu0 %v49
    %v4538 = vpop.f32.mrb[0].mxu0
    %v4539 = vadd.f32 %v4469, %v4538
    %v4540 = vpop.f32.mrb[0].mxu0
    %4541 = vdwg.mxu0
    %v4542 = vmax.f32 %v2846, 0.0
    %v4543 = vmax.f32 %v2848, 0.0
    %v4544 = vmax.f32 %v3698, 0.0
    %v4545 = vmax.f32 %v3700, 0.0
    %v4546 = vmax.f32 %v4539, 0.0
    %v4547 = vld [vmem:[%s3] sm:$0xff]
    %v4548 = vld [vmem:[%s3 + $0x8] sm:$0xff]
    %v4549 = vld [vmem:[%s3 + $0x10] sm:$0xff]
    %v4550 = vld [vmem:[%s3 + $0x18] sm:$0xff]
    %v4551 = vld [vmem:[%s3 + $0x20] sm:$0xff]
    %v4552 = vld [vmem:[%s3 + $0x28] sm:$0xff]
    %v4553 = vld [vmem:[%s3 + $0x30] sm:$0xff]
    %v4554 = vld [vmem:[%s3 + $0x38] sm:$0xff]
    %v4555 = vld [vmem:[%s3 + $0x40] sm:$0xff]
    %v4556 = vld [vmem:[%s3 + $0x48] sm:$0xff]
    %v4557 = vld [vmem:[%s3 + $0x50] sm:$0xff]
    %v4558 = vld [vmem:[%s3 + $0x58] sm:$0xff]
    %v4559 = vld [vmem:[%s3 + $0x60] sm:$0xff]
    %v4560 = vld [vmem:[%s3 + $0x68] sm:$0xff]
    %v4561 = vld [vmem:[%s3 + $0x70] sm:$0xff]
    %v4562 = vld [vmem:[%s3 + $0x78] sm:$0xff]
    %v4563 = vld [vmem:[%s3 + $0x80] sm:$0xff]
    %v4564 = vld [vmem:[%s3 + $0x88] sm:$0xff]
    %v4565 = vld [vmem:[%s3 + $0x90] sm:$0xff]
    %v4566 = vld [vmem:[%s3 + $0x98] sm:$0xff]
    %v4567 = vld [vmem:[%s3 + $0xa0] sm:$0xff]
    %v4568 = vld [vmem:[%s3 + $0xa8] sm:$0xff]
    %v4569 = vld [vmem:[%s3 + $0xb0] sm:$0xff]
    %v4570 = vld [vmem:[%s3 + $0xb8] sm:$0xff]
    %v4571 = vld [vmem:[%s3 + $0xc0] sm:$0xff]
    %v4572 = vld [vmem:[%s3 + $0xc8] sm:$0xff]
    %v4573 = vld [vmem:[%s3 + $0xd0] sm:$0xff]
    %v4574 = vld [vmem:[%s3 + $0xd8] sm:$0xff]
    %v4575 = vld [vmem:[%s3 + $0xe0] sm:$0xff]
    %v4576 = vld [vmem:[%s3 + $0xe8] sm:$0xff]
    %v4577 = vld [vmem:[%s3 + $0xf0] sm:$0xff]
    %v4578 = vld [vmem:[%s3 + $0xf8] sm:$0xff]
    %v4579 = vld [vmem:[%s3 + $0x100] sm:$0xff]
    %v4580 = vld [vmem:[%s3 + $0x108] sm:$0xff]
    %v4581 = vld [vmem:[%s3 + $0x110] sm:$0xff]
    %v4582 = vld [vmem:[%s3 + $0x118] sm:$0xff]
    %v4583 = vld [vmem:[%s3 + $0x120] sm:$0xff]
    %v4584 = vld [vmem:[%s3 + $0x128] sm:$0xff]
    %v4585 = vld [vmem:[%s3 + $0x130] sm:$0xff]
    %v4586 = vld [vmem:[%s3 + $0x138] sm:$0xff]
    %v4587 = vld [vmem:[%s3 + $0x140] sm:$0xff]
    %v4588 = vld [vmem:[%s3 + $0x148] sm:$0xff]
    %v4589 = vld [vmem:[%s3 + $0x150] sm:$0xff]
    %v4590 = vld [vmem:[%s3 + $0x158] sm:$0xff]
    %v4591 = vld [vmem:[%s3 + $0x160] sm:$0xff]
    %v4592 = vld [vmem:[%s3 + $0x168] sm:$0xff]
    %v4593 = vld [vmem:[%s3 + $0x170] sm:$0xff]
    %v4594 = vld [vmem:[%s3 + $0x178] sm:$0xff]
    %v4595 = vld [vmem:[%s3 + $0x180] sm:$0xff]
    %v4596 = vld [vmem:[%s3 + $0x188] sm:$0xff]
    %v4597 = vld [vmem:[%s3 + $0x190] sm:$0xff]
    %v4598 = vld [vmem:[%s3 + $0x198] sm:$0xff]
    %v4599 = vld [vmem:[%s3 + $0x1a0] sm:$0xff]
    %v4600 = vld [vmem:[%s3 + $0x1a8] sm:$0xff]
    %v4601 = vld [vmem:[%s3 + $0x1b0] sm:$0xff]
    %v4602 = vld [vmem:[%s3 + $0x1b8] sm:$0xff]
    %v4603 = vld [vmem:[%s3 + $0x1c0] sm:$0xff]
    %v4604 = vld [vmem:[%s3 + $0x1c8] sm:$0xff]
    %v4605 = vld [vmem:[%s3 + $0x1d0] sm:$0xff]
    %v4606 = vld [vmem:[%s3 + $0x1d8] sm:$0xff]
    %v4607 = vld [vmem:[%s3 + $0x1e0] sm:$0xff]
    %v4608 = vld [vmem:[%s3 + $0x1e8] sm:$0xff]
    %v4609 = vld [vmem:[%s3 + $0x1f0] sm:$0xff]
    %v4610 = vld [vmem:[%s3 + $0x1f8] sm:$0xff]
    %v4611 = vld [vmem:[%s3 + $0x200] sm:$0xff]
    %v4612 = vld [vmem:[%s3 + $0x208] sm:$0xff]
    %v4613 = vld [vmem:[%s3 + $0x210] sm:$0xff]
    %v4614 = vld [vmem:[%s3 + $0x218] sm:$0xff]
    %v4615 = vld [vmem:[%s3 + $0x220] sm:$0xff]
    %v4616 = vld [vmem:[%s3 + $0x228] sm:$0xff]
    %v4617 = vld [vmem:[%s3 + $0x230] sm:$0xff]
    %v4618 = vld [vmem:[%s3 + $0x238] sm:$0xff]
    %v4619 = vld [vmem:[%s3 + $0x240] sm:$0xff]
    %v4620 = vld [vmem:[%s3 + $0x248] sm:$0xff]
    %v4621 = vld [vmem:[%s3 + $0x250] sm:$0xff]
    %v4622 = vld [vmem:[%s3 + $0x258] sm:$0xff]
    %v4623 = vld [vmem:[%s3 + $0x260] sm:$0xff]
    %v4624 = vld [vmem:[%s3 + $0x268] sm:$0xff]
    %v4625 = vld [vmem:[%s3 + $0x270] sm:$0xff]
    %v4626 = vld [vmem:[%s3 + $0x278] sm:$0xff]
    %v4627 = vld [vmem:[%s3 + $0x280] sm:$0xff]
    %v4628 = vld [vmem:[%s3 + $0x288] sm:$0xff]
    %v4629 = vld [vmem:[%s3 + $0x290] sm:$0xff]
    %v4630 = vld [vmem:[%s3 + $0x298] sm:$0xff]
    %v4631 = vld [vmem:[%s3 + $0x2a0] sm:$0xff]
    %v4632 = vld [vmem:[%s3 + $0x2a8] sm:$0xff]
    %v4633 = vld [vmem:[%s3 + $0x2b0] sm:$0xff]
    %v4634 = vld [vmem:[%s3 + $0x2b8] sm:$0xff]
    %v4635 = vld [vmem:[%s3 + $0x2c0] sm:$0xff]
    %v4636 = vld [vmem:[%s3 + $0x2c8] sm:$0xff]
    %v4637 = vld [vmem:[%s3 + $0x2d0] sm:$0xff]
    %v4638 = vld [vmem:[%s3 + $0x2d8] sm:$0xff]
    %v4639 = vld [vmem:[%s3 + $0x2e0] sm:$0xff]
    %v4640 = vld [vmem:[%s3 + $0x2e8] sm:$0xff]
    %v4641 = vld [vmem:[%s3 + $0x2f0] sm:$0xff]
    %v4642 = vld [vmem:[%s3 + $0x2f8] sm:$0xff]
    %v4643 = vld [vmem:[%s3 + $0x300] sm:$0xff]
    %v4644 = vld [vmem:[%s3 + $0x308] sm:$0xff]
    %v4645 = vld [vmem:[%s3 + $0x310] sm:$0xff]
    %v4646 = vld [vmem:[%s3 + $0x318] sm:$0xff]
    %v4647 = vld [vmem:[%s3 + $0x320] sm:$0xff]
    %v4648 = vld [vmem:[%s3 + $0x328] sm:$0xff]
    %v4649 = vld [vmem:[%s3 + $0x330] sm:$0xff]
    %v4650 = vld [vmem:[%s3 + $0x338] sm:$0xff]
    %v4651 = vld [vmem:[%s3 + $0x340] sm:$0xff]
    %v4652 = vld [vmem:[%s3 + $0x348] sm:$0xff]
    %v4653 = vld [vmem:[%s3 + $0x350] sm:$0xff]
    %v4654 = vld [vmem:[%s3 + $0x358] sm:$0xff]
    %v4655 = vld [vmem:[%s3 + $0x360] sm:$0xff]
    %v4656 = vld [vmem:[%s3 + $0x368] sm:$0xff]
    %v4657 = vld [vmem:[%s3 + $0x370] sm:$0xff]
    %v4658 = vld [vmem:[%s3 + $0x378] sm:$0xff]
    %v4659 = vld [vmem:[%s3 + $0x380] sm:$0xff]
    %v4660 = vld [vmem:[%s3 + $0x388] sm:$0xff]
    %v4661 = vld [vmem:[%s3 + $0x390] sm:$0xff]
    %v4662 = vld [vmem:[%s3 + $0x398] sm:$0xff]
    %v4663 = vld [vmem:[%s3 + $0x3a0] sm:$0xff]
    %v4664 = vld [vmem:[%s3 + $0x3a8] sm:$0xff]
    %v4665 = vld [vmem:[%s3 + $0x3b0] sm:$0xff]
    %v4666 = vld [vmem:[%s3 + $0x3b8] sm:$0xff]
    %v4667 = vld [vmem:[%s3 + $0x3c0] sm:$0xff]
    %v4668 = vld [vmem:[%s3 + $0x3c8] sm:$0xff]
    %v4669 = vld [vmem:[%s3 + $0x3d0] sm:$0xff]
    %v4670 = vld [vmem:[%s3 + $0x3d8] sm:$0xff]
    %v4671 = vld [vmem:[%s3 + $0x3e0] sm:$0xff]
    %v4672 = vld [vmem:[%s3 + $0x3e8] sm:$0xff]
    %v4673 = vld [vmem:[%s3 + $0x3f0] sm:$0xff]
    %v4674 = vld [vmem:[%s3 + $0x3f8] sm:$0xff]
    %v4675 = vld [vmem:[%s3 + $0x400] sm:$0xff]
    %v4676 = vld [vmem:[%s3 + $0x408] sm:$0xff]
    %v4677 = vld [vmem:[%s3 + $0x410] sm:$0xff]
    %v4678 = vld [vmem:[%s3 + $0x418] sm:$0xff]
    %v4679 = vld [vmem:[%s3 + $0x420] sm:$0xff]
    %v4680 = vld [vmem:[%s3 + $0x428] sm:$0xff]
    %v4681 = vld [vmem:[%s3 + $0x430] sm:$0xff]
    %v4682 = vld [vmem:[%s3 + $0x438] sm:$0xff]
    %v4683 = vld [vmem:[%s3 + $0x440] sm:$0xff]
    %v4684 = vld [vmem:[%s3 + $0x448] sm:$0xff]
    %v4685 = vld [vmem:[%s3 + $0x450] sm:$0xff]
    %v4686 = vld [vmem:[%s3 + $0x458] sm:$0xff]
    %v4687 = vld [vmem:[%s3 + $0x460] sm:$0xff]
    %v4688 = vld [vmem:[%s3 + $0x468] sm:$0xff]
    %v4689 = vld [vmem:[%s3 + $0x470] sm:$0xff]
    %v4690 = vld [vmem:[%s3 + $0x478] sm:$0xff]
    %v4691 = vld [vmem:[%s4] sm:$0x3]
    %v4693 = vlaneseq
    %v4694 = vshrl.u32 %v4693, 7
    %v4695 = vsub.s32 0, %v4694
    %v4696 = vrot.slane %v4691, %v4695
    %v4697 = vlaneseq
    %v4698 = vshrl.u32 %v4697, 7
    %v4699 = vsub.s32 1, %v4698
    %v4700 = vrot.slane %v4691, %v4699
    %vm4703 = vcmask 523264
    %v4705 = vsel %vm4703, %v4546, 0
    %4707 = vmatprep.subr.mxu0 %v4548
    %4708 = vmatpush1.msra.mxu0 %v4547
    %4709 = vmatprep.subr.mxu0 %v4550
    %4710 = vmatpush1.msra.mxu0 %v4549
    %4711 = vmatprep.subr.mxu0 %v4552
    %4712 = vmatpush1.msra.mxu0 %v4551
    %4713 = vmatprep.subr.mxu0 %v4554
    %4714 = vmatpush1.msra.mxu0 %v4553
    %4715 = vmatprep.subr.mxu0 %v4556
    %4716 = vmatpush1.msra.mxu0 %v4555
    %4717 = vmatprep.subr.mxu0 %v4558
    %4718 = vmatpush1.msra.mxu0 %v4557
    %4719 = vmatprep.subr.mxu0 %v4560
    %4720 = vmatpush1.msra.mxu0 %v4559
    %4721 = vmatprep.subr.mxu0 %v4562
    %4722 = vmatpush1.msra.mxu0 %v4561
    %4723 = vmatprep.subr.mxu0 %v4564
    %4724 = vmatpush1.msra.mxu0 %v4563
    %4725 = vmatprep.subr.mxu0 %v4566
    %4726 = vmatpush1.msra.mxu0 %v4565
    %4727 = vmatprep.subr.mxu0 %v4568
    %4728 = vmatpush1.msra.mxu0 %v4567
    %4729 = vmatprep.subr.mxu0 %v4570
    %4730 = vmatpush1.msra.mxu0 %v4569
    %4731 = vmatprep.subr.mxu0 %v4572
    %4732 = vmatpush1.msra.mxu0 %v4571
    %4733 = vmatprep.subr.mxu0 %v4574
    %4734 = vmatpush1.msra.mxu0 %v4573
    %4735 = vmatprep.subr.mxu0 %v4576
    %4736 = vmatpush1.msra.mxu0 %v4575
    %4737 = vmatprep.subr.mxu0 %v4578
    %4738 = vmatpush1.msra.mxu0 %v4577
    %4739 = vmatprep.subr.mxu0 %v4580
    %4740 = vmatpush1.msra.mxu0 %v4579
    %4741 = vmatprep.subr.mxu0 %v4582
    %4742 = vmatpush1.msra.mxu0 %v4581
    %4743 = vmatprep.subr.mxu0 %v4584
    %4744 = vmatpush1.msra.mxu0 %v4583
    %4745 = vmatprep.subr.mxu0 %v4586
    %4746 = vmatpush1.msra.mxu0 %v4585
    %4747 = vmatprep.subr.mxu0 %v4588
    %4748 = vmatpush1.msra.mxu0 %v4587
    %4749 = vmatprep.subr.mxu0 %v4590
    %4750 = vmatpush1.msra.mxu0 %v4589
    %4751 = vmatprep.subr.mxu0 %v4592
    %4752 = vmatpush1.msra.mxu0 %v4591
    %4753 = vmatprep.subr.mxu0 %v4594
    %4754 = vmatpush1.msra.mxu0 %v4593
    %4755 = vmatprep.subr.mxu0 %v4596
    %4756 = vmatpush1.msra.mxu0 %v4595
    %4757 = vmatprep.subr.mxu0 %v4598
    %4758 = vmatpush1.msra.mxu0 %v4597
    %4759 = vmatprep.subr.mxu0 %v4600
    %4760 = vmatpush1.msra.mxu0 %v4599
    %4761 = vmatprep.subr.mxu0 %v4602
    %4762 = vmatpush1.msra.mxu0 %v4601
    %4763 = vmatprep.subr.mxu0 %v4604
    %4764 = vmatpush1.msra.mxu0 %v4603
    %4765 = vmatprep.subr.mxu0 %v4606
    %4766 = vmatpush1.msra.mxu0 %v4605
    %4767 = vmatprep.subr.mxu0 %v4608
    %4768 = vmatpush1.msra.mxu0 %v4607
    %4769 = vmatprep.subr.mxu0 %v4610
    %4770 = vmatpush1.msra.mxu0 %v4609
    %4771 = vmatprep.mubr.f32.mxu0 %v4543
    %4772 = vmatmul.mubr.f32.gmra.mrb[0].mxu0 %v4542
    %v4773 = vpop.f32.mrb[0].mxu0
    %v4774 = vadd.f32 %v4696, %v4773
    %v4775 = vpop.f32.mrb[0].mxu0
    %v4776 = vadd.f32 %v4700, %v4775
    %4777 = vdwg.mxu0
    %4778 = vmatprep.subr.mxu0 %v4612
    %4779 = vmatpush1.msra.mxu0 %v4611
    %4780 = vmatprep.subr.mxu0 %v4614
    %4781 = vmatpush1.msra.mxu0 %v4613
    %4782 = vmatprep.subr.mxu0 %v4616
    %4783 = vmatpush1.msra.mxu0 %v4615
    %4784 = vmatprep.subr.mxu0 %v4618
    %4785 = vmatpush1.msra.mxu0 %v4617
    %4786 = vmatprep.subr.mxu0 %v4620
    %4787 = vmatpush1.msra.mxu0 %v4619
    %4788 = vmatprep.subr.mxu0 %v4622
    %4789 = vmatpush1.msra.mxu0 %v4621
    %4790 = vmatprep.subr.mxu0 %v4624
    %4791 = vmatpush1.msra.mxu0 %v4623
    %4792 = vmatprep.subr.mxu0 %v4626
    %4793 = vmatpush1.msra.mxu0 %v4625
    %4794 = vmatprep.subr.mxu0 %v4628
    %4795 = vmatpush1.msra.mxu0 %v4627
    %4796 = vmatprep.subr.mxu0 %v4630
    %4797 = vmatpush1.msra.mxu0 %v4629
    %4798 = vmatprep.subr.mxu0 %v4632
    %4799 = vmatpush1.msra.mxu0 %v4631
    %4800 = vmatprep.subr.mxu0 %v4634
    %4801 = vmatpush1.msra.mxu0 %v4633
    %4802 = vmatprep.subr.mxu0 %v4636
    %4803 = vmatpush1.msra.mxu0 %v4635
    %4804 = vmatprep.subr.mxu0 %v4638
    %4805 = vmatpush1.msra.mxu0 %v4637
    %4806 = vmatprep.subr.mxu0 %v4640
    %4807 = vmatpush1.msra.mxu0 %v4639
    %4808 = vmatprep.subr.mxu0 %v4642
    %4809 = vmatpush1.msra.mxu0 %v4641
    %4810 = vmatprep.subr.mxu0 %v4644
    %4811 = vmatpush1.msra.mxu0 %v4643
    %4812 = vmatprep.subr.mxu0 %v4646
    %4813 = vmatpush1.msra.mxu0 %v4645
    %4814 = vmatprep.subr.mxu0 %v4648
    %4815 = vmatpush1.msra.mxu0 %v4647
    %4816 = vmatprep.subr.mxu0 %v4650
    %4817 = vmatpush1.msra.mxu0 %v4649
    %4818 = vmatprep.subr.mxu0 %v4652
    %4819 = vmatpush1.msra.mxu0 %v4651
    %4820 = vmatprep.subr.mxu0 %v4654
    %4821 = vmatpush1.msra.mxu0 %v4653
    %4822 = vmatprep.subr.mxu0 %v4656
    %4823 = vmatpush1.msra.mxu0 %v4655
    %4824 = vmatprep.subr.mxu0 %v4658
    %4825 = vmatpush1.msra.mxu0 %v4657
    %4826 = vmatprep.subr.mxu0 %v4660
    %4827 = vmatpush1.msra.mxu0 %v4659
    %4828 = vmatprep.subr.mxu0 %v4662
    %4829 = vmatpush1.msra.mxu0 %v4661
    %4830 = vmatprep.subr.mxu0 %v4664
    %4831 = vmatpush1.msra.mxu0 %v4663
    %4832 = vmatprep.subr.mxu0 %v4666
    %4833 = vmatpush1.msra.mxu0 %v4665
    %4834 = vmatprep.subr.mxu0 %v4668
    %4835 = vmatpush1.msra.mxu0 %v4667
    %4836 = vmatprep.subr.mxu0 %v4670
    %4837 = vmatpush1.msra.mxu0 %v4669
    %4838 = vmatprep.subr.mxu0 %v4672
    %4839 = vmatpush1.msra.mxu0 %v4671
    %4840 = vmatprep.subr.mxu0 %v4674
    %4841 = vmatpush1.msra.mxu0 %v4673
    %4842 = vmatprep.mubr.f32.mxu0 %v4545
    %4843 = vmatmul.mubr.f32.gmra.mrb[0].mxu0 %v4544
    %v4844 = vpop.f32.mrb[0].mxu0
    %v4845 = vadd.f32 %v4774, %v4844
    %v4846 = vpop.f32.mrb[0].mxu0
    %v4847 = vadd.f32 %v4776, %v4846
    %4848 = vdwg.mxu0
    %4849 = vmatprep.subr.mxu0 %v4676
    %4850 = vmatpush1.msra.mxu0 %v4675
    %4851 = vmatprep.subr.mxu0 %v4678
    %4852 = vmatpush1.msra.mxu0 %v4677
    %4853 = vmatprep.subr.mxu0 %v4680
    %4854 = vmatpush1.msra.mxu0 %v4679
    %4855 = vmatprep.subr.mxu0 %v4682
    %4856 = vmatpush1.msra.mxu0 %v4681
    %4857 = vmatprep.subr.mxu0 %v4684
    %4858 = vmatpush1.msra.mxu0 %v4683
    %4859 = vmatprep.subr.mxu0 %v4686
    %4860 = vmatpush1.msra.mxu0 %v4685
    %4861 = vmatprep.subr.mxu0 %v4688
    %4862 = vmatpush1.msra.mxu0 %v4687
    %4863 = vmatprep.subr.mxu0 %v4690
    %4864 = vmatpush1.msra.mxu0 %v4689
    %4865 = vmatprep.subr.mxu0 0.0
    %4866 = vmatpush1.msra.mxu0 0.0
    %4867 = vmatprep.subr.mxu0 0.0
    %4868 = vmatpush1.msra.mxu0 0.0
    %4869 = vmatprep.subr.mxu0 0.0
    %4870 = vmatpush1.msra.mxu0 0.0
    %4871 = vmatprep.subr.mxu0 0.0
    %4872 = vmatpush1.msra.mxu0 0.0
    %4873 = vmatprep.subr.mxu0 0.0
    %4874 = vmatpush1.msra.mxu0 0.0
    %4875 = vmatprep.subr.mxu0 0.0
    %4876 = vmatpush1.msra.mxu0 0.0
    %4877 = vmatprep.subr.mxu0 0.0
    %4878 = vmatpush1.msra.mxu0 0.0
    %4879 = vmatprep.subr.mxu0 0.0
    %4880 = vmatpush1.msra.mxu0 0.0
    %4881 = vmatprep.subr.mxu0 0.0
    %4882 = vmatpush1.msra.mxu0 0.0
    %4883 = vmatprep.subr.mxu0 0.0
    %4884 = vmatpush1.msra.mxu0 0.0
    %4885 = vmatprep.subr.mxu0 0.0
    %4886 = vmatpush1.msra.mxu0 0.0
    %4887 = vmatprep.subr.mxu0 0.0
    %4888 = vmatpush1.msra.mxu0 0.0
    %4889 = vmatprep.subr.mxu0 0.0
    %4890 = vmatpush1.msra.mxu0 0.0
    %4891 = vmatprep.subr.mxu0 0.0
    %4892 = vmatpush1.msra.mxu0 0.0
    %4893 = vmatprep.subr.mxu0 0.0
    %4894 = vmatpush1.msra.mxu0 0.0
    %4895 = vmatprep.subr.mxu0 0.0
    %4896 = vmatpush1.msra.mxu0 0.0
    %4897 = vmatprep.subr.mxu0 0.0
    %4898 = vmatpush1.msra.mxu0 0.0
    %4899 = vmatprep.subr.mxu0 0.0
    %4900 = vmatpush1.msra.mxu0 0.0
    %4901 = vmatprep.subr.mxu0 0.0
    %4902 = vmatpush1.msra.mxu0 0.0
    %4903 = vmatprep.subr.mxu0 0.0
    %4904 = vmatpush1.msra.mxu0 0.0
    %4905 = vmatprep.subr.mxu0 0.0
    %4906 = vmatpush1.msra.mxu0 0.0
    %4907 = vmatprep.subr.mxu0 0.0
    %4908 = vmatpush1.msra.mxu0 0.0
    %4909 = vmatprep.subr.mxu0 0.0
    %4910 = vmatpush1.msra.mxu0 0.0
    %4911 = vmatprep.subr.mxu0 0.0
    %4912 = vmatpush1.msra.mxu0 0.0
    %4913 = vmatprep.mubr.f32.mxu0 0.0
    %4914 = vmatmul.mubr.f32.gmra.mrb[0].mxu0 %v4705
    %v4915 = vpop.f32.mrb[0].mxu0
    %v4916 = vadd.f32 %v4845, %v4915
    %v4917 = vpop.f32.mrb[0].mxu0
    %v4918 = vadd.f32 %v4847, %v4917
    %4919 = vdwg.mxu0
    %v4920 = vmax.f32 %v4916, 0.0
    %v4921 = vmax.f32 %v4918, 0.0
    %v4922 = vld [vmem:[%s5] sm:$0xff]
    %v4923 = vld [vmem:[%s5 + $0x8] sm:$0xff]
    %v4924 = vld [vmem:[%s5 + $0x10] sm:$0xff]
    %v4925 = vld [vmem:[%s5 + $0x18] sm:$0xff]
    %v4926 = vld [vmem:[%s5 + $0x20] sm:$0xff]
    %v4927 = vld [vmem:[%s5 + $0x28] sm:$0xff]
    %v4928 = vld [vmem:[%s5 + $0x30] sm:$0xff]
    %v4929 = vld [vmem:[%s5 + $0x38] sm:$0xff]
    %v4930 = vld [vmem:[%s5 + $0x40] sm:$0xff]
    %v4931 = vld [vmem:[%s5 + $0x48] sm:$0xff]
    %v4932 = vld [vmem:[%s5 + $0x50] sm:$0xff]
    %v4933 = vld [vmem:[%s5 + $0x58] sm:$0xff]
    %v4934 = vld [vmem:[%s5 + $0x60] sm:$0xff]
    %v4935 = vld [vmem:[%s5 + $0x68] sm:$0xff]
    %v4936 = vld [vmem:[%s5 + $0x70] sm:$0xff]
    %v4937 = vld [vmem:[%s5 + $0x78] sm:$0xff]
    %v4938 = vld [vmem:[%s5 + $0x80] sm:$0xff]
    %v4939 = vld [vmem:[%s5 + $0x88] sm:$0xff]
    %v4940 = vld [vmem:[%s6] sm:$0x1]
    %v4942 = vlaneseq
    %v4943 = vshrl.u32 %v4942, 7
    %v4944 = vsub.s32 0, %v4943
    %v4945 = vrot.slane %v4940, %v4944
    %vm4947 = vcmask 130048
    %v4949 = vsel %vm4947, %v4921, 0
    %4951 = vmatprep.subr.mxu0 0.0
    %4952 = vmatpush1.msra.mxu0 %v4922
    %4953 = vmatprep.subr.mxu0 0.0
    %4954 = vmatpush1.msra.mxu0 %v4923
    %4955 = vmatprep.subr.mxu0 0.0
    %4956 = vmatpush1.msra.mxu0 %v4924
    %4957 = vmatprep.subr.mxu0 0.0
    %4958 = vmatpush1.msra.mxu0 %v4925
    %4959 = vmatprep.subr.mxu0 0.0
    %4960 = vmatpush1.msra.mxu0 %v4926
    %4961 = vmatprep.subr.mxu0 0.0
    %4962 = vmatpush1.msra.mxu0 %v4927
    %4963 = vmatprep.subr.mxu0 0.0
    %4964 = vmatpush1.msra.mxu0 %v4928
    %4965 = vmatprep.subr.mxu0 0.0
    %4966 = vmatpush1.msra.mxu0 %v4929
    %4967 = vmatprep.subr.mxu0 0.0
    %4968 = vmatpush1.msra.mxu0 %v4930
    %4969 = vmatprep.subr.mxu0 0.0
    %4970 = vmatpush1.msra.mxu0 %v4931
    %4971 = vmatprep.subr.mxu0 0.0
    %4972 = vmatpush1.msra.mxu0 %v4932
    %4973 = vmatprep.subr.mxu0 0.0
    %4974 = vmatpush1.msra.mxu0 %v4933
    %4975 = vmatprep.subr.mxu0 0.0
    %4976 = vmatpush1.msra.mxu0 %v4934
    %4977 = vmatprep.subr.mxu0 0.0
    %4978 = vmatpush1.msra.mxu0 %v4935
    %4979 = vmatprep.subr.mxu0 0.0
    %4980 = vmatpush1.msra.mxu0 %v4936
    %4981 = vmatprep.subr.mxu0 0.0
    %4982 = vmatpush1.msra.mxu0 %v4937
    %4983 = vmatprep.subr.mxu0 0.0
    %4984 = vmatpush1.msra.mxu0 %v4938
    %4985 = vmatprep.subr.mxu0 0.0
    %4986 = vmatpush1.msra.mxu0 %v4939
    %4987 = vmatprep.subr.mxu0 0.0
    %4988 = vmatpush1.msra.mxu0 0.0
    %4989 = vmatprep.subr.mxu0 0.0
    %4990 = vmatpush1.msra.mxu0 0.0
    %4991 = vmatprep.subr.mxu0 0.0
    %4992 = vmatpush1.msra.mxu0 0.0
    %4993 = vmatprep.subr.mxu0 0.0
    %4994 = vmatpush1.msra.mxu0 0.0
    %4995 = vmatprep.subr.mxu0 0.0
    %4996 = vmatpush1.msra.mxu0 0.0
    %4997 = vmatprep.subr.mxu0 0.0
    %4998 = vmatpush1.msra.mxu0 0.0
    %4999 = vmatprep.subr.mxu0 0.0
    %5000 = vmatpush1.msra.mxu0 0.0
    %5001 = vmatprep.subr.mxu0 0.0
    %5002 = vmatpush1.msra.mxu0 0.0
    %5003 = vmatprep.subr.mxu0 0.0
    %5004 = vmatpush1.msra.mxu0 0.0
    %5005 = vmatprep.subr.mxu0 0.0
    %5006 = vmatpush1.msra.mxu0 0.0
    %5007 = vmatprep.subr.mxu0 0.0
    %5008 = vmatpush1.msra.mxu0 0.0
    %5009 = vmatprep.subr.mxu0 0.0
    %5010 = vmatpush1.msra.mxu0 0.0
    %5011 = vmatprep.subr.mxu0 0.0
    %5012 = vmatpush1.msra.mxu0 0.0
    %5013 = vmatprep.subr.mxu0 0.0
    %5014 = vmatpush1.msra.mxu0 0.0
    %5015 = vmatprep.mubr.f32.mxu0 %v4949
    %5016 = vmatmul.mubr.f32.gmra.mrb[0].mxu0 %v4920
    %v5017 = vpop.f32.mrb[0].mxu0
    %v5018 = vadd.f32 %v4945, %v5017
    %v5019 = vpop.f32.mrb[0].mxu0
    %5020 = vdwg.mxu0
    %5021 = vmax.xlane.f32.xlu0 %v5018
    %v5022 = vpop.xlane.xlu0 %5021
    %v5023 = vsub.f32 %v5018, %v5022
    %v5024 = vmul.f32 %v5023, 1.442695
    %v5025 = vpow.pop %v5024
    %5026 = vadd.xlane.f32.xlu0 %v5025
    %v5027 = vpop.xlane.xlu0 %5026
    %v5028 = vlog2.pop %v5027
    %v5029 = vmul.f32 %v5028, 0.6931472
    %v5030 = vadd.f32 %v5022, %v5029
    %v5031 = vsub.f32 %v5018, %v5030
    %5032 = vst [vmem:[#allocation2] sm:$0xff] %v5031
    // Predicated region
    $region30: #{tpu_custom_call.1} parent=1 // pred_check
      _
    $region31: #{tpu_custom_call.1} parent=1 // pred_check_branch
      %5034 = sbr.rel (0) target = $region33
    $region32: #{tpu_custom_call.1} parent=1 // pred_region
      %s5036 = ssub.s32 128, 128
      %5037 = vsyncadd [#allocation3], %s5036
      %s5039 = sshll.u32 [#allocation2], 4
      %s5040 = int_to_ptr.vmem [resolvable:$true] %s5039
      %5042 = dma.vmem_to_hbm [thread:$0]  %s5040, 128, %s7, [#allocation3]
    $region33: #{tpu_custom_call.1} parent=1 // pred_fallthru
      _
    // Predicated region
    $region34: #{tpu_custom_call.1} parent=1 // pred_check
      _
    $region35: #{tpu_custom_call.1} parent=1 // pred_check_branch
      %5044 = sbr.rel (0) target = $region37
    $region36: #{tpu_custom_call.1} parent=1 // pred_region
      %5045 = dma.done [#allocation3], 128
    $region37: #{tpu_custom_call.1} parent=1 // pred_fallthru
      _
    %5046 = vsyncpa [#allocation3], 1

</llo_original>
